<compile_context>
chip_gen: v7x
topology: tpu7x:2x2x1
jax: 0.10.0
libtpu: 0.0.40
codegen_flags: <defaults>
</compile_context>

<pallas_src>
import functools

import jax
import jax.numpy as jnp
from jax.experimental import pallas as pl
from jax.experimental.pallas import tpu as pltpu


LANES = 128          # lane width
TR = 8               # sublane rows per pool-kernel block
_PARALLEL = pltpu.CompilerParams(dimension_semantics=("parallel",))


def _round_up(a, b):
    return (a + b - 1) // b * b


# ----------------------------------------------------------------------------
# Pallas kernels
# ----------------------------------------------------------------------------
def _matmul_bias_act_kernel(w_ref, p_ref, b_ref, o_ref, *, act):
    """Fused (Co,K)@(K,TM) + bias + activation; output is lane-dense along TM."""
    acc = jnp.dot(w_ref[...], p_ref[...], preferred_element_type=jnp.float32)
    acc = acc + b_ref[...]                       # (Co, TM) + (Co, 1)
    if act == "relu":
        acc = jnp.maximum(acc, 0.0)
    elif act == "sigmoid":
        # stable sigmoid: exp on EUP, reciprocal on EUP (approx) -> VALU stays free
        z = jnp.exp(-jnp.abs(acc))
        r = pl.reciprocal(1.0 + z, approx=True)
        acc = jnp.where(acc >= 0.0, r, z * r)
    o_ref[...] = acc.astype(o_ref.dtype)


def _maxpool_kernel(x_ref, o_ref):
    """x: (4, TR, 128) window positions -> elementwise max -> (TR, 128)."""
    x = x_ref[...]
    o_ref[...] = jnp.maximum(jnp.maximum(x[0], x[1]), jnp.maximum(x[2], x[3]))


def _pool_unpool_kernel(x_ref, o_ref):
    """Fused MaxPool2d(2,2,return_indices) + MaxUnpool2d(2,2).

    Keeps only the first-occurrence max of each 2x2 window at its original
    position, zero elsewhere.  Vectorized tie-break, full-slab stores."""
    x = x_ref[...]                               # (4, TR, 128)
    m = jnp.maximum(jnp.maximum(x[0], x[1]), jnp.maximum(x[2], x[3]))
    e0 = x[0] == m
    e1 = x[1] == m
    e2 = x[2] == m
    e3 = x[3] == m
    s1 = e1 & ~e0
    s2 = e2 & ~(e0 | e1)
    s3 = e3 & ~(e0 | e1 | e2)
    zero = jnp.zeros_like(m)
    o_ref[0] = jnp.where(e0, m, zero)
    o_ref[1] = jnp.where(s1, m, zero)
    o_ref[2] = jnp.where(s2, m, zero)
    o_ref[3] = jnp.where(s3, m, zero)


# ----------------------------------------------------------------------------
# Pallas wrappers
# ----------------------------------------------------------------------------
def _choose_tm(M):
    """Lane-tile size (multiple of 128) and padded M (multiple of TM)."""
    m128 = _round_up(M, LANES)
    tm = min(512, m128)
    return tm, _round_up(M, tm)


def matmul_bias_act(wmat, patches, b, act, out_dtype):
    """wmat: (Co, K) bf16, patches: (K, M) bf16, b: (Co,) f32 -> (Co, Mp) out_dtype."""
    Co, K = wmat.shape
    _, M = patches.shape
    TM, Mp = _choose_tm(M)
    if Mp > M:
        patches = jnp.pad(patches, ((0, 0), (0, Mp - M)))
    b2 = b.reshape(Co, 1).astype(jnp.float32)
    return pl.pallas_call(
        functools.partial(_matmul_bias_act_kernel, act=act),
        grid=(Mp // TM,),
        in_specs=[
            pl.BlockSpec((Co, K), lambda i: (0, 0)),
            pl.BlockSpec((K, TM), lambda i: (0, i)),
            pl.BlockSpec((Co, 1), lambda i: (0, 0)),
        ],
        out_specs=pl.BlockSpec((Co, TM), lambda i: (0, i)),
        out_shape=jax.ShapeDtypeStruct((Co, Mp), out_dtype),
        compiler_params=_PARALLEL,
    )(wmat, patches, b2)


def _windows_2x2_cf(x):
    """(C,N,H,W) -> (4, C*N*Ho*Wo); window positions in row-major (dh, dw) order."""
    C, N, H, W = x.shape
    Ho, Wo = H // 2, W // 2
    xw = (
        x.reshape(C, N, Ho, 2, Wo, 2)
        .transpose(3, 5, 0, 1, 2, 4)
        .reshape(4, C * N * Ho * Wo)
    )
    return xw, (C, N, Ho, Wo)


def _pad_windows(xw):
    """(4, T) -> (4, Rp, 128) with Rp a multiple of TR (lane-dense blocks)."""
    T = xw.shape[1]
    Rp = _round_up(pl.cdiv(T, LANES), TR)
    Tp = Rp * LANES
    if Tp > T:
        xw = jnp.pad(xw, ((0, 0), (0, Tp - T)))
    return xw.reshape(4, Rp, LANES), Rp, T


def maxpool2x2_cf(x):
    xw, (C, N, Ho, Wo) = _windows_2x2_cf(x)
    xwp, Rp, T = _pad_windows(xw)
    out = pl.pallas_call(
        _maxpool_kernel,
        grid=(Rp // TR,),
        in_specs=[pl.BlockSpec((4, TR, LANES), lambda i: (0, i, 0))],
        out_specs=pl.BlockSpec((TR, LANES), lambda i: (i, 0)),
        out_shape=jax.ShapeDtypeStruct((Rp, LANES), x.dtype),
        compiler_params=_PARALLEL,
    )(xwp)
    return out.reshape(-1)[:T].reshape(C, N, Ho, Wo)


def pool_unpool2x2_cf(x):
    C, N, H, W = x.shape
    xw, (C, N, Ho, Wo) = _windows_2x2_cf(x)
    xwp, Rp, T = _pad_windows(xw)
    out = pl.pallas_call(
        _pool_unpool_kernel,
        grid=(Rp // TR,),
        in_specs=[pl.BlockSpec((4, TR, LANES), lambda i: (0, i, 0))],
        out_specs=pl.BlockSpec((4, TR, LANES), lambda i: (0, i, 0)),
        out_shape=jax.ShapeDtypeStruct((4, Rp, LANES), x.dtype),
        compiler_params=_PARALLEL,
    )(xwp)
    out = out.reshape(4, Rp * LANES)[:, :T]
    return (
        out.reshape(2, 2, C, N, Ho, Wo)
        .transpose(2, 3, 4, 0, 5, 1)
        .reshape(C, N, H, W)
    )


# ----------------------------------------------------------------------------
# JAX glue: channel-first im2col / dilation (pure data movement, no FLOPs)
# ----------------------------------------------------------------------------
def im2col_cf(x, k, stride, pad):
    """x: (C,N,H,W) -> patches (k*k*C, N*Ho*Wo) with row ordering (kh, kw, ci)."""
    C, N, H, W = x.shape
    xp = jnp.pad(x, ((0, 0), (0, 0), (pad, pad), (pad, pad)))
    Hp, Wp = H + 2 * pad, W + 2 * pad
    Ho = (Hp - k) // stride + 1
    Wo = (Wp - k) // stride + 1
    cols = []
    for kh in range(k):
        for kw in range(k):
            cols.append(xp[:, :, kh:kh + stride * Ho:stride, kw:kw + stride * Wo:stride])
    patches = jnp.stack(cols, axis=0)            # (k*k, C, N, Ho, Wo)
    return patches.reshape(k * k * C, N * Ho * Wo), (N, Ho, Wo)


def dilate_and_pad_cf(x, stride, k, output_padding):
    """ConvTranspose2d (padding=0) rewritten as: dilate by stride, pad, stride-1 conv."""
    C, N, H, W = x.shape
    Hd, Wd = (H - 1) * stride + 1, (W - 1) * stride + 1
    z = jnp.zeros((C, N, Hd, Wd), x.dtype)
    z = z.at[:, :, ::stride, ::stride].set(x)
    p = k - 1
    return jnp.pad(z, ((0, 0), (0, 0), (p, p + output_padding), (p, p + output_padding)))


def conv2d_cf(x, w, b, *, stride, pad, act, out_dtype):
    """x: (Ci,N,H,W); w: PyTorch Conv2d weight (Co,Ci,kh,kw)."""
    co, ci, k, _ = w.shape
    patches, (N, Ho, Wo) = im2col_cf(x, k, stride, pad)
    wmat = jnp.transpose(w, (0, 2, 3, 1)).reshape(co, k * k * ci).astype(jnp.bfloat16)
    out = matmul_bias_act(wmat, patches.astype(jnp.bfloat16), b, act, out_dtype)
    return out[:, :N * Ho * Wo].reshape(co, N, Ho, Wo)


def conv_transpose2d_cf(x, w, b, *, stride, output_padding, act, out_dtype):
    """x: (Ci,N,H,W); w: PyTorch ConvTranspose2d weight (Ci,Co,kh,kw)."""
    ci, co, k, _ = w.shape
    xd = dilate_and_pad_cf(x, stride, k, output_padding)
    wmat = (
        jnp.flip(w, (2, 3)).transpose(1, 2, 3, 0).reshape(co, k * k * ci)
    ).astype(jnp.bfloat16)
    patches, (N, Ho, Wo) = im2col_cf(xd, k, 1, 0)
    out = matmul_bias_act(wmat, patches.astype(jnp.bfloat16), b, act, out_dtype)
    return out[:, :N * Ho * Wo].reshape(co, N, Ho, Wo)


# ----------------------------------------------------------------------------
# Full forward pass (matches AutoEncoder_CNN.forward)
# ----------------------------------------------------------------------------
def autoencoder_cnn_forward(x_nchw, params):
    # NCHW -> internal channel-first (C, N, H, W), bf16 on the MXU/DMA path.
    x = jnp.transpose(x_nchw, (1, 0, 2, 3)).astype(jnp.bfloat16)

    # encoder: Conv2d(1->16, k7, s2, p3) + ReLU
    y = conv2d_cf(x, params["w1"], params["b1"], stride=2, pad=3,
                  act="relu", out_dtype=jnp.bfloat16)
    # MaxPool2d(2, 2)
    y = maxpool2x2_cf(y)
    # Conv2d(16->32, k5, s2, p2) + ReLU
    y = conv2d_cf(y, params["w2"], params["b2"], stride=2, pad=2,
                  act="relu", out_dtype=jnp.bfloat16)
    # MaxPool2d(2, 2, return_indices=True) immediately followed by MaxUnpool2d(2, 2)
    y = pool_unpool2x2_cf(y)

    # decoder: ConvTranspose2d(32->16, k5, s2) + ReLU
    y = conv_transpose2d_cf(y, params["w3"], params["b3"], stride=2,
                            output_padding=0, act="relu", out_dtype=jnp.bfloat16)
    # ConvTranspose2d(16->1, k7, s2, output_padding=1) + Sigmoid
    y = conv_transpose2d_cf(y, params["w4"], params["b4"], stride=2,
                            output_padding=1, act="sigmoid", out_dtype=jnp.float32)

    return jnp.transpose(y, (1, 0, 2, 3))        # (1,N,H,W) -> (N,1,H,W)


# ----------------------------------------------------------------------------
# Deterministic parameter init (same shapes as the PyTorch module __init__)
# ----------------------------------------------------------------------------
def init_params(key):
    ks = jax.random.split(key, 8)
    s = 0.1
    return {
        "w1": jax.random.normal(ks[0], (16, 1, 7, 7), jnp.float32) * s,   # Conv2d
        "b1": jax.random.normal(ks[1], (16,), jnp.float32) * s,
        "w2": jax.random.normal(ks[2], (32, 16, 5, 5), jnp.float32) * s,  # Conv2d
        "b2": jax.random.normal(ks[3], (32,), jnp.float32) * s,
        "w3": jax.random.normal(ks[4], (32, 16, 5, 5), jnp.float32) * s,  # ConvTranspose2d (Cin,Cout,kh,kw)
        "b3": jax.random.normal(ks[5], (16,), jnp.float32) * s,
        "w4": jax.random.normal(ks[6], (16, 1, 7, 7), jnp.float32) * s,   # ConvTranspose2d (Cin,Cout,kh,kw)
        "b4": jax.random.normal(ks[7], (1,), jnp.float32) * s,
    }


if __name__ == "__main__":
    key = jax.random.PRNGKey(0)
    kx, kp = jax.random.split(key)
    # MNIST-like input: the decoder output-size arithmetic implies 28x28 inputs.
    x = jax.random.uniform(kx, (2, 1, 28, 28), jnp.float32)
    params = init_params(kp)

    fwd = jax.jit(autoencoder_cnn_forward)
    out = fwd(x, params)
    jax.block_until_ready(out)
    assert out.shape == (2, 1, 28, 28), out.shape
    assert bool(jnp.all(jnp.isfinite(out)))
    # sigmoid range (small slack for the approx-reciprocal EUP epilogue)
    assert bool(jnp.all((out >= -1e-3) & (out <= 1.0 + 1e-3)))
    print("KERNEL_OK")
</pallas_src>

<mosaic_0001>
module attributes {stable_mosaic.version = 11 : i64} {
  func.func @_matmul_bias_act_kernel(%arg0: i32, %arg1: memref<16x49xbf16, #tpu.memory_space<vmem>>, %arg2: memref<49x512xbf16, #tpu.memory_space<vmem>>, %arg3: memref<16x1xf32, #tpu.memory_space<vmem>>, %arg4: memref<16x512xbf16, #tpu.memory_space<vmem>>) attributes {dimension_semantics = [#tpu.dimension_semantics<parallel>], iteration_bounds = array<i64: 1>, scalar_prefetch = 0 : i64, scratch_operands = 0 : i64, tpu.core_type = #tpu.core_type<tc>, window_params = [{pipeline_mode = #tpu.pipeline_mode<synchronous>, transform_indices = @transform_0, window_bounds = array<i64: 16, 49>}, {transform_indices = @transform_1, window_bounds = array<i64: 49, 512>}, {pipeline_mode = #tpu.pipeline_mode<synchronous>, transform_indices = @transform_2, window_bounds = array<i64: 16, 1>}, {transform_indices = @transform_3, window_bounds = array<i64: 16, 512>}]} {
    %c0 = arith.constant 0 : index
    %c0_0 = arith.constant 0 : index
    %0 = vector.load %arg1[%c0, %c0_0] : memref<16x49xbf16, #tpu.memory_space<vmem>>, vector<16x49xbf16>
    %c0_1 = arith.constant 0 : index
    %c0_2 = arith.constant 0 : index
    %1 = vector.load %arg2[%c0_1, %c0_2] : memref<49x512xbf16, #tpu.memory_space<vmem>>, vector<49x512xbf16>
    %cst = arith.constant dense<0.000000e+00> : vector<16x512xf32>
    %2 = tpu.matmul %0, %1, %cst {dimension_numbers = #tpu.dot_dimension_numbers<[1], [0], [0], [1], [0, 0, 1, 1], [], []>} : vector<16x49xbf16>, vector<49x512xbf16>, vector<16x512xf32> -> vector<16x512xf32>
    %c0_3 = arith.constant 0 : index
    %c0_4 = arith.constant 0 : index
    %3 = vector.load %arg3[%c0_3, %c0_4] : memref<16x1xf32, #tpu.memory_space<vmem>>, vector<16x1xf32>
    %4 = vector.broadcast %3 : vector<16x1xf32> to vector<16x512xf32>
    %5 = arith.addf %2, %4 : vector<16x512xf32>
    %cst_5 = arith.constant 0.000000e+00 : f32
    %6 = vector.broadcast %cst_5 : f32 to vector<16x512xf32>
    %7 = arith.maximumf %5, %6 : vector<16x512xf32>
    %8 = arith.truncf %7 : vector<16x512xf32> to vector<16x512xbf16>
    %c0_6 = arith.constant 0 : index
    %c0_7 = arith.constant 0 : index
    %9 = vector.load %arg4[%c0_6, %c0_7] : memref<16x512xbf16, #tpu.memory_space<vmem>>, vector<16x512xbf16>
    tpu.vector_store %arg4[%c0_6, %c0_7], %8 {strides = array<i32>} : memref<16x512xbf16, #tpu.memory_space<vmem>>, vector<16x512xbf16>,
    return
  }
  func.func @transform_0(%arg0: i32) -> (i32, i32) {
    %c0_i32 = arith.constant 0 : i32
    %c0_i32_0 = arith.constant 0 : i32
    %c0_i32_1 = arith.constant 0 : i32
    return %c0_i32, %c0_i32_0 : i32, i32
  }
  func.func @transform_1(%arg0: i32) -> (i32, i32) {
    %c0_i32 = arith.constant 0 : i32
    %c0_i32_0 = arith.constant 0 : i32
    return %c0_i32, %arg0 : i32, i32
  }
  func.func @transform_2(%arg0: i32) -> (i32, i32) {
    %c0_i32 = arith.constant 0 : i32
    %c0_i32_0 = arith.constant 0 : i32
    %c0_i32_1 = arith.constant 0 : i32
    return %c0_i32, %c0_i32_0 : i32, i32
  }
  func.func @transform_3(%arg0: i32) -> (i32, i32) {
    %c0_i32 = arith.constant 0 : i32
    %c0_i32_0 = arith.constant 0 : i32
    return %c0_i32, %arg0 : i32, i32
  }
}

module attributes {stable_mosaic.version = 11 : i64} {
  func.func @_maxpool_kernel(%arg0: i32, %arg1: memref<4x8x128xbf16, #tpu.memory_space<vmem>>, %arg2: memref<8x128xbf16, #tpu.memory_space<vmem>>) attributes {dimension_semantics = [#tpu.dimension_semantics<parallel>], iteration_bounds = array<i64: 2>, scalar_prefetch = 0 : i64, scratch_operands = 0 : i64, tpu.core_type = #tpu.core_type<tc>, window_params = [{transform_indices = @transform_0, window_bounds = array<i64: 4, 8, 128>}, {transform_indices = @transform_1, window_bounds = array<i64: 8, 128>}]} {
    %c0 = arith.constant 0 : index
    %c0_0 = arith.constant 0 : index
    %c0_1 = arith.constant 0 : index
    %0 = vector.load %arg1[%c0, %c0_0, %c0_1] : memref<4x8x128xbf16, #tpu.memory_space<vmem>>, vector<4x8x128xbf16>
    %1 = vector.extract_strided_slice %0 {offsets = [0, 0, 0], sizes = [1, 8, 128], strides = [1, 1, 1]} : vector<4x8x128xbf16> to vector<1x8x128xbf16>
    %2 = vector.shape_cast %1 : vector<1x8x128xbf16> to vector<8x128xbf16>
    %3 = vector.extract_strided_slice %0 {offsets = [1, 0, 0], sizes = [1, 8, 128], strides = [1, 1, 1]} : vector<4x8x128xbf16> to vector<1x8x128xbf16>
    %4 = vector.shape_cast %3 : vector<1x8x128xbf16> to vector<8x128xbf16>
    %5 = arith.maximumf %2, %4 : vector<8x128xbf16>
    %6 = vector.extract_strided_slice %0 {offsets = [2, 0, 0], sizes = [1, 8, 128], strides = [1, 1, 1]} : vector<4x8x128xbf16> to vector<1x8x128xbf16>
    %7 = vector.shape_cast %6 : vector<1x8x128xbf16> to vector<8x128xbf16>
    %8 = vector.extract_strided_slice %0 {offsets = [3, 0, 0], sizes = [1, 8, 128], strides = [1, 1, 1]} : vector<4x8x128xbf16> to vector<1x8x128xbf16>
    %9 = vector.shape_cast %8 : vector<1x8x128xbf16> to vector<8x128xbf16>
    %10 = arith.maximumf %7, %9 : vector<8x128xbf16>
    %11 = arith.maximumf %5, %10 : vector<8x128xbf16>
    %c0_2 = arith.constant 0 : index
    %c0_3 = arith.constant 0 : index
    %12 = vector.load %arg2[%c0_2, %c0_3] : memref<8x128xbf16, #tpu.memory_space<vmem>>, vector<8x128xbf16>
    tpu.vector_store %arg2[%c0_2, %c0_3], %11 {strides = array<i32>} : memref<8x128xbf16, #tpu.memory_space<vmem>>, vector<8x128xbf16>,
    return
  }
  func.func @transform_0(%arg0: i32) -> (i32, i32, i32) {
    %c0_i32 = arith.constant 0 : i32
    %c0_i32_0 = arith.constant 0 : i32
    %c0_i32_1 = arith.constant 0 : i32
    return %c0_i32, %arg0, %c0_i32_0 : i32, i32, i32
  }
  func.func @transform_1(%arg0: i32) -> (i32, i32) {
    %c0_i32 = arith.constant 0 : i32
    %c0_i32_0 = arith.constant 0 : i32
    return %arg0, %c0_i32 : i32, i32
  }
}

module attributes {stable_mosaic.version = 11 : i64} {
  func.func @_matmul_bias_act_kernel(%arg0: i32, %arg1: memref<32x400xbf16, #tpu.memory_space<vmem>>, %arg2: memref<400x128xbf16, #tpu.memory_space<vmem>>, %arg3: memref<32x1xf32, #tpu.memory_space<vmem>>, %arg4: memref<32x128xbf16, #tpu.memory_space<vmem>>) attributes {dimension_semantics = [#tpu.dimension_semantics<parallel>], iteration_bounds = array<i64: 1>, scalar_prefetch = 0 : i64, scratch_operands = 0 : i64, tpu.core_type = #tpu.core_type<tc>, window_params = [{pipeline_mode = #tpu.pipeline_mode<synchronous>, transform_indices = @transform_0, window_bounds = array<i64: 32, 400>}, {transform_indices = @transform_1, window_bounds = array<i64: 400, 128>}, {pipeline_mode = #tpu.pipeline_mode<synchronous>, transform_indices = @transform_2, window_bounds = array<i64: 32, 1>}, {transform_indices = @transform_3, window_bounds = array<i64: 32, 128>}]} {
    %c0 = arith.constant 0 : index
    %c0_0 = arith.constant 0 : index
    %0 = vector.load %arg1[%c0, %c0_0] : memref<32x400xbf16, #tpu.memory_space<vmem>>, vector<32x400xbf16>
    %c0_1 = arith.constant 0 : index
    %c0_2 = arith.constant 0 : index
    %1 = vector.load %arg2[%c0_1, %c0_2] : memref<400x128xbf16, #tpu.memory_space<vmem>>, vector<400x128xbf16>
    %cst = arith.constant dense<0.000000e+00> : vector<32x128xf32>
    %2 = tpu.matmul %0, %1, %cst {dimension_numbers = #tpu.dot_dimension_numbers<[1], [0], [0], [1], [0, 0, 1, 1], [], []>} : vector<32x400xbf16>, vector<400x128xbf16>, vector<32x128xf32> -> vector<32x128xf32>
    %c0_3 = arith.constant 0 : index
    %c0_4 = arith.constant 0 : index
    %3 = vector.load %arg3[%c0_3, %c0_4] : memref<32x1xf32, #tpu.memory_space<vmem>>, vector<32x1xf32>
    %4 = vector.broadcast %3 : vector<32x1xf32> to vector<32x128xf32>
    %5 = arith.addf %2, %4 : vector<32x128xf32>
    %cst_5 = arith.constant 0.000000e+00 : f32
    %6 = vector.broadcast %cst_5 : f32 to vector<32x128xf32>
    %7 = arith.maximumf %5, %6 : vector<32x128xf32>
    %8 = arith.truncf %7 : vector<32x128xf32> to vector<32x128xbf16>
    %c0_6 = arith.constant 0 : index
    %c0_7 = arith.constant 0 : index
    %9 = vector.load %arg4[%c0_6, %c0_7] : memref<32x128xbf16, #tpu.memory_space<vmem>>, vector<32x128xbf16>
    tpu.vector_store %arg4[%c0_6, %c0_7], %8 {strides = array<i32>} : memref<32x128xbf16, #tpu.memory_space<vmem>>, vector<32x128xbf16>,
    return
  }
  func.func @transform_0(%arg0: i32) -> (i32, i32) {
    %c0_i32 = arith.constant 0 : i32
    %c0_i32_0 = arith.constant 0 : i32
    %c0_i32_1 = arith.constant 0 : i32
    return %c0_i32, %c0_i32_0 : i32, i32
  }
  func.func @transform_1(%arg0: i32) -> (i32, i32) {
    %c0_i32 = arith.constant 0 : i32
    %c0_i32_0 = arith.constant 0 : i32
    return %c0_i32, %arg0 : i32, i32
  }
  func.func @transform_2(%arg0: i32) -> (i32, i32) {
    %c0_i32 = arith.constant 0 : i32
    %c0_i32_0 = arith.constant 0 : i32
    %c0_i32_1 = arith.constant 0 : i32
    return %c0_i32, %c0_i32_0 : i32, i32
  }
  func.func @transform_3(%arg0: i32) -> (i32, i32) {
    %c0_i32 = arith.constant 0 : i32
    %c0_i32_0 = arith.constant 0 : i32
    return %c0_i32, %arg0 : i32, i32
  }
}

module attributes {stable_mosaic.version = 11 : i64} {
  func.func @_pool_unpool_kernel(%arg0: i32, %arg1: memref<4x8x128xbf16, #tpu.memory_space<vmem>>, %arg2: memref<4x8x128xbf16, #tpu.memory_space<vmem>>) attributes {dimension_semantics = [#tpu.dimension_semantics<parallel>], iteration_bounds = array<i64: 1>, scalar_prefetch = 0 : i64, scratch_operands = 0 : i64, tpu.core_type = #tpu.core_type<tc>, window_params = [{transform_indices = @transform_0, window_bounds = array<i64: 4, 8, 128>}, {transform_indices = @transform_1, window_bounds = array<i64: 4, 8, 128>}]} {
    %c0 = arith.constant 0 : index
    %c0_0 = arith.constant 0 : index
    %c0_1 = arith.constant 0 : index
    %0 = vector.load %arg1[%c0, %c0_0, %c0_1] : memref<4x8x128xbf16, #tpu.memory_space<vmem>>, vector<4x8x128xbf16>
    %1 = vector.extract_strided_slice %0 {offsets = [0, 0, 0], sizes = [1, 8, 128], strides = [1, 1, 1]} : vector<4x8x128xbf16> to vector<1x8x128xbf16>
    %2 = vector.shape_cast %1 : vector<1x8x128xbf16> to vector<8x128xbf16>
    %3 = vector.extract_strided_slice %0 {offsets = [1, 0, 0], sizes = [1, 8, 128], strides = [1, 1, 1]} : vector<4x8x128xbf16> to vector<1x8x128xbf16>
    %4 = vector.shape_cast %3 : vector<1x8x128xbf16> to vector<8x128xbf16>
    %5 = arith.maximumf %2, %4 : vector<8x128xbf16>
    %6 = vector.extract_strided_slice %0 {offsets = [2, 0, 0], sizes = [1, 8, 128], strides = [1, 1, 1]} : vector<4x8x128xbf16> to vector<1x8x128xbf16>
    %7 = vector.shape_cast %6 : vector<1x8x128xbf16> to vector<8x128xbf16>
    %8 = vector.extract_strided_slice %0 {offsets = [3, 0, 0], sizes = [1, 8, 128], strides = [1, 1, 1]} : vector<4x8x128xbf16> to vector<1x8x128xbf16>
    %9 = vector.shape_cast %8 : vector<1x8x128xbf16> to vector<8x128xbf16>
    %10 = arith.maximumf %7, %9 : vector<8x128xbf16>
    %11 = arith.maximumf %5, %10 : vector<8x128xbf16>
    %12 = vector.extract_strided_slice %0 {offsets = [0, 0, 0], sizes = [1, 8, 128], strides = [1, 1, 1]} : vector<4x8x128xbf16> to vector<1x8x128xbf16>
    %13 = vector.shape_cast %12 : vector<1x8x128xbf16> to vector<8x128xbf16>
    %14 = arith.cmpf oeq, %13, %11 : vector<8x128xbf16>
    %15 = vector.extract_strided_slice %0 {offsets = [1, 0, 0], sizes = [1, 8, 128], strides = [1, 1, 1]} : vector<4x8x128xbf16> to vector<1x8x128xbf16>
    %16 = vector.shape_cast %15 : vector<1x8x128xbf16> to vector<8x128xbf16>
    %17 = arith.cmpf oeq, %16, %11 : vector<8x128xbf16>
    %18 = vector.extract_strided_slice %0 {offsets = [2, 0, 0], sizes = [1, 8, 128], strides = [1, 1, 1]} : vector<4x8x128xbf16> to vector<1x8x128xbf16>
    %19 = vector.shape_cast %18 : vector<1x8x128xbf16> to vector<8x128xbf16>
    %20 = arith.cmpf oeq, %19, %11 : vector<8x128xbf16>
    %21 = vector.extract_strided_slice %0 {offsets = [3, 0, 0], sizes = [1, 8, 128], strides = [1, 1, 1]} : vector<4x8x128xbf16> to vector<1x8x128xbf16>
    %22 = vector.shape_cast %21 : vector<1x8x128xbf16> to vector<8x128xbf16>
    %23 = arith.cmpf oeq, %22, %11 : vector<8x128xbf16>
    %cst = arith.constant dense<true> : vector<8x128xi1>
    %24 = arith.xori %14, %cst : vector<8x128xi1>
    %25 = arith.andi %17, %24 : vector<8x128xi1>
    %26 = arith.ori %14, %17 : vector<8x128xi1>
    %cst_2 = arith.constant dense<true> : vector<8x128xi1>
    %27 = arith.xori %26, %cst_2 : vector<8x128xi1>
    %28 = arith.andi %20, %27 : vector<8x128xi1>
    %29 = arith.ori %14, %17 : vector<8x128xi1>
    %30 = arith.ori %29, %20 : vector<8x128xi1>
    %cst_3 = arith.constant dense<true> : vector<8x128xi1>
    %31 = arith.xori %30, %cst_3 : vector<8x128xi1>
    %32 = arith.andi %23, %31 : vector<8x128xi1>
    %cst_4 = arith.constant 0.000000e+00 : bf16
    %33 = vector.broadcast %cst_4 : bf16 to vector<8x128xbf16>
    %34 = arith.select %14, %11, %33 : vector<8x128xi1>, vector<8x128xbf16>
    %c0_5 = arith.constant 0 : index
    %c0_6 = arith.constant 0 : index
    %c0_7 = arith.constant 0 : index
    %35 = vector.load %arg2[%c0_5, %c0_6, %c0_7] : memref<4x8x128xbf16, #tpu.memory_space<vmem>>, vector<1x8x128xbf16>
    %36 = vector.shape_cast %35 : vector<1x8x128xbf16> to vector<8x128xbf16>
    %37 = vector.shape_cast %34 : vector<8x128xbf16> to vector<1x8x128xbf16>
    tpu.vector_store %arg2[%c0_5, %c0_6, %c0_7], %37 {strides = array<i32>} : memref<4x8x128xbf16, #tpu.memory_space<vmem>>, vector<1x8x128xbf16>,
    %38 = arith.select %25, %11, %33 : vector<8x128xi1>, vector<8x128xbf16>
    %c1 = arith.constant 1 : index
    %c0_8 = arith.constant 0 : index
    %c0_9 = arith.constant 0 : index
    %39 = vector.load %arg2[%c1, %c0_8, %c0_9] : memref<4x8x128xbf16, #tpu.memory_space<vmem>>, vector<1x8x128xbf16>
    %40 = vector.shape_cast %39 : vector<1x8x128xbf16> to vector<8x128xbf16>
    %41 = vector.shape_cast %38 : vector<8x128xbf16> to vector<1x8x128xbf16>
    tpu.vector_store %arg2[%c1, %c0_8, %c0_9], %41 {strides = array<i32>} : memref<4x8x128xbf16, #tpu.memory_space<vmem>>, vector<1x8x128xbf16>,
    %42 = arith.select %28, %11, %33 : vector<8x128xi1>, vector<8x128xbf16>
    %c2 = arith.constant 2 : index
    %c0_10 = arith.constant 0 : index
    %c0_11 = arith.constant 0 : index
    %43 = vector.load %arg2[%c2, %c0_10, %c0_11] : memref<4x8x128xbf16, #tpu.memory_space<vmem>>, vector<1x8x128xbf16>
    %44 = vector.shape_cast %43 : vector<1x8x128xbf16> to vector<8x128xbf16>
    %45 = vector.shape_cast %42 : vector<8x128xbf16> to vector<1x8x128xbf16>
    tpu.vector_store %arg2[%c2, %c0_10, %c0_11], %45 {strides = array<i32>} : memref<4x8x128xbf16, #tpu.memory_space<vmem>>, vector<1x8x128xbf16>,
    %46 = arith.select %32, %11, %33 : vector<8x128xi1>, vector<8x128xbf16>
    %c3 = arith.constant 3 : index
    %c0_12 = arith.constant 0 : index
    %c0_13 = arith.constant 0 : index
    %47 = vector.load %arg2[%c3, %c0_12, %c0_13] : memref<4x8x128xbf16, #tpu.memory_space<vmem>>, vector<1x8x128xbf16>
    %48 = vector.shape_cast %47 : vector<1x8x128xbf16> to vector<8x128xbf16>
    %49 = vector.shape_cast %46 : vector<8x128xbf16> to vector<1x8x128xbf16>
    tpu.vector_store %arg2[%c3, %c0_12, %c0_13], %49 {strides = array<i32>} : memref<4x8x128xbf16, #tpu.memory_space<vmem>>, vector<1x8x128xbf16>,
    return
  }
  func.func @transform_0(%arg0: i32) -> (i32, i32, i32) {
    %c0_i32 = arith.constant 0 : i32
    %c0_i32_0 = arith.constant 0 : i32
    %c0_i32_1 = arith.constant 0 : i32
    return %c0_i32, %arg0, %c0_i32_0 : i32, i32, i32
  }
  func.func @transform_1(%arg0: i32) -> (i32, i32, i32) {
    %c0_i32 = arith.constant 0 : i32
    %c0_i32_0 = arith.constant 0 : i32
    %c0_i32_1 = arith.constant 0 : i32
    return %c0_i32, %arg0, %c0_i32_0 : i32, i32, i32
  }
}

module attributes {stable_mosaic.version = 11 : i64} {
  func.func @_matmul_bias_act_kernel(%arg0: i32, %arg1: memref<16x800xbf16, #tpu.memory_space<vmem>>, %arg2: memref<800x256xbf16, #tpu.memory_space<vmem>>, %arg3: memref<16x1xf32, #tpu.memory_space<vmem>>, %arg4: memref<16x256xbf16, #tpu.memory_space<vmem>>) attributes {dimension_semantics = [#tpu.dimension_semantics<parallel>], iteration_bounds = array<i64: 1>, scalar_prefetch = 0 : i64, scratch_operands = 0 : i64, tpu.core_type = #tpu.core_type<tc>, window_params = [{pipeline_mode = #tpu.pipeline_mode<synchronous>, transform_indices = @transform_0, window_bounds = array<i64: 16, 800>}, {transform_indices = @transform_1, window_bounds = array<i64: 800, 256>}, {pipeline_mode = #tpu.pipeline_mode<synchronous>, transform_indices = @transform_2, window_bounds = array<i64: 16, 1>}, {transform_indices = @transform_3, window_bounds = array<i64: 16, 256>}]} {
    %c0 = arith.constant 0 : index
    %c0_0 = arith.constant 0 : index
    %0 = vector.load %arg1[%c0, %c0_0] : memref<16x800xbf16, #tpu.memory_space<vmem>>, vector<16x800xbf16>
    %c0_1 = arith.constant 0 : index
    %c0_2 = arith.constant 0 : index
    %1 = vector.load %arg2[%c0_1, %c0_2] : memref<800x256xbf16, #tpu.memory_space<vmem>>, vector<800x256xbf16>
    %cst = arith.constant dense<0.000000e+00> : vector<16x256xf32>
    %2 = tpu.matmul %0, %1, %cst {dimension_numbers = #tpu.dot_dimension_numbers<[1], [0], [0], [1], [0, 0, 1, 1], [], []>} : vector<16x800xbf16>, vector<800x256xbf16>, vector<16x256xf32> -> vector<16x256xf32>
    %c0_3 = arith.constant 0 : index
    %c0_4 = arith.constant 0 : index
    %3 = vector.load %arg3[%c0_3, %c0_4] : memref<16x1xf32, #tpu.memory_space<vmem>>, vector<16x1xf32>
    %4 = vector.broadcast %3 : vector<16x1xf32> to vector<16x256xf32>
    %5 = arith.addf %2, %4 : vector<16x256xf32>
    %cst_5 = arith.constant 0.000000e+00 : f32
    %6 = vector.broadcast %cst_5 : f32 to vector<16x256xf32>
    %7 = arith.maximumf %5, %6 : vector<16x256xf32>
    %8 = arith.truncf %7 : vector<16x256xf32> to vector<16x256xbf16>
    %c0_6 = arith.constant 0 : index
    %c0_7 = arith.constant 0 : index
    %9 = vector.load %arg4[%c0_6, %c0_7] : memref<16x256xbf16, #tpu.memory_space<vmem>>, vector<16x256xbf16>
    tpu.vector_store %arg4[%c0_6, %c0_7], %8 {strides = array<i32>} : memref<16x256xbf16, #tpu.memory_space<vmem>>, vector<16x256xbf16>,
    return
  }
  func.func @transform_0(%arg0: i32) -> (i32, i32) {
    %c0_i32 = arith.constant 0 : i32
    %c0_i32_0 = arith.constant 0 : i32
    %c0_i32_1 = arith.constant 0 : i32
    return %c0_i32, %c0_i32_0 : i32, i32
  }
  func.func @transform_1(%arg0: i32) -> (i32, i32) {
    %c0_i32 = arith.constant 0 : i32
    %c0_i32_0 = arith.constant 0 : i32
    return %c0_i32, %arg0 : i32, i32
  }
  func.func @transform_2(%arg0: i32) -> (i32, i32) {
    %c0_i32 = arith.constant 0 : i32
    %c0_i32_0 = arith.constant 0 : i32
    %c0_i32_1 = arith.constant 0 : i32
    return %c0_i32, %c0_i32_0 : i32, i32
  }
  func.func @transform_3(%arg0: i32) -> (i32, i32) {
    %c0_i32 = arith.constant 0 : i32
    %c0_i32_0 = arith.constant 0 : i32
    return %c0_i32, %arg0 : i32, i32
  }
}

module attributes {stable_mosaic.version = 11 : i64} {
  func.func @_matmul_bias_act_kernel(%arg0: i32, %arg1: memref<1x784xbf16, #tpu.memory_space<vmem>>, %arg2: memref<784x512xbf16, #tpu.memory_space<vmem>>, %arg3: memref<1x1xf32, #tpu.memory_space<vmem>>, %arg4: memref<1x512xf32, #tpu.memory_space<vmem>>) attributes {dimension_semantics = [#tpu.dimension_semantics<parallel>], iteration_bounds = array<i64: 4>, scalar_prefetch = 0 : i64, scratch_operands = 0 : i64, tpu.core_type = #tpu.core_type<tc>, window_params = [{pipeline_mode = #tpu.pipeline_mode<synchronous>, transform_indices = @transform_0, window_bounds = array<i64: 1, 784>}, {transform_indices = @transform_1, window_bounds = array<i64: 784, 512>}, {pipeline_mode = #tpu.pipeline_mode<synchronous>, transform_indices = @transform_2, window_bounds = array<i64: 1, 1>}, {transform_indices = @transform_3, window_bounds = array<i64: 1, 512>}]} {
    %c0 = arith.constant 0 : index
    %c0_0 = arith.constant 0 : index
    %0 = vector.load %arg1[%c0, %c0_0] : memref<1x784xbf16, #tpu.memory_space<vmem>>, vector<1x784xbf16>
    %c0_1 = arith.constant 0 : index
    %c0_2 = arith.constant 0 : index
    %1 = vector.load %arg2[%c0_1, %c0_2] : memref<784x512xbf16, #tpu.memory_space<vmem>>, vector<784x512xbf16>
    %cst = arith.constant dense<0.000000e+00> : vector<1x512xf32>
    %2 = tpu.matmul %0, %1, %cst {dimension_numbers = #tpu.dot_dimension_numbers<[1], [0], [0], [1], [0, 0, 1, 1], [], []>} : vector<1x784xbf16>, vector<784x512xbf16>, vector<1x512xf32> -> vector<1x512xf32>
    %c0_3 = arith.constant 0 : index
    %c0_4 = arith.constant 0 : index
    %3 = vector.load %arg3[%c0_3, %c0_4] : memref<1x1xf32, #tpu.memory_space<vmem>>, vector<1x1xf32>
    %4 = vector.broadcast %3 : vector<1x1xf32> to vector<1x512xf32>
    %5 = arith.addf %2, %4 : vector<1x512xf32>
    %6 = math.absf %5 : vector<1x512xf32>
    %cst_5 = arith.constant 0.000000e+00 : f32
    %7 = vector.broadcast %cst_5 : f32 to vector<1x512xf32>
    %8 = arith.subf %7, %6 : vector<1x512xf32>
    %9 = math.exp %8 : vector<1x512xf32>
    %cst_6 = arith.constant 1.000000e+00 : f32
    %10 = vector.broadcast %cst_6 : f32 to vector<1x512xf32>
    %11 = arith.addf %10, %9 : vector<1x512xf32>
    %12 = tpu.reciprocal %11 {approx = true} : vector<1x512xf32> -> vector<1x512xf32>
    %cst_7 = arith.constant 0.000000e+00 : f32
    %13 = vector.broadcast %cst_7 : f32 to vector<1x512xf32>
    %14 = arith.cmpf oge, %5, %13 : vector<1x512xf32>
    %15 = arith.mulf %9, %12 : vector<1x512xf32>
    %16 = arith.select %14, %12, %15 : vector<1x512xi1>, vector<1x512xf32>
    %c0_8 = arith.constant 0 : index
    %c0_9 = arith.constant 0 : index
    %17 = vector.load %arg4[%c0_8, %c0_9] : memref<1x512xf32, #tpu.memory_space<vmem>>, vector<1x512xf32>
    tpu.vector_store %arg4[%c0_8, %c0_9], %16 {strides = array<i32>} : memref<1x512xf32, #tpu.memory_space<vmem>>, vector<1x512xf32>,
    return
  }
  func.func @transform_0(%arg0: i32) -> (i32, i32) {
    %c0_i32 = arith.constant 0 : i32
    %c0_i32_0 = arith.constant 0 : i32
    %c0_i32_1 = arith.constant 0 : i32
    return %c0_i32, %c0_i32_0 : i32, i32
  }
  func.func @transform_1(%arg0: i32) -> (i32, i32) {
    %c0_i32 = arith.constant 0 : i32
    %c0_i32_0 = arith.constant 0 : i32
    return %c0_i32, %arg0 : i32, i32
  }
  func.func @transform_2(%arg0: i32) -> (i32, i32) {
    %c0_i32 = arith.constant 0 : i32
    %c0_i32_0 = arith.constant 0 : i32
    %c0_i32_1 = arith.constant 0 : i32
    return %c0_i32, %c0_i32_0 : i32, i32
  }
  func.func @transform_3(%arg0: i32) -> (i32, i32) {
    %c0_i32 = arith.constant 0 : i32
    %c0_i32_0 = arith.constant 0 : i32
    return %c0_i32, %arg0 : i32, i32
  }
}

</mosaic_0001>

<llo_original>
// kernel: autoencoder_cnn_forward.6
$region0: #{autoencoder_cnn_forward.6}
  #allocation0 [shape = 'u32[]', space=smem, size = 0x4, offset = 0x4, fixed_abs, tag = 'smem constant byte address 0x4 - core index']
  #allocation1 [shape = 'u32[144,128]{1,0:T(1,128)}', space=vmem, size = 0x12000, scoped, tag = 'internal scratch']
  %s0 = inlined_call_operand.vmem [shape: bf16[16,49], index: 0, kind: input, shape index: {}]
  %s1 = inlined_call_operand.vmem [shape: bf16[49,512], index: 1, kind: input, shape index: {}]
  %s2 = inlined_call_operand.vmem [shape: f32[16,1], index: 2, kind: input, shape index: {}]
  %s3 = inlined_call_operand.vmem [shape: bf16[16,512], index: 3, kind: output, shape index: {}]
  %s4 = sld [smem:[#allocation0]]
  $region22: #{autoencoder_cnn_forward.6} parent=0
    _
  %s6 = ssub.s32 1, %s4
  %s7 = scalar_select 0, %s6, %s4
  // Predicated region
  $region2: #{autoencoder_cnn_forward.6} parent=0 // pred_check
    _
  $region3: #{autoencoder_cnn_forward.6} parent=0 // pred_check_branch
    %9 = sbr.rel (0) target = $region5
  $region4: #{autoencoder_cnn_forward.6} parent=0 // pred_region
    _
  $region5: #{autoencoder_cnn_forward.6} parent=0 // pred_fallthru
    _
  // Predicated region
  $region6: #{autoencoder_cnn_forward.6} parent=0 // pred_check
    _
  $region7: #{autoencoder_cnn_forward.6} parent=0 // pred_check_branch
    %11 = sbr.rel (0) target = $region9
  $region8: #{autoencoder_cnn_forward.6} parent=0 // pred_region
    _
  $region9: #{autoencoder_cnn_forward.6} parent=0 // pred_fallthru
    _
  // Predicated region
  $region10: #{autoencoder_cnn_forward.6} parent=0 // pred_check
    _
  $region11: #{autoencoder_cnn_forward.6} parent=0 // pred_check_branch
    %13 = sbr.rel (0) target = $region13
  $region12: #{autoencoder_cnn_forward.6} parent=0 // pred_region
    _
  $region13: #{autoencoder_cnn_forward.6} parent=0 // pred_fallthru
    _
  %v15 = vld [vmem:[%s0] sm:$0xf]
  %v16 = vld [vmem:[%s0 + $0x4] sm:$0xf]
  %v17 = vld [vmem:[%s1] sm:$0xff]
  %v18 = vld [vmem:[%s1 + $0x8] sm:$0xff]
  %v19 = vld [vmem:[%s1 + $0x10] sm:$0xff]
  %v20 = vld [vmem:[%s1 + $0x18] sm:$0xff]
  %v21 = vld [vmem:[%s1 + $0x20] sm:$0xff]
  %v22 = vld [vmem:[%s1 + $0x28] sm:$0xff]
  %v23 = vld [vmem:[%s1 + $0x30] sm:$0xff]
  %v24 = vld [vmem:[%s1 + $0x38] sm:$0xff]
  %v25 = vld [vmem:[%s1 + $0x40] sm:$0xff]
  %v26 = vld [vmem:[%s1 + $0x48] sm:$0xff]
  %v27 = vld [vmem:[%s1 + $0x50] sm:$0xff]
  %v28 = vld [vmem:[%s1 + $0x58] sm:$0xff]
  %v29 = vld [vmem:[%s1 + $0x60] sm:$0x11]
  %v30 = vld [vmem:[%s1 + $0x68] sm:$0x11]
  %v31 = vld [vmem:[%s2] sm:$0xff]
  %v32 = vld [vmem:[%s2 + $0x8] sm:$0xff]
  %34 = vset.pattern.permute.xlu0 0
  %35 = vperm.xlu0 %34, %v31
  %v36 = vpop.permute.xlu0 %35
  %39 = vset.pattern.permute.xlu0 0
  %40 = vperm.xlu0 %39, %v32
  %v41 = vpop.permute.xlu0 %40
  %v45 = vunpack.c.l.b16 %v15
  %v46 = vunpack.c.l.b16 %v16
  %v47 = vpack.c.b16 %v46, %v45
  %v62 = vunpack.c.l.b16 %v17
  %v63 = vunpack.c.h.b16 %v17
  %v64 = vunpack.c.l.b16 %v18
  %v65 = vunpack.c.h.b16 %v18
  %v66 = vunpack.c.l.b16 %v19
  %v67 = vunpack.c.h.b16 %v19
  %v68 = vunpack.c.l.b16 %v20
  %v69 = vunpack.c.h.b16 %v20
  %v70 = vunpack.c.l.b16 %v21
  %v71 = vunpack.c.h.b16 %v21
  %v72 = vunpack.c.l.b16 %v22
  %v73 = vunpack.c.h.b16 %v22
  %v74 = vunpack.c.l.b16 %v23
  %v75 = vunpack.c.h.b16 %v23
  %v76 = vunpack.c.l.b16 %v24
  %v77 = vunpack.c.h.b16 %v24
  %v78 = vunpack.c.l.b16 %v25
  %v79 = vunpack.c.h.b16 %v25
  %v80 = vunpack.c.l.b16 %v26
  %v81 = vunpack.c.h.b16 %v26
  %v82 = vunpack.c.l.b16 %v27
  %v83 = vunpack.c.h.b16 %v27
  %v84 = vunpack.c.l.b16 %v28
  %v85 = vunpack.c.h.b16 %v28
  %v86 = vunpack.c.l.b16 %v29
  %v87 = vunpack.c.h.b16 %v29
  %v88 = vunpack.c.l.b16 %v30
  %v89 = vunpack.c.h.b16 %v30
  %v90 = vpack.c.b16 %v66, %v62
  %v91 = vpack.c.b16 %v67, %v63
  %v92 = vpack.c.b16 %v68, %v64
  %v93 = vpack.c.b16 %v69, %v65
  %v94 = vpack.c.b16 %v74, %v70
  %v95 = vpack.c.b16 %v75, %v71
  %v96 = vpack.c.b16 %v76, %v72
  %v97 = vpack.c.b16 %v77, %v73
  %v98 = vpack.c.b16 %v82, %v78
  %v99 = vpack.c.b16 %v83, %v79
  %v100 = vpack.c.b16 %v84, %v80
  %v101 = vpack.c.b16 %v85, %v81
  %v102 = vpack.c.b16 %v86, %v86
  %v103 = vpack.c.b16 %v87, %v87
  %v104 = vpack.c.b16 %v88, %v88
  %v105 = vpack.c.b16 %v89, %v89
  %vm118 = vcmask 400384
  %v120 = vsel %vm118, %v47, 0
  %vm122 = vcmask 1040384
  %v123 = vsel 0, 4294967295, 65535
  %v124 = vsel %vm122, %v123, 0
  %v126 = vand.u32 %v102, %v124
  %v129 = vand.u32 %v103, %v124
  %v132 = vand.u32 %v104, %v124
  %v135 = vand.u32 %v105, %v124
  %137 = vmatprep.subr.bf16.mxu0 %v91
  %138 = vmatpush1.bf16.msra.mxu0 %v90
  %139 = vmatprep.subr.bf16.mxu0 %v95
  %140 = vmatpush1.bf16.msra.mxu0 %v94
  %141 = vmatprep.subr.bf16.mxu0 %v99
  %142 = vmatpush1.bf16.msra.mxu0 %v98
  %143 = vmatprep.subr.bf16.mxu0 %v129
  %144 = vmatpush1.bf16.msra.mxu0 %v126
  %145 = vmatprep.subr.bf16.mxu0 0
  %146 = vmatpush1.bf16.msra.mxu0 0
  %147 = vmatprep.subr.bf16.mxu0 0
  %148 = vmatpush1.bf16.msra.mxu0 0
  %149 = vmatprep.subr.bf16.mxu0 0
  %150 = vmatpush1.bf16.msra.mxu0 0
  %151 = vmatprep.subr.bf16.mxu0 0
  %152 = vmatpush1.bf16.msra.mxu0 0
  %153 = vmatprep.subr.bf16.mxu0 0
  %154 = vmatpush1.bf16.msra.mxu0 0
  %155 = vmatprep.subr.bf16.mxu0 0
  %156 = vmatpush1.bf16.msra.mxu0 0
  %157 = vmatprep.subr.bf16.mxu0 0
  %158 = vmatpush1.bf16.msra.mxu0 0
  %159 = vmatprep.subr.bf16.mxu0 0
  %160 = vmatpush1.bf16.msra.mxu0 0
  %161 = vmatprep.subr.bf16.mxu0 0
  %162 = vmatpush1.bf16.msra.mxu0 0
  %163 = vmatprep.subr.bf16.mxu0 0
  %164 = vmatpush1.bf16.msra.mxu0 0
  %165 = vmatprep.subr.bf16.mxu0 0
  %166 = vmatpush1.bf16.msra.mxu0 0
  %167 = vmatprep.subr.bf16.mxu0 0
  %168 = vmatpush1.bf16.msra.mxu0 0
  %169 = vmatprep.mubr.bf16.mxu0 0
  %170 = vmatmul.mubr.bf16.gmra.mrb[0].mxu0 %v120
  %v171 = vpop.f32.mrb[0].mxu0
  %v172 = vadd.f32 %v36, %v171
  %v173 = vpop.f32.mrb[0].mxu0
  %v174 = vadd.f32 %v36, %v173
  %v175 = vpop.f32.mrb[0].mxu0
  %v176 = vadd.f32 %v41, %v175
  %v177 = vpop.f32.mrb[0].mxu0
  %v178 = vadd.f32 %v41, %v177
  %179 = vdwg.mxu0
  %180 = vmatprep.subr.bf16.mxu0 %v93
  %181 = vmatpush1.bf16.msra.mxu0 %v92
  %182 = vmatprep.subr.bf16.mxu0 %v97
  %183 = vmatpush1.bf16.msra.mxu0 %v96
  %184 = vmatprep.subr.bf16.mxu0 %v101
  %185 = vmatpush1.bf16.msra.mxu0 %v100
  %186 = vmatprep.subr.bf16.mxu0 %v135
  %187 = vmatpush1.bf16.msra.mxu0 %v132
  %188 = vmatprep.subr.bf16.mxu0 0
  %189 = vmatpush1.bf16.msra.mxu0 0
  %190 = vmatprep.subr.bf16.mxu0 0
  %191 = vmatpush1.bf16.msra.mxu0 0
  %192 = vmatprep.subr.bf16.mxu0 0
  %193 = vmatpush1.bf16.msra.mxu0 0
  %194 = vmatprep.subr.bf16.mxu0 0
  %195 = vmatpush1.bf16.msra.mxu0 0
  %196 = vmatprep.subr.bf16.mxu0 0
  %197 = vmatpush1.bf16.msra.mxu0 0
  %198 = vmatprep.subr.bf16.mxu0 0
  %199 = vmatpush1.bf16.msra.mxu0 0
  %200 = vmatprep.subr.bf16.mxu0 0
  %201 = vmatpush1.bf16.msra.mxu0 0
  %202 = vmatprep.subr.bf16.mxu0 0
  %203 = vmatpush1.bf16.msra.mxu0 0
  %204 = vmatprep.subr.bf16.mxu0 0
  %205 = vmatpush1.bf16.msra.mxu0 0
  %206 = vmatprep.subr.bf16.mxu0 0
  %207 = vmatpush1.bf16.msra.mxu0 0
  %208 = vmatprep.subr.bf16.mxu0 0
  %209 = vmatpush1.bf16.msra.mxu0 0
  %210 = vmatprep.subr.bf16.mxu0 0
  %211 = vmatpush1.bf16.msra.mxu0 0
  %212 = vmatprep.mubr.bf16.mxu0 0
  %213 = vmatmul.mubr.bf16.gmra.mrb[0].mxu0 %v120
  %v214 = vpop.f32.mrb[0].mxu0
  %v215 = vadd.f32 %v36, %v214
  %v216 = vpop.f32.mrb[0].mxu0
  %v217 = vadd.f32 %v36, %v216
  %v218 = vpop.f32.mrb[0].mxu0
  %v219 = vadd.f32 %v41, %v218
  %v220 = vpop.f32.mrb[0].mxu0
  %v221 = vadd.f32 %v41, %v220
  %222 = vdwg.mxu0
  %v223 = vmax.f32 %v172, 0.0
  %v224 = vmax.f32 %v174, 0.0
  %v225 = vmax.f32 %v215, 0.0
  %v226 = vmax.f32 %v217, 0.0
  %v227 = vmax.f32 %v176, 0.0
  %v228 = vmax.f32 %v178, 0.0
  %v229 = vmax.f32 %v219, 0.0
  %v230 = vmax.f32 %v221, 0.0
  %v231 = vpack.c.bf16 %v227, %v223
  %v232 = vpack.c.bf16 %v228, %v224
  %v233 = vpack.c.bf16 %v229, %v225
  %v234 = vpack.c.bf16 %v230, %v226
  %v239 = vunpack.c.l.b16 %v231
  %v240 = vunpack.c.l.b16 %v232
  %v241 = vunpack.c.l.b16 %v233
  %v242 = vunpack.c.l.b16 %v234
  %v243 = vunpack.c.h.b16 %v231
  %v244 = vunpack.c.h.b16 %v232
  %v245 = vunpack.c.h.b16 %v233
  %v246 = vunpack.c.h.b16 %v234
  %v247 = vpack.c.b16 %v240, %v239
  %v248 = vpack.c.b16 %v242, %v241
  %v249 = vpack.c.b16 %v244, %v243
  %v250 = vpack.c.b16 %v246, %v245
  %255 = vst [vmem:[%s3] sm:$0xff] %v247
  %256 = vst [vmem:[%s3 + $0x8] sm:$0xff] %v248
  %257 = vst [vmem:[%s3 + $0x10] sm:$0xff] %v249
  %258 = vst [vmem:[%s3 + $0x18] sm:$0xff] %v250
  // Predicated region
  $region14: #{autoencoder_cnn_forward.6} parent=0 // pred_check
    _
  $region15: #{autoencoder_cnn_forward.6} parent=0 // pred_check_branch
    %260 = sbr.rel (0) target = $region17
  $region16: #{autoencoder_cnn_forward.6} parent=0 // pred_region
    _
  $region17: #{autoencoder_cnn_forward.6} parent=0 // pred_fallthru
    _
  // Predicated region
  $region18: #{autoencoder_cnn_forward.6} parent=0 // pred_check
    _
  $region19: #{autoencoder_cnn_forward.6} parent=0 // pred_check_branch
    %262 = sbr.rel (0) target = $region21
  $region20: #{autoencoder_cnn_forward.6} parent=0 // pred_region
    _
  $region21: #{autoencoder_cnn_forward.6} parent=0 // pred_fallthru
    _

// kernel: autoencoder_cnn_forward.7
$region0: #{autoencoder_cnn_forward.7}
  #allocation0 [shape = 'u32[]', space=smem, size = 0x4, offset = 0x4, fixed_abs, tag = 'smem constant byte address 0x4 - core index']
  #allocation1 [shape = 'u32[144,128]{1,0:T(1,128)}', space=vmem, size = 0x12000, scoped, tag = 'internal scratch']
  %s0 = inlined_call_operand.vmem [shape: bf16[4,16,128], index: 0, kind: input, shape index: {}]
  %s1 = inlined_call_operand.vmem [shape: bf16[16,128], index: 1, kind: output, shape index: {}]
  %s2 = sld [smem:[#allocation0]]
  $region78: #{autoencoder_cnn_forward.7} parent=0
    _
  %s4 = ssub.s32 1, %s2
  %s5 = scalar_select 0, %s4, %s2
  $region1: #{autoencoder_cnn_forward.7} parent=0
    #allocation2 [shape = 'u8[16384]{0}', space=vmem, size = 0x4000, scoped, tag = 'input window, operand 0']
    loop: start=0, step=1, limit=4
    $region2: #{autoencoder_cnn_forward.7} parent=1 // loop_pre_header
      _
    $region3: #{autoencoder_cnn_forward.7} parent=1 // loop_header
      %s7 = sphi 0, %s11
      %p8 = scmp.ge.s32.totalorder %s7, 4
      %s17 = sphi 0, %s19
      %s20 = sphi 0, %s17
      %s21 = sphi 0, %s20
      %s37 = sphi 0, %s21
      %s43 = sphi 0, %s45
      %s46 = sphi 0, %s43
      %s47 = sphi 0, %s46
      %s63 = sphi 0, %s47
    $region4: #{autoencoder_cnn_forward.7} parent=1 // loop_header_branch
      %10 = sbr.rel (%p8) target = $region8
    $region5: #{autoencoder_cnn_forward.7} parent=1 // loop_body
      %s12 = ssub.s32 %s7, 1
      %s13 = ssub.s32 %s7, 2
      %s14 = sadd.s32 %s7, 1
      %s15 = ssub.s32 %s7, %s14
      %p16 = scmp.eq.s32.totalorder %s15, 0
      %s18 = sadd.s32 %s17, 1
      %s19 = scalar_select %p16, %s17, %s18
      %p22 = pneg %p16
      %p23 = scmp.eq.s32.totalorder %s7, 1
      %p24 = por %p22, %p23
      %p25 = scmp.ne.s32.totalorder %s17, %s20
      %p26 = scmp.eq.s32.totalorder %s7, 0
      %p27 = por %p25, %p26
      %p28 = scmp.ne.s32.totalorder %s17, %s20
      %p29 = scmp.eq.s32.totalorder %s12, 1
      %p30 = por %p28, %p29
      %p31 = scmp.ne.s32.totalorder %s20, %s21
      %p32 = scmp.eq.s32.totalorder %s12, 0
      %p33 = por %p31, %p32
      %p34 = scmp.ne.s32.totalorder %s20, %s21
      %p35 = scmp.eq.s32.totalorder %s13, 1
      %p36 = por %p34, %p35
      %p38 = scmp.ne.s32.totalorder %s21, %s37
      %p39 = scmp.eq.s32.totalorder %s13, 0
      %p40 = por %p38, %p39
      %s41 = ssub.s32 %s7, %s14
      %p42 = scmp.eq.s32.totalorder %s41, 0
      %s44 = sadd.s32 %s43, 1
      %s45 = scalar_select %p42, %s43, %s44
      %p48 = pneg %p42
      %p49 = scmp.eq.s32.totalorder %s7, 1
      %p50 = por %p48, %p49
      %p51 = scmp.ne.s32.totalorder %s43, %s46
      %p52 = scmp.eq.s32.totalorder %s7, 0
      %p53 = por %p51, %p52
      %p54 = scmp.ne.s32.totalorder %s43, %s46
      %p55 = scmp.eq.s32.totalorder %s12, 1
      %p56 = por %p54, %p55
      %p57 = scmp.ne.s32.totalorder %s46, %s47
      %p58 = scmp.eq.s32.totalorder %s12, 0
      %p59 = por %p57, %p58
      %p60 = scmp.ne.s32.totalorder %s46, %s47
      %p61 = scmp.eq.s32.totalorder %s13, 1
      %p62 = por %p60, %p61
      %p64 = scmp.ne.s32.totalorder %s47, %s63
      %p65 = scmp.eq.s32.totalorder %s13, 0
      %p66 = por %p64, %p65
      %p67 = scmp.le.s32.totalorder 1, %s7
      %p68 = scmp.lt.s32.totalorder %s7, 3
      %p69 = pnand %p67, %p68
      %p70 = pneg %p69
      // Predicated region
      $region9: #{autoencoder_cnn_forward.7} parent=5 // pred_check
        _
      $region10: #{autoencoder_cnn_forward.7} parent=5 // pred_check_branch
        %72 = sbr.rel (%p69) target = $region12
      $region11: #{autoencoder_cnn_forward.7} parent=5 // pred_region
        %s73 = ssub.s32 %s7, 1
      $region12: #{autoencoder_cnn_forward.7} parent=5 // pred_fallthru
        _
      %p74 = scmp.lt.s32.totalorder %s7, 2
      // Predicated region
      $region13: #{autoencoder_cnn_forward.7} parent=5 // pred_check
        %p75 = pneg %p74
      $region14: #{autoencoder_cnn_forward.7} parent=5 // pred_check_branch
        %77 = sbr.rel (%p75) target = $region16
      $region15: #{autoencoder_cnn_forward.7} parent=5 // pred_region
        // Predicated region
        $region17: #{autoencoder_cnn_forward.7} parent=15 // pred_check
          %p78 = pneg %p27
        $region18: #{autoencoder_cnn_forward.7} parent=15 // pred_check_branch
          %80 = sbr.rel (%p78) target = $region20
        $region19: #{autoencoder_cnn_forward.7} parent=15 // pred_region
          %s81 = sand.u32 %s17, 1
          %s82 = sand.u32 %s17, 1
          %s83 = smul.addr %s82, 16
          %s84 = scalar_lea.vmem [#allocation2], %s83
          %s85 = smul.addr %s7, 4
          %s86 = scalar_lea.vmem %s0, %s85
          // Predicated region
          $region21: #{autoencoder_cnn_forward.7} parent=19 // pred_check
            _
          $region22: #{autoencoder_cnn_forward.7} parent=19 // pred_check_branch
            %88 = sbr.rel (0) target = $region24
          $region23: #{autoencoder_cnn_forward.7} parent=19 // pred_region
            // Predicated region
            $region25: #{autoencoder_cnn_forward.7} parent=23 // pred_check
              _
            $region26: #{autoencoder_cnn_forward.7} parent=23 // pred_check_branch
              %90 = sbr.rel target = $region28
            $region27: #{autoencoder_cnn_forward.7} parent=23 // pred_region
              // Predicated region
              $region40: #{autoencoder_cnn_forward.7} parent=27 // pred_check
                _
              $region41: #{autoencoder_cnn_forward.7} parent=27 // pred_check_branch
                %111 = sbr.rel (0) target = $region43
              $region42: #{autoencoder_cnn_forward.7} parent=27 // pred_region
                loop: start=0, step=1, limit=1
                $region44: #{autoencoder_cnn_forward.7} parent=42 // loop_pre_header
                  _
                $region45: #{autoencoder_cnn_forward.7} parent=42 // loop_header
                  %s113 = sphi 0, %s117
                  %p114 = scmp.ge.s32.totalorder %s113, 1
                  %s118 = sphi %s86, %s86
                  %s119 = sphi %s84, %s84
                $region46: #{autoencoder_cnn_forward.7} parent=42 // loop_header_branch
                  %116 = sbr.rel (%p114) target = $region50
                $region47: #{autoencoder_cnn_forward.7} parent=42 // loop_body
                  _
                $region48: #{autoencoder_cnn_forward.7} parent=42 // loop_footer
                  %s117 = sadd.s32 1, %s113
                $region49: #{autoencoder_cnn_forward.7} parent=42 // loop_footer_branch
                  %112 = sbr.rel target = $region45
                $region50: #{autoencoder_cnn_forward.7} parent=42 // loop_exit
                  _
                loop: start=0, step=1, limit=1
                $region51: #{autoencoder_cnn_forward.7} parent=42 // loop_pre_header
                  _
                $region52: #{autoencoder_cnn_forward.7} parent=42 // loop_header
                  %s122 = sphi 0, %s126
                  %p123 = scmp.ge.s32.totalorder %s122, 1
                  %s127 = sphi %s86, %s86
                  %s128 = sphi %s84, %s84
                $region53: #{autoencoder_cnn_forward.7} parent=42 // loop_header_branch
                  %125 = sbr.rel (%p123) target = $region57
                $region54: #{autoencoder_cnn_forward.7} parent=42 // loop_body
                  %v129 = vld [vmem:[%s127] sm:$0xf]
                  %130 = vst [vmem:[%s128] sm:$0xf] %v129
                  %v131 = vld [vmem:[%s127 + $0x8] sm:$0xf]
                  %132 = vst [vmem:[%s128 + $0x4] sm:$0xf] %v131
                  %v133 = vld [vmem:[%s127 + $0x10] sm:$0xf]
                  %134 = vst [vmem:[%s128 + $0x8] sm:$0xf] %v133
                  %v135 = vld [vmem:[%s127 + $0x18] sm:$0xf]
                  %136 = vst [vmem:[%s128 + $0xc] sm:$0xf] %v135
                $region55: #{autoencoder_cnn_forward.7} parent=42 // loop_footer
                  %s126 = sadd.s32 1, %s122
                $region56: #{autoencoder_cnn_forward.7} parent=42 // loop_footer_branch
                  %121 = sbr.rel target = $region52
                $region57: #{autoencoder_cnn_forward.7} parent=42 // loop_exit
                  _
              $region43: #{autoencoder_cnn_forward.7} parent=27 // pred_fallthru
                _
            $region28: #{autoencoder_cnn_forward.7} parent=23 // pred_fallthru
              _
            // Predicated region
            $region29: #{autoencoder_cnn_forward.7} parent=23 // pred_check
              _
            $region30: #{autoencoder_cnn_forward.7} parent=23 // pred_check_branch
              %92 = sbr.rel (0) target = $region32
            $region31: #{autoencoder_cnn_forward.7} parent=23 // pred_region
              loop: start=0, step=1, limit=1
              $region33: #{autoencoder_cnn_forward.7} parent=31 // loop_pre_header
                _
              $region34: #{autoencoder_cnn_forward.7} parent=31 // loop_header
                %s95 = sphi 0, %s99
                %p96 = scmp.ge.s32.totalorder %s95, 1
                %s100 = sphi %s86, %s86
                %s101 = sphi %s84, %s84
              $region35: #{autoencoder_cnn_forward.7} parent=31 // loop_header_branch
                %98 = sbr.rel (%p96) target = $region39
              $region36: #{autoencoder_cnn_forward.7} parent=31 // loop_body
                %v102 = vld [vmem:[%s100] sm:$0xf]
                %103 = vst [vmem:[%s101] sm:$0xf] %v102
                %v104 = vld [vmem:[%s100 + $0x8] sm:$0xf]
                %105 = vst [vmem:[%s101 + $0x4] sm:$0xf] %v104
                %v106 = vld [vmem:[%s100 + $0x10] sm:$0xf]
                %107 = vst [vmem:[%s101 + $0x8] sm:$0xf] %v106
                %v108 = vld [vmem:[%s100 + $0x18] sm:$0xf]
                %109 = vst [vmem:[%s101 + $0xc] sm:$0xf] %v108
              $region37: #{autoencoder_cnn_forward.7} parent=31 // loop_footer
                %s99 = sadd.s32 1, %s95
              $region38: #{autoencoder_cnn_forward.7} parent=31 // loop_footer_branch
                %94 = sbr.rel target = $region34
              $region39: #{autoencoder_cnn_forward.7} parent=31 // loop_exit
                _
            $region32: #{autoencoder_cnn_forward.7} parent=23 // pred_fallthru
              _
          $region24: #{autoencoder_cnn_forward.7} parent=19 // pred_fallthru
            _
          %137 = vnop
        $region20: #{autoencoder_cnn_forward.7} parent=15 // pred_fallthru
          _
      $region16: #{autoencoder_cnn_forward.7} parent=5 // pred_fallthru
        _
      %p138 = scmp.le.s32.totalorder 1, %s7
      %p139 = scmp.lt.s32.totalorder %s7, 3
      %p140 = pnand %p138, %p139
      %p141 = pneg %p140
      // Predicated region
      $region58: #{autoencoder_cnn_forward.7} parent=5 // pred_check
        _
      $region59: #{autoencoder_cnn_forward.7} parent=5 // pred_check_branch
        %143 = sbr.rel (%p140) target = $region61
      $region60: #{autoencoder_cnn_forward.7} parent=5 // pred_region
        %s144 = ssub.s32 %s7, 1
        %s145 = sand.u32 %s20, 1
        %s146 = sand.u32 %s20, 1
        %s147 = smul.addr %s146, 16
        %s148 = scalar_lea.vmem [#allocation2], %s147
        // Predicated region
        $region62: #{autoencoder_cnn_forward.7} parent=60 // pred_check
          %p149 = pneg %p33
        $region63: #{autoencoder_cnn_forward.7} parent=60 // pred_check_branch
          %151 = sbr.rel (%p149) target = $region65
        $region64: #{autoencoder_cnn_forward.7} parent=60 // pred_region
          _
        $region65: #{autoencoder_cnn_forward.7} parent=60 // pred_fallthru
          _
        %s152 = sand.u32 %s20, 1
        %s153 = sand.u32 %s20, 1
        %s154 = smul.addr %s153, 16
        %s155 = scalar_lea.vmem [#allocation2], %s154
        %p156 = pneg %p33
        %p157 = pneg %p30
        %p158 = pneg %p59
        %p159 = pneg %p56
        %p160 = scmp.lt.s32.totalorder %s12, 1
        %s161 = scalar_select %p160, %s12, 1
        %s162 = smul.addr %s161, 4
        %s163 = scalar_lea.vmem %s1, %s162
        %p164 = scmp.lt.s32.totalorder %s12, 1
        %s165 = scalar_select %p164, %s12, 1
        %s166 = smul.addr %s165, 4
        %s167 = scalar_lea.vmem %s1, %s166
        %v168 = vld [vmem:[%s148] sm:$0xf]
        %v169 = vld [vmem:[%s148 + $0x4] sm:$0xf]
        %v170 = vld [vmem:[%s148 + $0x8] sm:$0xf]
        %v171 = vld [vmem:[%s148 + $0xc] sm:$0xf]
        %v172 = vmax.bf16 %v168, %v169
        %v173 = vmax.bf16 %v170, %v171
        %v174 = vmax.bf16 %v172, %v173
        %175 = vst [vmem:[%s167] sm:$0xf] %v174
        %p176 = scmp.lt.s32.totalorder %s12, 1
        %s177 = scalar_select %p176, %s12, 1
        %s178 = smul.addr %s177, 4
        %s179 = scalar_lea.vmem %s1, %s178
        // Predicated region
        $region66: #{autoencoder_cnn_forward.7} parent=60 // pred_check
          %p180 = pneg %p56
        $region67: #{autoencoder_cnn_forward.7} parent=60 // pred_check_branch
          %182 = sbr.rel (%p180) target = $region69
        $region68: #{autoencoder_cnn_forward.7} parent=60 // pred_region
          _
        $region69: #{autoencoder_cnn_forward.7} parent=60 // pred_fallthru
          _
      $region61: #{autoencoder_cnn_forward.7} parent=5 // pred_fallthru
        _
      %p183 = scmp.le.s32.totalorder 2, %s7
      // Predicated region
      $region70: #{autoencoder_cnn_forward.7} parent=5 // pred_check
        %p184 = pneg %p183
      $region71: #{autoencoder_cnn_forward.7} parent=5 // pred_check_branch
        %186 = sbr.rel (%p184) target = $region73
      $region72: #{autoencoder_cnn_forward.7} parent=5 // pred_region
        %s187 = ssub.s32 %s7, 2
        // Predicated region
        $region74: #{autoencoder_cnn_forward.7} parent=72 // pred_check
          %p188 = pneg %p62
        $region75: #{autoencoder_cnn_forward.7} parent=72 // pred_check_branch
          %190 = sbr.rel (%p188) target = $region77
        $region76: #{autoencoder_cnn_forward.7} parent=72 // pred_region
          %p191 = scmp.lt.s32.totalorder %s13, 1
          %s192 = scalar_select %p191, %s13, 1
          %s193 = smul.addr %s192, 4
          %s194 = scalar_lea.vmem %s1, %s193
        $region77: #{autoencoder_cnn_forward.7} parent=72 // pred_fallthru
          _
      $region73: #{autoencoder_cnn_forward.7} parent=5 // pred_fallthru
        _
    $region6: #{autoencoder_cnn_forward.7} parent=1 // loop_footer
      %s11 = sadd.s32 1, %s7
    $region7: #{autoencoder_cnn_forward.7} parent=1 // loop_footer_branch
      %6 = sbr.rel target = $region3
    $region8: #{autoencoder_cnn_forward.7} parent=1 // loop_exit
      _

// kernel: autoencoder_cnn_forward.9
$region0: #{autoencoder_cnn_forward.9}
  #allocation0 [shape = 'u32[]', space=smem, size = 0x4, offset = 0x4, fixed_abs, tag = 'smem constant byte address 0x4 - core index']
  #allocation1 [shape = 'u32[144,128]{1,0:T(1,128)}', space=vmem, size = 0x12000, scoped, tag = 'internal scratch']
  %s0 = inlined_call_operand.vmem [shape: bf16[4,8,128], index: 0, kind: input, shape index: {}]
  %s1 = inlined_call_operand.vmem [shape: bf16[4,8,128], index: 1, kind: output, shape index: {}]
  %s2 = sld [smem:[#allocation0]]
  $region14: #{autoencoder_cnn_forward.9} parent=0
    _
  %s4 = ssub.s32 1, %s2
  %s5 = scalar_select 0, %s4, %s2
  // Predicated region
  $region2: #{autoencoder_cnn_forward.9} parent=0 // pred_check
    _
  $region3: #{autoencoder_cnn_forward.9} parent=0 // pred_check_branch
    %7 = sbr.rel (0) target = $region5
  $region4: #{autoencoder_cnn_forward.9} parent=0 // pred_region
    _
  $region5: #{autoencoder_cnn_forward.9} parent=0 // pred_fallthru
    _
  %v9 = vld [vmem:[%s0] sm:$0xf]
  %v10 = vld [vmem:[%s0 + $0x4] sm:$0xf]
  %v11 = vld [vmem:[%s0 + $0x8] sm:$0xf]
  %v12 = vld [vmem:[%s0 + $0xc] sm:$0xf]
  %v13 = vmax.bf16 %v9, %v10
  %v14 = vmax.bf16 %v11, %v12
  %v15 = vmax.bf16 %v13, %v14
  %vm16 = vcmp.eq.bf16.partialorder %v9, %v15
  %vm17 = vcmp.eq.bf16.partialorder %v10, %v15
  %vm18 = vcmp.eq.bf16.partialorder %v11, %v15
  %vm19 = vcmp.eq.bf16.partialorder %v12, %v15
  %vm20 = vmxor %vm16, 1
  %vm21 = vmand %vm17, %vm20
  %vm22 = vmor %vm16, %vm17
  %vm23 = vmxor %vm22, 1
  %vm24 = vmand %vm18, %vm23
  %vm25 = vmor %vm22, %vm18
  %vm26 = vmxor %vm25, 1
  %vm27 = vmand %vm19, %vm26
  %v28 = vsel %vm16, %v15, 0
  %29 = vst [vmem:[%s1] sm:$0xf] %v28
  %v30 = vsel %vm21, %v15, 0
  %s31 = scalar_lea.vmem %s1, 4
  %32 = vst [vmem:[%s31] sm:$0xf] %v30
  %v33 = vsel %vm24, %v15, 0
  %s34 = scalar_lea.vmem %s1, 8
  %35 = vst [vmem:[%s34] sm:$0xf] %v33
  %v36 = vsel %vm27, %v15, 0
  %s37 = scalar_lea.vmem %s1, 12
  %38 = vst [vmem:[%s37] sm:$0xf] %v36
  // Predicated region
  $region6: #{autoencoder_cnn_forward.9} parent=0 // pred_check
    _
  $region7: #{autoencoder_cnn_forward.9} parent=0 // pred_check_branch
    %40 = sbr.rel (0) target = $region9
  $region8: #{autoencoder_cnn_forward.9} parent=0 // pred_region
    _
  $region9: #{autoencoder_cnn_forward.9} parent=0 // pred_fallthru
    _
  // Predicated region
  $region10: #{autoencoder_cnn_forward.9} parent=0 // pred_check
    _
  $region11: #{autoencoder_cnn_forward.9} parent=0 // pred_check_branch
    %42 = sbr.rel (0) target = $region13
  $region12: #{autoencoder_cnn_forward.9} parent=0 // pred_region
    _
  $region13: #{autoencoder_cnn_forward.9} parent=0 // pred_fallthru
    _

// kernel: autoencoder_cnn_forward.8
$region0: #{autoencoder_cnn_forward.8}
  #allocation0 [shape = 'u32[]', space=smem, size = 0x4, offset = 0x4, fixed_abs, tag = 'smem constant byte address 0x4 - core index']
  #allocation1 [shape = 'u32[144,128]{1,0:T(1,128)}', space=vmem, size = 0x12000, scoped, tag = 'internal scratch']
  %s0 = inlined_call_operand.vmem [shape: bf16[32,400], index: 0, kind: input, shape index: {}]
  %s1 = inlined_call_operand.vmem [shape: bf16[400,128], index: 1, kind: input, shape index: {}]
  %s2 = inlined_call_operand.vmem [shape: f32[32,1], index: 2, kind: input, shape index: {}]
  %s3 = inlined_call_operand.vmem [shape: bf16[32,128], index: 3, kind: output, shape index: {}]
  %s4 = sld [smem:[#allocation0]]
  $region22: #{autoencoder_cnn_forward.8} parent=0
    _
  %s6 = ssub.s32 1, %s4
  %s7 = scalar_select 0, %s6, %s4
  // Predicated region
  $region2: #{autoencoder_cnn_forward.8} parent=0 // pred_check
    _
  $region3: #{autoencoder_cnn_forward.8} parent=0 // pred_check_branch
    %9 = sbr.rel (0) target = $region5
  $region4: #{autoencoder_cnn_forward.8} parent=0 // pred_region
    _
  $region5: #{autoencoder_cnn_forward.8} parent=0 // pred_fallthru
    _
  // Predicated region
  $region6: #{autoencoder_cnn_forward.8} parent=0 // pred_check
    _
  $region7: #{autoencoder_cnn_forward.8} parent=0 // pred_check_branch
    %11 = sbr.rel (0) target = $region9
  $region8: #{autoencoder_cnn_forward.8} parent=0 // pred_region
    _
  $region9: #{autoencoder_cnn_forward.8} parent=0 // pred_fallthru
    _
  // Predicated region
  $region10: #{autoencoder_cnn_forward.8} parent=0 // pred_check
    _
  $region11: #{autoencoder_cnn_forward.8} parent=0 // pred_check_branch
    %13 = sbr.rel (0) target = $region13
  $region12: #{autoencoder_cnn_forward.8} parent=0 // pred_region
    _
  $region13: #{autoencoder_cnn_forward.8} parent=0 // pred_fallthru
    _
  %v15 = vld [vmem:[%s0] sm:$0xff]
  %v16 = vld [vmem:[%s0 + $0x8] sm:$0xff]
  %v17 = vld [vmem:[%s0 + $0x10] sm:$0xff]
  %v18 = vld [vmem:[%s0 + $0x18] sm:$0xff]
  %v19 = vld [vmem:[%s0 + $0x20] sm:$0xff]
  %v20 = vld [vmem:[%s0 + $0x28] sm:$0xff]
  %v21 = vld [vmem:[%s0 + $0x30] sm:$0xff]
  %v22 = vld [vmem:[%s0 + $0x38] sm:$0xff]
  %v23 = vld [vmem:[%s1] sm:$0xf]
  %v24 = vld [vmem:[%s1 + $0x4] sm:$0xf]
  %v25 = vld [vmem:[%s1 + $0x8] sm:$0xf]
  %v26 = vld [vmem:[%s1 + $0xc] sm:$0xf]
  %v27 = vld [vmem:[%s1 + $0x10] sm:$0xf]
  %v28 = vld [vmem:[%s1 + $0x14] sm:$0xf]
  %v29 = vld [vmem:[%s1 + $0x18] sm:$0xf]
  %v30 = vld [vmem:[%s1 + $0x1c] sm:$0xf]
  %v31 = vld [vmem:[%s1 + $0x20] sm:$0xf]
  %v32 = vld [vmem:[%s1 + $0x24] sm:$0xf]
  %v33 = vld [vmem:[%s1 + $0x28] sm:$0xf]
  %v34 = vld [vmem:[%s1 + $0x2c] sm:$0xf]
  %v35 = vld [vmem:[%s1 + $0x30] sm:$0xf]
  %v36 = vld [vmem:[%s1 + $0x34] sm:$0xf]
  %v37 = vld [vmem:[%s1 + $0x38] sm:$0xf]
  %v38 = vld [vmem:[%s1 + $0x3c] sm:$0xf]
  %v39 = vld [vmem:[%s1 + $0x40] sm:$0xf]
  %v40 = vld [vmem:[%s1 + $0x44] sm:$0xf]
  %v41 = vld [vmem:[%s1 + $0x48] sm:$0xf]
  %v42 = vld [vmem:[%s1 + $0x4c] sm:$0xf]
  %v43 = vld [vmem:[%s1 + $0x50] sm:$0xf]
  %v44 = vld [vmem:[%s1 + $0x54] sm:$0xf]
  %v45 = vld [vmem:[%s1 + $0x58] sm:$0xf]
  %v46 = vld [vmem:[%s1 + $0x5c] sm:$0xf]
  %v47 = vld [vmem:[%s1 + $0x60] sm:$0xf]
  %v48 = vld [vmem:[%s1 + $0x64] sm:$0xf]
  %v49 = vld [vmem:[%s1 + $0x68] sm:$0xf]
  %v50 = vld [vmem:[%s1 + $0x6c] sm:$0xf]
  %v51 = vld [vmem:[%s1 + $0x70] sm:$0xf]
  %v52 = vld [vmem:[%s1 + $0x74] sm:$0xf]
  %v53 = vld [vmem:[%s1 + $0x78] sm:$0xf]
  %v54 = vld [vmem:[%s1 + $0x7c] sm:$0xf]
  %v55 = vld [vmem:[%s1 + $0x80] sm:$0xf]
  %v56 = vld [vmem:[%s1 + $0x84] sm:$0xf]
  %v57 = vld [vmem:[%s1 + $0x88] sm:$0xf]
  %v58 = vld [vmem:[%s1 + $0x8c] sm:$0xf]
  %v59 = vld [vmem:[%s1 + $0x90] sm:$0xf]
  %v60 = vld [vmem:[%s1 + $0x94] sm:$0xf]
  %v61 = vld [vmem:[%s1 + $0x98] sm:$0xf]
  %v62 = vld [vmem:[%s1 + $0x9c] sm:$0xf]
  %v63 = vld [vmem:[%s1 + $0xa0] sm:$0xf]
  %v64 = vld [vmem:[%s1 + $0xa4] sm:$0xf]
  %v65 = vld [vmem:[%s1 + $0xa8] sm:$0xf]
  %v66 = vld [vmem:[%s1 + $0xac] sm:$0xf]
  %v67 = vld [vmem:[%s1 + $0xb0] sm:$0xf]
  %v68 = vld [vmem:[%s1 + $0xb4] sm:$0xf]
  %v69 = vld [vmem:[%s1 + $0xb8] sm:$0xf]
  %v70 = vld [vmem:[%s1 + $0xbc] sm:$0xf]
  %v71 = vld [vmem:[%s1 + $0xc0] sm:$0xf]
  %v72 = vld [vmem:[%s1 + $0xc4] sm:$0xf]
  %v73 = vld [vmem:[%s2] sm:$0xff]
  %v74 = vld [vmem:[%s2 + $0x8] sm:$0xff]
  %v75 = vld [vmem:[%s2 + $0x10] sm:$0xff]
  %v76 = vld [vmem:[%s2 + $0x18] sm:$0xff]
  %78 = vset.pattern.permute.xlu0 0
  %79 = vperm.xlu0 %78, %v73
  %v80 = vpop.permute.xlu0 %79
  %83 = vset.pattern.permute.xlu0 0
  %84 = vperm.xlu0 %83, %v74
  %v85 = vpop.permute.xlu0 %84
  %88 = vset.pattern.permute.xlu0 0
  %89 = vperm.xlu0 %88, %v75
  %v90 = vpop.permute.xlu0 %89
  %93 = vset.pattern.permute.xlu0 0
  %94 = vperm.xlu0 %93, %v76
  %v95 = vpop.permute.xlu0 %94
  %v105 = vunpack.c.l.b16 %v15
  %v106 = vunpack.c.h.b16 %v15
  %v107 = vunpack.c.l.b16 %v16
  %v108 = vunpack.c.h.b16 %v16
  %v109 = vunpack.c.l.b16 %v17
  %v110 = vunpack.c.h.b16 %v17
  %v111 = vunpack.c.l.b16 %v18
  %v112 = vunpack.c.h.b16 %v18
  %v113 = vunpack.c.l.b16 %v19
  %v114 = vunpack.c.h.b16 %v19
  %v115 = vunpack.c.l.b16 %v20
  %v116 = vunpack.c.h.b16 %v20
  %v117 = vunpack.c.l.b16 %v21
  %v118 = vunpack.c.h.b16 %v21
  %v119 = vunpack.c.l.b16 %v22
  %v120 = vunpack.c.h.b16 %v22
  %v121 = vpack.c.b16 %v109, %v105
  %v122 = vpack.c.b16 %v110, %v106
  %v123 = vpack.c.b16 %v111, %v107
  %v124 = vpack.c.b16 %v112, %v108
  %v125 = vpack.c.b16 %v117, %v113
  %v126 = vpack.c.b16 %v118, %v114
  %v127 = vpack.c.b16 %v119, %v115
  %v128 = vpack.c.b16 %v120, %v116
  %v185 = vunpack.c.l.b16 %v23
  %v186 = vunpack.c.l.b16 %v24
  %v187 = vunpack.c.l.b16 %v25
  %v188 = vunpack.c.l.b16 %v26
  %v189 = vunpack.c.l.b16 %v27
  %v190 = vunpack.c.l.b16 %v28
  %v191 = vunpack.c.l.b16 %v29
  %v192 = vunpack.c.l.b16 %v30
  %v193 = vunpack.c.l.b16 %v31
  %v194 = vunpack.c.l.b16 %v32
  %v195 = vunpack.c.l.b16 %v33
  %v196 = vunpack.c.l.b16 %v34
  %v197 = vunpack.c.l.b16 %v35
  %v198 = vunpack.c.l.b16 %v36
  %v199 = vunpack.c.l.b16 %v37
  %v200 = vunpack.c.l.b16 %v38
  %v201 = vunpack.c.l.b16 %v39
  %v202 = vunpack.c.l.b16 %v40
  %v203 = vunpack.c.l.b16 %v41
  %v204 = vunpack.c.l.b16 %v42
  %v205 = vunpack.c.l.b16 %v43
  %v206 = vunpack.c.l.b16 %v44
  %v207 = vunpack.c.l.b16 %v45
  %v208 = vunpack.c.l.b16 %v46
  %v209 = vunpack.c.l.b16 %v47
  %v210 = vunpack.c.l.b16 %v48
  %v211 = vunpack.c.l.b16 %v49
  %v212 = vunpack.c.l.b16 %v50
  %v213 = vunpack.c.l.b16 %v51
  %v214 = vunpack.c.l.b16 %v52
  %v215 = vunpack.c.l.b16 %v53
  %v216 = vunpack.c.l.b16 %v54
  %v217 = vunpack.c.l.b16 %v55
  %v218 = vunpack.c.l.b16 %v56
  %v219 = vunpack.c.l.b16 %v57
  %v220 = vunpack.c.l.b16 %v58
  %v221 = vunpack.c.l.b16 %v59
  %v222 = vunpack.c.l.b16 %v60
  %v223 = vunpack.c.l.b16 %v61
  %v224 = vunpack.c.l.b16 %v62
  %v225 = vunpack.c.l.b16 %v63
  %v226 = vunpack.c.l.b16 %v64
  %v227 = vunpack.c.l.b16 %v65
  %v228 = vunpack.c.l.b16 %v66
  %v229 = vunpack.c.l.b16 %v67
  %v230 = vunpack.c.l.b16 %v68
  %v231 = vunpack.c.l.b16 %v69
  %v232 = vunpack.c.l.b16 %v70
  %v233 = vunpack.c.l.b16 %v71
  %v234 = vunpack.c.l.b16 %v72
  %v235 = vpack.c.b16 %v186, %v185
  %v236 = vpack.c.b16 %v188, %v187
  %v237 = vpack.c.b16 %v190, %v189
  %v238 = vpack.c.b16 %v192, %v191
  %v239 = vpack.c.b16 %v194, %v193
  %v240 = vpack.c.b16 %v196, %v195
  %v241 = vpack.c.b16 %v198, %v197
  %v242 = vpack.c.b16 %v200, %v199
  %v243 = vpack.c.b16 %v202, %v201
  %v244 = vpack.c.b16 %v204, %v203
  %v245 = vpack.c.b16 %v206, %v205
  %v246 = vpack.c.b16 %v208, %v207
  %v247 = vpack.c.b16 %v210, %v209
  %v248 = vpack.c.b16 %v212, %v211
  %v249 = vpack.c.b16 %v214, %v213
  %v250 = vpack.c.b16 %v216, %v215
  %v251 = vpack.c.b16 %v218, %v217
  %v252 = vpack.c.b16 %v220, %v219
  %v253 = vpack.c.b16 %v222, %v221
  %v254 = vpack.c.b16 %v224, %v223
  %v255 = vpack.c.b16 %v226, %v225
  %v256 = vpack.c.b16 %v228, %v227
  %v257 = vpack.c.b16 %v230, %v229
  %v258 = vpack.c.b16 %v232, %v231
  %v259 = vpack.c.b16 %v234, %v233
  %vm285 = vcmask 130048
  %v287 = vsel %vm285, %v124, 0
  %v290 = vsel %vm285, %v128, 0
  %292 = vmatprep.subr.bf16.mxu0 0
  %293 = vmatpush1.bf16.msra.mxu0 %v235
  %294 = vmatprep.subr.bf16.mxu0 0
  %295 = vmatpush1.bf16.msra.mxu0 %v236
  %296 = vmatprep.subr.bf16.mxu0 0
  %297 = vmatpush1.bf16.msra.mxu0 %v237
  %298 = vmatprep.subr.bf16.mxu0 0
  %299 = vmatpush1.bf16.msra.mxu0 %v238
  %300 = vmatprep.subr.bf16.mxu0 0
  %301 = vmatpush1.bf16.msra.mxu0 %v239
  %302 = vmatprep.subr.bf16.mxu0 0
  %303 = vmatpush1.bf16.msra.mxu0 %v240
  %304 = vmatprep.subr.bf16.mxu0 0
  %305 = vmatpush1.bf16.msra.mxu0 %v241
  %306 = vmatprep.subr.bf16.mxu0 0
  %307 = vmatpush1.bf16.msra.mxu0 %v242
  %308 = vmatprep.subr.bf16.mxu0 0
  %309 = vmatpush1.bf16.msra.mxu0 %v243
  %310 = vmatprep.subr.bf16.mxu0 0
  %311 = vmatpush1.bf16.msra.mxu0 %v244
  %312 = vmatprep.subr.bf16.mxu0 0
  %313 = vmatpush1.bf16.msra.mxu0 %v245
  %314 = vmatprep.subr.bf16.mxu0 0
  %315 = vmatpush1.bf16.msra.mxu0 %v246
  %316 = vmatprep.subr.bf16.mxu0 0
  %317 = vmatpush1.bf16.msra.mxu0 %v247
  %318 = vmatprep.subr.bf16.mxu0 0
  %319 = vmatpush1.bf16.msra.mxu0 %v248
  %320 = vmatprep.subr.bf16.mxu0 0
  %321 = vmatpush1.bf16.msra.mxu0 %v249
  %322 = vmatprep.subr.bf16.mxu0 0
  %323 = vmatpush1.bf16.msra.mxu0 %v250
  %324 = vmatprep.mubr.bf16.mxu0 %v122
  %325 = vmatmul.mubr.bf16.gmra.mrb[0].mxu0 %v121
  %v326 = vpop.f32.mrb[0].mxu0
  %v327 = vadd.f32 %v80, %v326
  %v328 = vpop.f32.mrb[0].mxu0
  %v329 = vpop.f32.mrb[0].mxu0
  %v330 = vadd.f32 %v85, %v329
  %v331 = vpop.f32.mrb[0].mxu0
  %332 = vmatprep.mubr.bf16.mxu0 %v126
  %333 = vmatmul.mubr.bf16.gmra.mrb[0].mxu0 %v125
  %v334 = vpop.f32.mrb[0].mxu0
  %v335 = vadd.f32 %v90, %v334
  %v336 = vpop.f32.mrb[0].mxu0
  %v337 = vpop.f32.mrb[0].mxu0
  %v338 = vadd.f32 %v95, %v337
  %v339 = vpop.f32.mrb[0].mxu0
  %340 = vdwg.mxu0
  %341 = vmatprep.subr.bf16.mxu0 0
  %342 = vmatpush1.bf16.msra.mxu0 %v251
  %343 = vmatprep.subr.bf16.mxu0 0
  %344 = vmatpush1.bf16.msra.mxu0 %v252
  %345 = vmatprep.subr.bf16.mxu0 0
  %346 = vmatpush1.bf16.msra.mxu0 %v253
  %347 = vmatprep.subr.bf16.mxu0 0
  %348 = vmatpush1.bf16.msra.mxu0 %v254
  %349 = vmatprep.subr.bf16.mxu0 0
  %350 = vmatpush1.bf16.msra.mxu0 %v255
  %351 = vmatprep.subr.bf16.mxu0 0
  %352 = vmatpush1.bf16.msra.mxu0 %v256
  %353 = vmatprep.subr.bf16.mxu0 0
  %354 = vmatpush1.bf16.msra.mxu0 %v257
  %355 = vmatprep.subr.bf16.mxu0 0
  %356 = vmatpush1.bf16.msra.mxu0 %v258
  %357 = vmatprep.subr.bf16.mxu0 0
  %358 = vmatpush1.bf16.msra.mxu0 %v259
  %359 = vmatprep.subr.bf16.mxu0 0
  %360 = vmatpush1.bf16.msra.mxu0 0
  %361 = vmatprep.subr.bf16.mxu0 0
  %362 = vmatpush1.bf16.msra.mxu0 0
  %363 = vmatprep.subr.bf16.mxu0 0
  %364 = vmatpush1.bf16.msra.mxu0 0
  %365 = vmatprep.subr.bf16.mxu0 0
  %366 = vmatpush1.bf16.msra.mxu0 0
  %367 = vmatprep.subr.bf16.mxu0 0
  %368 = vmatpush1.bf16.msra.mxu0 0
  %369 = vmatprep.subr.bf16.mxu0 0
  %370 = vmatpush1.bf16.msra.mxu0 0
  %371 = vmatprep.subr.bf16.mxu0 0
  %372 = vmatpush1.bf16.msra.mxu0 0
  %373 = vmatprep.mubr.bf16.mxu0 %v287
  %374 = vmatmul.mubr.bf16.gmra.mrb[0].mxu0 %v123
  %v375 = vpop.f32.mrb[0].mxu0
  %v376 = vadd.f32 %v327, %v375
  %v377 = vpop.f32.mrb[0].mxu0
  %v378 = vpop.f32.mrb[0].mxu0
  %v379 = vadd.f32 %v330, %v378
  %v380 = vpop.f32.mrb[0].mxu0
  %381 = vmatprep.mubr.bf16.mxu0 %v290
  %382 = vmatmul.mubr.bf16.gmra.mrb[0].mxu0 %v127
  %v383 = vpop.f32.mrb[0].mxu0
  %v384 = vadd.f32 %v335, %v383
  %v385 = vpop.f32.mrb[0].mxu0
  %v386 = vpop.f32.mrb[0].mxu0
  %v387 = vadd.f32 %v338, %v386
  %v388 = vpop.f32.mrb[0].mxu0
  %389 = vdwg.mxu0
  %v390 = vmax.f32 %v376, 0.0
  %v391 = vmax.f32 %v379, 0.0
  %v392 = vmax.f32 %v384, 0.0
  %v393 = vmax.f32 %v387, 0.0
  %v394 = vpack.c.bf16 %v391, %v390
  %v395 = vpack.c.bf16 %v393, %v392
  %v398 = vunpack.c.l.b16 %v394
  %v399 = vunpack.c.h.b16 %v394
  %v400 = vunpack.c.l.b16 %v395
  %v401 = vunpack.c.h.b16 %v395
  %v402 = vpack.c.b16 %v398, %v398
  %v403 = vpack.c.b16 %v399, %v399
  %v404 = vpack.c.b16 %v400, %v400
  %v405 = vpack.c.b16 %v401, %v401
  %410 = vst [vmem:[%s3] sm:$0xf] %v402
  %411 = vst [vmem:[%s3 + $0x4] sm:$0xf] %v403
  %412 = vst [vmem:[%s3 + $0x8] sm:$0xf] %v404
  %413 = vst [vmem:[%s3 + $0xc] sm:$0xf] %v405
  // Predicated region
  $region14: #{autoencoder_cnn_forward.8} parent=0 // pred_check
    _
  $region15: #{autoencoder_cnn_forward.8} parent=0 // pred_check_branch
    %415 = sbr.rel (0) target = $region17
  $region16: #{autoencoder_cnn_forward.8} parent=0 // pred_region
    _
  $region17: #{autoencoder_cnn_forward.8} parent=0 // pred_fallthru
    _
  // Predicated region
  $region18: #{autoencoder_cnn_forward.8} parent=0 // pred_check
    _
  $region19: #{autoencoder_cnn_forward.8} parent=0 // pred_check_branch
    %417 = sbr.rel (0) target = $region21
  $region20: #{autoencoder_cnn_forward.8} parent=0 // pred_region
    _
  $region21: #{autoencoder_cnn_forward.8} parent=0 // pred_fallthru
    _

// kernel: autoencoder_cnn_forward.10
$region0: #{autoencoder_cnn_forward.10}
  #allocation0 [shape = 'u32[]', space=smem, size = 0x4, offset = 0x4, fixed_abs, tag = 'smem constant byte address 0x4 - core index']
  #allocation1 [shape = 'u32[144,128]{1,0:T(1,128)}', space=vmem, size = 0x12000, scoped, tag = 'internal scratch']
  %s0 = inlined_call_operand.vmem [shape: bf16[16,800], index: 0, kind: input, shape index: {}]
  %s1 = inlined_call_operand.vmem [shape: bf16[800,256], index: 1, kind: input, shape index: {}]
  %s2 = inlined_call_operand.vmem [shape: f32[16,1], index: 2, kind: input, shape index: {}]
  %s3 = inlined_call_operand.vmem [shape: bf16[16,256], index: 3, kind: output, shape index: {}]
  %s4 = sld [smem:[#allocation0]]
  $region22: #{autoencoder_cnn_forward.10} parent=0
    _
  %s6 = ssub.s32 1, %s4
  %s7 = scalar_select 0, %s6, %s4
  // Predicated region
  $region2: #{autoencoder_cnn_forward.10} parent=0 // pred_check
    _
  $region3: #{autoencoder_cnn_forward.10} parent=0 // pred_check_branch
    %9 = sbr.rel (0) target = $region5
  $region4: #{autoencoder_cnn_forward.10} parent=0 // pred_region
    _
  $region5: #{autoencoder_cnn_forward.10} parent=0 // pred_fallthru
    _
  // Predicated region
  $region6: #{autoencoder_cnn_forward.10} parent=0 // pred_check
    _
  $region7: #{autoencoder_cnn_forward.10} parent=0 // pred_check_branch
    %11 = sbr.rel (0) target = $region9
  $region8: #{autoencoder_cnn_forward.10} parent=0 // pred_region
    _
  $region9: #{autoencoder_cnn_forward.10} parent=0 // pred_fallthru
    _
  // Predicated region
  $region10: #{autoencoder_cnn_forward.10} parent=0 // pred_check
    _
  $region11: #{autoencoder_cnn_forward.10} parent=0 // pred_check_branch
    %13 = sbr.rel (0) target = $region13
  $region12: #{autoencoder_cnn_forward.10} parent=0 // pred_region
    _
  $region13: #{autoencoder_cnn_forward.10} parent=0 // pred_fallthru
    _
  %v15 = vld [vmem:[%s0] sm:$0xff]
  %v16 = vld [vmem:[%s0 + $0x8] sm:$0xff]
  %v17 = vld [vmem:[%s0 + $0x10] sm:$0xff]
  %v18 = vld [vmem:[%s0 + $0x18] sm:$0xf]
  %v19 = vld [vmem:[%s0 + $0x1c] sm:$0xff]
  %v20 = vld [vmem:[%s0 + $0x24] sm:$0xff]
  %v21 = vld [vmem:[%s0 + $0x2c] sm:$0xff]
  %v22 = vld [vmem:[%s0 + $0x34] sm:$0xf]
  %v23 = vld [vmem:[%s1] sm:$0xff]
  %v24 = vld [vmem:[%s1 + $0x8] sm:$0xff]
  %v25 = vld [vmem:[%s1 + $0x10] sm:$0xff]
  %v26 = vld [vmem:[%s1 + $0x18] sm:$0xff]
  %v27 = vld [vmem:[%s1 + $0x20] sm:$0xff]
  %v28 = vld [vmem:[%s1 + $0x28] sm:$0xff]
  %v29 = vld [vmem:[%s1 + $0x30] sm:$0xff]
  %v30 = vld [vmem:[%s1 + $0x38] sm:$0xff]
  %v31 = vld [vmem:[%s1 + $0x40] sm:$0xff]
  %v32 = vld [vmem:[%s1 + $0x48] sm:$0xff]
  %v33 = vld [vmem:[%s1 + $0x50] sm:$0xff]
  %v34 = vld [vmem:[%s1 + $0x58] sm:$0xff]
  %v35 = vld [vmem:[%s1 + $0x60] sm:$0xff]
  %v36 = vld [vmem:[%s1 + $0x68] sm:$0xff]
  %v37 = vld [vmem:[%s1 + $0x70] sm:$0xff]
  %v38 = vld [vmem:[%s1 + $0x78] sm:$0xff]
  %v39 = vld [vmem:[%s1 + $0x80] sm:$0xff]
  %v40 = vld [vmem:[%s1 + $0x88] sm:$0xff]
  %v41 = vld [vmem:[%s1 + $0x90] sm:$0xff]
  %v42 = vld [vmem:[%s1 + $0x98] sm:$0xff]
  %v43 = vld [vmem:[%s1 + $0xa0] sm:$0xff]
  %v44 = vld [vmem:[%s1 + $0xa8] sm:$0xff]
  %v45 = vld [vmem:[%s1 + $0xb0] sm:$0xff]
  %v46 = vld [vmem:[%s1 + $0xb8] sm:$0xff]
  %v47 = vld [vmem:[%s1 + $0xc0] sm:$0xff]
  %v48 = vld [vmem:[%s1 + $0xc8] sm:$0xff]
  %v49 = vld [vmem:[%s1 + $0xd0] sm:$0xff]
  %v50 = vld [vmem:[%s1 + $0xd8] sm:$0xff]
  %v51 = vld [vmem:[%s1 + $0xe0] sm:$0xff]
  %v52 = vld [vmem:[%s1 + $0xe8] sm:$0xff]
  %v53 = vld [vmem:[%s1 + $0xf0] sm:$0xff]
  %v54 = vld [vmem:[%s1 + $0xf8] sm:$0xff]
  %v55 = vld [vmem:[%s1 + $0x100] sm:$0xff]
  %v56 = vld [vmem:[%s1 + $0x108] sm:$0xff]
  %v57 = vld [vmem:[%s1 + $0x110] sm:$0xff]
  %v58 = vld [vmem:[%s1 + $0x118] sm:$0xff]
  %v59 = vld [vmem:[%s1 + $0x120] sm:$0xff]
  %v60 = vld [vmem:[%s1 + $0x128] sm:$0xff]
  %v61 = vld [vmem:[%s1 + $0x130] sm:$0xff]
  %v62 = vld [vmem:[%s1 + $0x138] sm:$0xff]
  %v63 = vld [vmem:[%s1 + $0x140] sm:$0xff]
  %v64 = vld [vmem:[%s1 + $0x148] sm:$0xff]
  %v65 = vld [vmem:[%s1 + $0x150] sm:$0xff]
  %v66 = vld [vmem:[%s1 + $0x158] sm:$0xff]
  %v67 = vld [vmem:[%s1 + $0x160] sm:$0xff]
  %v68 = vld [vmem:[%s1 + $0x168] sm:$0xff]
  %v69 = vld [vmem:[%s1 + $0x170] sm:$0xff]
  %v70 = vld [vmem:[%s1 + $0x178] sm:$0xff]
  %v71 = vld [vmem:[%s1 + $0x180] sm:$0xff]
  %v72 = vld [vmem:[%s1 + $0x188] sm:$0xff]
  %v73 = vld [vmem:[%s1 + $0x190] sm:$0xff]
  %v74 = vld [vmem:[%s1 + $0x198] sm:$0xff]
  %v75 = vld [vmem:[%s1 + $0x1a0] sm:$0xff]
  %v76 = vld [vmem:[%s1 + $0x1a8] sm:$0xff]
  %v77 = vld [vmem:[%s1 + $0x1b0] sm:$0xff]
  %v78 = vld [vmem:[%s1 + $0x1b8] sm:$0xff]
  %v79 = vld [vmem:[%s1 + $0x1c0] sm:$0xff]
  %v80 = vld [vmem:[%s1 + $0x1c8] sm:$0xff]
  %v81 = vld [vmem:[%s1 + $0x1d0] sm:$0xff]
  %v82 = vld [vmem:[%s1 + $0x1d8] sm:$0xff]
  %v83 = vld [vmem:[%s1 + $0x1e0] sm:$0xff]
  %v84 = vld [vmem:[%s1 + $0x1e8] sm:$0xff]
  %v85 = vld [vmem:[%s1 + $0x1f0] sm:$0xff]
  %v86 = vld [vmem:[%s1 + $0x1f8] sm:$0xff]
  %v87 = vld [vmem:[%s1 + $0x200] sm:$0xff]
  %v88 = vld [vmem:[%s1 + $0x208] sm:$0xff]
  %v89 = vld [vmem:[%s1 + $0x210] sm:$0xff]
  %v90 = vld [vmem:[%s1 + $0x218] sm:$0xff]
  %v91 = vld [vmem:[%s1 + $0x220] sm:$0xff]
  %v92 = vld [vmem:[%s1 + $0x228] sm:$0xff]
  %v93 = vld [vmem:[%s1 + $0x230] sm:$0xff]
  %v94 = vld [vmem:[%s1 + $0x238] sm:$0xff]
  %v95 = vld [vmem:[%s1 + $0x240] sm:$0xff]
  %v96 = vld [vmem:[%s1 + $0x248] sm:$0xff]
  %v97 = vld [vmem:[%s1 + $0x250] sm:$0xff]
  %v98 = vld [vmem:[%s1 + $0x258] sm:$0xff]
  %v99 = vld [vmem:[%s1 + $0x260] sm:$0xff]
  %v100 = vld [vmem:[%s1 + $0x268] sm:$0xff]
  %v101 = vld [vmem:[%s1 + $0x270] sm:$0xff]
  %v102 = vld [vmem:[%s1 + $0x278] sm:$0xff]
  %v103 = vld [vmem:[%s1 + $0x280] sm:$0xff]
  %v104 = vld [vmem:[%s1 + $0x288] sm:$0xff]
  %v105 = vld [vmem:[%s1 + $0x290] sm:$0xff]
  %v106 = vld [vmem:[%s1 + $0x298] sm:$0xff]
  %v107 = vld [vmem:[%s1 + $0x2a0] sm:$0xff]
  %v108 = vld [vmem:[%s1 + $0x2a8] sm:$0xff]
  %v109 = vld [vmem:[%s1 + $0x2b0] sm:$0xff]
  %v110 = vld [vmem:[%s1 + $0x2b8] sm:$0xff]
  %v111 = vld [vmem:[%s1 + $0x2c0] sm:$0xff]
  %v112 = vld [vmem:[%s1 + $0x2c8] sm:$0xff]
  %v113 = vld [vmem:[%s1 + $0x2d0] sm:$0xff]
  %v114 = vld [vmem:[%s1 + $0x2d8] sm:$0xff]
  %v115 = vld [vmem:[%s1 + $0x2e0] sm:$0xff]
  %v116 = vld [vmem:[%s1 + $0x2e8] sm:$0xff]
  %v117 = vld [vmem:[%s1 + $0x2f0] sm:$0xff]
  %v118 = vld [vmem:[%s1 + $0x2f8] sm:$0xff]
  %v119 = vld [vmem:[%s1 + $0x300] sm:$0xff]
  %v120 = vld [vmem:[%s1 + $0x308] sm:$0xff]
  %v121 = vld [vmem:[%s1 + $0x310] sm:$0xff]
  %v122 = vld [vmem:[%s1 + $0x318] sm:$0xff]
  %v123 = vld [vmem:[%s2] sm:$0xff]
  %v124 = vld [vmem:[%s2 + $0x8] sm:$0xff]
  %126 = vset.pattern.permute.xlu0 0
  %127 = vperm.xlu0 %126, %v123
  %v128 = vpop.permute.xlu0 %127
  %131 = vset.pattern.permute.xlu0 0
  %132 = vperm.xlu0 %131, %v124
  %v133 = vpop.permute.xlu0 %132
  %v143 = vunpack.c.l.b16 %v15
  %v144 = vunpack.c.h.b16 %v15
  %v145 = vunpack.c.l.b16 %v16
  %v146 = vunpack.c.h.b16 %v16
  %v147 = vunpack.c.l.b16 %v17
  %v148 = vunpack.c.h.b16 %v17
  %v149 = vunpack.c.l.b16 %v18
  %v150 = vunpack.c.l.b16 %v19
  %v151 = vunpack.c.h.b16 %v19
  %v152 = vunpack.c.l.b16 %v20
  %v153 = vunpack.c.h.b16 %v20
  %v154 = vunpack.c.l.b16 %v21
  %v155 = vunpack.c.h.b16 %v21
  %v156 = vunpack.c.l.b16 %v22
  %v157 = vpack.c.b16 %v150, %v143
  %v158 = vpack.c.b16 %v151, %v144
  %v159 = vpack.c.b16 %v152, %v145
  %v160 = vpack.c.b16 %v153, %v146
  %v161 = vpack.c.b16 %v154, %v147
  %v162 = vpack.c.b16 %v155, %v148
  %v163 = vpack.c.b16 %v156, %v149
  %v270 = vunpack.c.l.b16 %v23
  %v271 = vunpack.c.h.b16 %v23
  %v272 = vunpack.c.l.b16 %v24
  %v273 = vunpack.c.h.b16 %v24
  %v274 = vunpack.c.l.b16 %v25
  %v275 = vunpack.c.h.b16 %v25
  %v276 = vunpack.c.l.b16 %v26
  %v277 = vunpack.c.h.b16 %v26
  %v278 = vunpack.c.l.b16 %v27
  %v279 = vunpack.c.h.b16 %v27
  %v280 = vunpack.c.l.b16 %v28
  %v281 = vunpack.c.h.b16 %v28
  %v282 = vunpack.c.l.b16 %v29
  %v283 = vunpack.c.h.b16 %v29
  %v284 = vunpack.c.l.b16 %v30
  %v285 = vunpack.c.h.b16 %v30
  %v286 = vunpack.c.l.b16 %v31
  %v287 = vunpack.c.h.b16 %v31
  %v288 = vunpack.c.l.b16 %v32
  %v289 = vunpack.c.h.b16 %v32
  %v290 = vunpack.c.l.b16 %v33
  %v291 = vunpack.c.h.b16 %v33
  %v292 = vunpack.c.l.b16 %v34
  %v293 = vunpack.c.h.b16 %v34
  %v294 = vunpack.c.l.b16 %v35
  %v295 = vunpack.c.h.b16 %v35
  %v296 = vunpack.c.l.b16 %v36
  %v297 = vunpack.c.h.b16 %v36
  %v298 = vunpack.c.l.b16 %v37
  %v299 = vunpack.c.h.b16 %v37
  %v300 = vunpack.c.l.b16 %v38
  %v301 = vunpack.c.h.b16 %v38
  %v302 = vunpack.c.l.b16 %v39
  %v303 = vunpack.c.h.b16 %v39
  %v304 = vunpack.c.l.b16 %v40
  %v305 = vunpack.c.h.b16 %v40
  %v306 = vunpack.c.l.b16 %v41
  %v307 = vunpack.c.h.b16 %v41
  %v308 = vunpack.c.l.b16 %v42
  %v309 = vunpack.c.h.b16 %v42
  %v310 = vunpack.c.l.b16 %v43
  %v311 = vunpack.c.h.b16 %v43
  %v312 = vunpack.c.l.b16 %v44
  %v313 = vunpack.c.h.b16 %v44
  %v314 = vunpack.c.l.b16 %v45
  %v315 = vunpack.c.h.b16 %v45
  %v316 = vunpack.c.l.b16 %v46
  %v317 = vunpack.c.h.b16 %v46
  %v318 = vunpack.c.l.b16 %v47
  %v319 = vunpack.c.h.b16 %v47
  %v320 = vunpack.c.l.b16 %v48
  %v321 = vunpack.c.h.b16 %v48
  %v322 = vunpack.c.l.b16 %v49
  %v323 = vunpack.c.h.b16 %v49
  %v324 = vunpack.c.l.b16 %v50
  %v325 = vunpack.c.h.b16 %v50
  %v326 = vunpack.c.l.b16 %v51
  %v327 = vunpack.c.h.b16 %v51
  %v328 = vunpack.c.l.b16 %v52
  %v329 = vunpack.c.h.b16 %v52
  %v330 = vunpack.c.l.b16 %v53
  %v331 = vunpack.c.h.b16 %v53
  %v332 = vunpack.c.l.b16 %v54
  %v333 = vunpack.c.h.b16 %v54
  %v334 = vunpack.c.l.b16 %v55
  %v335 = vunpack.c.h.b16 %v55
  %v336 = vunpack.c.l.b16 %v56
  %v337 = vunpack.c.h.b16 %v56
  %v338 = vunpack.c.l.b16 %v57
  %v339 = vunpack.c.h.b16 %v57
  %v340 = vunpack.c.l.b16 %v58
  %v341 = vunpack.c.h.b16 %v58
  %v342 = vunpack.c.l.b16 %v59
  %v343 = vunpack.c.h.b16 %v59
  %v344 = vunpack.c.l.b16 %v60
  %v345 = vunpack.c.h.b16 %v60
  %v346 = vunpack.c.l.b16 %v61
  %v347 = vunpack.c.h.b16 %v61
  %v348 = vunpack.c.l.b16 %v62
  %v349 = vunpack.c.h.b16 %v62
  %v350 = vunpack.c.l.b16 %v63
  %v351 = vunpack.c.h.b16 %v63
  %v352 = vunpack.c.l.b16 %v64
  %v353 = vunpack.c.h.b16 %v64
  %v354 = vunpack.c.l.b16 %v65
  %v355 = vunpack.c.h.b16 %v65
  %v356 = vunpack.c.l.b16 %v66
  %v357 = vunpack.c.h.b16 %v66
  %v358 = vunpack.c.l.b16 %v67
  %v359 = vunpack.c.h.b16 %v67
  %v360 = vunpack.c.l.b16 %v68
  %v361 = vunpack.c.h.b16 %v68
  %v362 = vunpack.c.l.b16 %v69
  %v363 = vunpack.c.h.b16 %v69
  %v364 = vunpack.c.l.b16 %v70
  %v365 = vunpack.c.h.b16 %v70
  %v366 = vunpack.c.l.b16 %v71
  %v367 = vunpack.c.h.b16 %v71
  %v368 = vunpack.c.l.b16 %v72
  %v369 = vunpack.c.h.b16 %v72
  %v370 = vunpack.c.l.b16 %v73
  %v371 = vunpack.c.h.b16 %v73
  %v372 = vunpack.c.l.b16 %v74
  %v373 = vunpack.c.h.b16 %v74
  %v374 = vunpack.c.l.b16 %v75
  %v375 = vunpack.c.h.b16 %v75
  %v376 = vunpack.c.l.b16 %v76
  %v377 = vunpack.c.h.b16 %v76
  %v378 = vunpack.c.l.b16 %v77
  %v379 = vunpack.c.h.b16 %v77
  %v380 = vunpack.c.l.b16 %v78
  %v381 = vunpack.c.h.b16 %v78
  %v382 = vunpack.c.l.b16 %v79
  %v383 = vunpack.c.h.b16 %v79
  %v384 = vunpack.c.l.b16 %v80
  %v385 = vunpack.c.h.b16 %v80
  %v386 = vunpack.c.l.b16 %v81
  %v387 = vunpack.c.h.b16 %v81
  %v388 = vunpack.c.l.b16 %v82
  %v389 = vunpack.c.h.b16 %v82
  %v390 = vunpack.c.l.b16 %v83
  %v391 = vunpack.c.h.b16 %v83
  %v392 = vunpack.c.l.b16 %v84
  %v393 = vunpack.c.h.b16 %v84
  %v394 = vunpack.c.l.b16 %v85
  %v395 = vunpack.c.h.b16 %v85
  %v396 = vunpack.c.l.b16 %v86
  %v397 = vunpack.c.h.b16 %v86
  %v398 = vunpack.c.l.b16 %v87
  %v399 = vunpack.c.h.b16 %v87
  %v400 = vunpack.c.l.b16 %v88
  %v401 = vunpack.c.h.b16 %v88
  %v402 = vunpack.c.l.b16 %v89
  %v403 = vunpack.c.h.b16 %v89
  %v404 = vunpack.c.l.b16 %v90
  %v405 = vunpack.c.h.b16 %v90
  %v406 = vunpack.c.l.b16 %v91
  %v407 = vunpack.c.h.b16 %v91
  %v408 = vunpack.c.l.b16 %v92
  %v409 = vunpack.c.h.b16 %v92
  %v410 = vunpack.c.l.b16 %v93
  %v411 = vunpack.c.h.b16 %v93
  %v412 = vunpack.c.l.b16 %v94
  %v413 = vunpack.c.h.b16 %v94
  %v414 = vunpack.c.l.b16 %v95
  %v415 = vunpack.c.h.b16 %v95
  %v416 = vunpack.c.l.b16 %v96
  %v417 = vunpack.c.h.b16 %v96
  %v418 = vunpack.c.l.b16 %v97
  %v419 = vunpack.c.h.b16 %v97
  %v420 = vunpack.c.l.b16 %v98
  %v421 = vunpack.c.h.b16 %v98
  %v422 = vunpack.c.l.b16 %v99
  %v423 = vunpack.c.h.b16 %v99
  %v424 = vunpack.c.l.b16 %v100
  %v425 = vunpack.c.h.b16 %v100
  %v426 = vunpack.c.l.b16 %v101
  %v427 = vunpack.c.h.b16 %v101
  %v428 = vunpack.c.l.b16 %v102
  %v429 = vunpack.c.h.b16 %v102
  %v430 = vunpack.c.l.b16 %v103
  %v431 = vunpack.c.h.b16 %v103
  %v432 = vunpack.c.l.b16 %v104
  %v433 = vunpack.c.h.b16 %v104
  %v434 = vunpack.c.l.b16 %v105
  %v435 = vunpack.c.h.b16 %v105
  %v436 = vunpack.c.l.b16 %v106
  %v437 = vunpack.c.h.b16 %v106
  %v438 = vunpack.c.l.b16 %v107
  %v439 = vunpack.c.h.b16 %v107
  %v440 = vunpack.c.l.b16 %v108
  %v441 = vunpack.c.h.b16 %v108
  %v442 = vunpack.c.l.b16 %v109
  %v443 = vunpack.c.h.b16 %v109
  %v444 = vunpack.c.l.b16 %v110
  %v445 = vunpack.c.h.b16 %v110
  %v446 = vunpack.c.l.b16 %v111
  %v447 = vunpack.c.h.b16 %v111
  %v448 = vunpack.c.l.b16 %v112
  %v449 = vunpack.c.h.b16 %v112
  %v450 = vunpack.c.l.b16 %v113
  %v451 = vunpack.c.h.b16 %v113
  %v452 = vunpack.c.l.b16 %v114
  %v453 = vunpack.c.h.b16 %v114
  %v454 = vunpack.c.l.b16 %v115
  %v455 = vunpack.c.h.b16 %v115
  %v456 = vunpack.c.l.b16 %v116
  %v457 = vunpack.c.h.b16 %v116
  %v458 = vunpack.c.l.b16 %v117
  %v459 = vunpack.c.h.b16 %v117
  %v460 = vunpack.c.l.b16 %v118
  %v461 = vunpack.c.h.b16 %v118
  %v462 = vunpack.c.l.b16 %v119
  %v463 = vunpack.c.h.b16 %v119
  %v464 = vunpack.c.l.b16 %v120
  %v465 = vunpack.c.h.b16 %v120
  %v466 = vunpack.c.l.b16 %v121
  %v467 = vunpack.c.h.b16 %v121
  %v468 = vunpack.c.l.b16 %v122
  %v469 = vunpack.c.h.b16 %v122
  %v470 = vpack.c.b16 %v272, %v270
  %v471 = vpack.c.b16 %v273, %v271
  %v472 = vpack.c.b16 %v276, %v274
  %v473 = vpack.c.b16 %v277, %v275
  %v474 = vpack.c.b16 %v280, %v278
  %v475 = vpack.c.b16 %v281, %v279
  %v476 = vpack.c.b16 %v284, %v282
  %v477 = vpack.c.b16 %v285, %v283
  %v478 = vpack.c.b16 %v288, %v286
  %v479 = vpack.c.b16 %v289, %v287
  %v480 = vpack.c.b16 %v292, %v290
  %v481 = vpack.c.b16 %v293, %v291
  %v482 = vpack.c.b16 %v296, %v294
  %v483 = vpack.c.b16 %v297, %v295
  %v484 = vpack.c.b16 %v300, %v298
  %v485 = vpack.c.b16 %v301, %v299
  %v486 = vpack.c.b16 %v304, %v302
  %v487 = vpack.c.b16 %v305, %v303
  %v488 = vpack.c.b16 %v308, %v306
  %v489 = vpack.c.b16 %v309, %v307
  %v490 = vpack.c.b16 %v312, %v310
  %v491 = vpack.c.b16 %v313, %v311
  %v492 = vpack.c.b16 %v316, %v314
  %v493 = vpack.c.b16 %v317, %v315
  %v494 = vpack.c.b16 %v320, %v318
  %v495 = vpack.c.b16 %v321, %v319
  %v496 = vpack.c.b16 %v324, %v322
  %v497 = vpack.c.b16 %v325, %v323
  %v498 = vpack.c.b16 %v328, %v326
  %v499 = vpack.c.b16 %v329, %v327
  %v500 = vpack.c.b16 %v332, %v330
  %v501 = vpack.c.b16 %v333, %v331
  %v502 = vpack.c.b16 %v336, %v334
  %v503 = vpack.c.b16 %v337, %v335
  %v504 = vpack.c.b16 %v340, %v338
  %v505 = vpack.c.b16 %v341, %v339
  %v506 = vpack.c.b16 %v344, %v342
  %v507 = vpack.c.b16 %v345, %v343
  %v508 = vpack.c.b16 %v348, %v346
  %v509 = vpack.c.b16 %v349, %v347
  %v510 = vpack.c.b16 %v352, %v350
  %v511 = vpack.c.b16 %v353, %v351
  %v512 = vpack.c.b16 %v356, %v354
  %v513 = vpack.c.b16 %v357, %v355
  %v514 = vpack.c.b16 %v360, %v358
  %v515 = vpack.c.b16 %v361, %v359
  %v516 = vpack.c.b16 %v364, %v362
  %v517 = vpack.c.b16 %v365, %v363
  %v518 = vpack.c.b16 %v368, %v366
  %v519 = vpack.c.b16 %v369, %v367
  %v520 = vpack.c.b16 %v372, %v370
  %v521 = vpack.c.b16 %v373, %v371
  %v522 = vpack.c.b16 %v376, %v374
  %v523 = vpack.c.b16 %v377, %v375
  %v524 = vpack.c.b16 %v380, %v378
  %v525 = vpack.c.b16 %v381, %v379
  %v526 = vpack.c.b16 %v384, %v382
  %v527 = vpack.c.b16 %v385, %v383
  %v528 = vpack.c.b16 %v388, %v386
  %v529 = vpack.c.b16 %v389, %v387
  %v530 = vpack.c.b16 %v392, %v390
  %v531 = vpack.c.b16 %v393, %v391
  %v532 = vpack.c.b16 %v396, %v394
  %v533 = vpack.c.b16 %v397, %v395
  %v534 = vpack.c.b16 %v400, %v398
  %v535 = vpack.c.b16 %v401, %v399
  %v536 = vpack.c.b16 %v404, %v402
  %v537 = vpack.c.b16 %v405, %v403
  %v538 = vpack.c.b16 %v408, %v406
  %v539 = vpack.c.b16 %v409, %v407
  %v540 = vpack.c.b16 %v412, %v410
  %v541 = vpack.c.b16 %v413, %v411
  %v542 = vpack.c.b16 %v416, %v414
  %v543 = vpack.c.b16 %v417, %v415
  %v544 = vpack.c.b16 %v420, %v418
  %v545 = vpack.c.b16 %v421, %v419
  %v546 = vpack.c.b16 %v424, %v422
  %v547 = vpack.c.b16 %v425, %v423
  %v548 = vpack.c.b16 %v428, %v426
  %v549 = vpack.c.b16 %v429, %v427
  %v550 = vpack.c.b16 %v432, %v430
  %v551 = vpack.c.b16 %v433, %v431
  %v552 = vpack.c.b16 %v436, %v434
  %v553 = vpack.c.b16 %v437, %v435
  %v554 = vpack.c.b16 %v440, %v438
  %v555 = vpack.c.b16 %v441, %v439
  %v556 = vpack.c.b16 %v444, %v442
  %v557 = vpack.c.b16 %v445, %v443
  %v558 = vpack.c.b16 %v448, %v446
  %v559 = vpack.c.b16 %v449, %v447
  %v560 = vpack.c.b16 %v452, %v450
  %v561 = vpack.c.b16 %v453, %v451
  %v562 = vpack.c.b16 %v456, %v454
  %v563 = vpack.c.b16 %v457, %v455
  %v564 = vpack.c.b16 %v460, %v458
  %v565 = vpack.c.b16 %v461, %v459
  %v566 = vpack.c.b16 %v464, %v462
  %v567 = vpack.c.b16 %v465, %v463
  %v568 = vpack.c.b16 %v468, %v466
  %v569 = vpack.c.b16 %v469, %v467
  %vm670 = vcmask 261120
  %v672 = vsel %vm670, %v163, 0
  %674 = vmatprep.subr.bf16.mxu0 %v471
  %675 = vmatpush1.bf16.msra.mxu0 %v470
  %676 = vmatprep.subr.bf16.mxu0 %v473
  %677 = vmatpush1.bf16.msra.mxu0 %v472
  %678 = vmatprep.subr.bf16.mxu0 %v475
  %679 = vmatpush1.bf16.msra.mxu0 %v474
  %680 = vmatprep.subr.bf16.mxu0 %v477
  %681 = vmatpush1.bf16.msra.mxu0 %v476
  %682 = vmatprep.subr.bf16.mxu0 %v479
  %683 = vmatpush1.bf16.msra.mxu0 %v478
  %684 = vmatprep.subr.bf16.mxu0 %v481
  %685 = vmatpush1.bf16.msra.mxu0 %v480
  %686 = vmatprep.subr.bf16.mxu0 %v483
  %687 = vmatpush1.bf16.msra.mxu0 %v482
  %688 = vmatprep.subr.bf16.mxu0 %v485
  %689 = vmatpush1.bf16.msra.mxu0 %v484
  %690 = vmatprep.subr.bf16.mxu0 %v487
  %691 = vmatpush1.bf16.msra.mxu0 %v486
  %692 = vmatprep.subr.bf16.mxu0 %v489
  %693 = vmatpush1.bf16.msra.mxu0 %v488
  %694 = vmatprep.subr.bf16.mxu0 %v491
  %695 = vmatpush1.bf16.msra.mxu0 %v490
  %696 = vmatprep.subr.bf16.mxu0 %v493
  %697 = vmatpush1.bf16.msra.mxu0 %v492
  %698 = vmatprep.subr.bf16.mxu0 %v495
  %699 = vmatpush1.bf16.msra.mxu0 %v494
  %700 = vmatprep.subr.bf16.mxu0 %v497
  %701 = vmatpush1.bf16.msra.mxu0 %v496
  %702 = vmatprep.subr.bf16.mxu0 %v499
  %703 = vmatpush1.bf16.msra.mxu0 %v498
  %704 = vmatprep.subr.bf16.mxu0 %v501
  %705 = vmatpush1.bf16.msra.mxu0 %v500
  %706 = vmatprep.mubr.bf16.mxu0 %v158
  %707 = vmatmul.mubr.bf16.gmra.mrb[0].mxu0 %v157
  %v708 = vpop.f32.mrb[0].mxu0
  %v709 = vadd.f32 %v128, %v708
  %v710 = vpop.f32.mrb[0].mxu0
  %v711 = vadd.f32 %v128, %v710
  %v712 = vpop.f32.mrb[0].mxu0
  %v713 = vadd.f32 %v133, %v712
  %v714 = vpop.f32.mrb[0].mxu0
  %v715 = vadd.f32 %v133, %v714
  %716 = vdwg.mxu0
  %717 = vmatprep.subr.bf16.mxu0 %v503
  %718 = vmatpush1.bf16.msra.mxu0 %v502
  %719 = vmatprep.subr.bf16.mxu0 %v505
  %720 = vmatpush1.bf16.msra.mxu0 %v504
  %721 = vmatprep.subr.bf16.mxu0 %v507
  %722 = vmatpush1.bf16.msra.mxu0 %v506
  %723 = vmatprep.subr.bf16.mxu0 %v509
  %724 = vmatpush1.bf16.msra.mxu0 %v508
  %725 = vmatprep.subr.bf16.mxu0 %v511
  %726 = vmatpush1.bf16.msra.mxu0 %v510
  %727 = vmatprep.subr.bf16.mxu0 %v513
  %728 = vmatpush1.bf16.msra.mxu0 %v512
  %729 = vmatprep.subr.bf16.mxu0 %v515
  %730 = vmatpush1.bf16.msra.mxu0 %v514
  %731 = vmatprep.subr.bf16.mxu0 %v517
  %732 = vmatpush1.bf16.msra.mxu0 %v516
  %733 = vmatprep.subr.bf16.mxu0 %v519
  %734 = vmatpush1.bf16.msra.mxu0 %v518
  %735 = vmatprep.subr.bf16.mxu0 %v521
  %736 = vmatpush1.bf16.msra.mxu0 %v520
  %737 = vmatprep.subr.bf16.mxu0 %v523
  %738 = vmatpush1.bf16.msra.mxu0 %v522
  %739 = vmatprep.subr.bf16.mxu0 %v525
  %740 = vmatpush1.bf16.msra.mxu0 %v524
  %741 = vmatprep.subr.bf16.mxu0 %v527
  %742 = vmatpush1.bf16.msra.mxu0 %v526
  %743 = vmatprep.subr.bf16.mxu0 %v529
  %744 = vmatpush1.bf16.msra.mxu0 %v528
  %745 = vmatprep.subr.bf16.mxu0 %v531
  %746 = vmatpush1.bf16.msra.mxu0 %v530
  %747 = vmatprep.subr.bf16.mxu0 %v533
  %748 = vmatpush1.bf16.msra.mxu0 %v532
  %749 = vmatprep.mubr.bf16.mxu0 %v160
  %750 = vmatmul.mubr.bf16.gmra.mrb[0].mxu0 %v159
  %v751 = vpop.f32.mrb[0].mxu0
  %v752 = vadd.f32 %v709, %v751
  %v753 = vpop.f32.mrb[0].mxu0
  %v754 = vadd.f32 %v711, %v753
  %v755 = vpop.f32.mrb[0].mxu0
  %v756 = vadd.f32 %v713, %v755
  %v757 = vpop.f32.mrb[0].mxu0
  %v758 = vadd.f32 %v715, %v757
  %759 = vdwg.mxu0
  %760 = vmatprep.subr.bf16.mxu0 %v535
  %761 = vmatpush1.bf16.msra.mxu0 %v534
  %762 = vmatprep.subr.bf16.mxu0 %v537
  %763 = vmatpush1.bf16.msra.mxu0 %v536
  %764 = vmatprep.subr.bf16.mxu0 %v539
  %765 = vmatpush1.bf16.msra.mxu0 %v538
  %766 = vmatprep.subr.bf16.mxu0 %v541
  %767 = vmatpush1.bf16.msra.mxu0 %v540
  %768 = vmatprep.subr.bf16.mxu0 %v543
  %769 = vmatpush1.bf16.msra.mxu0 %v542
  %770 = vmatprep.subr.bf16.mxu0 %v545
  %771 = vmatpush1.bf16.msra.mxu0 %v544
  %772 = vmatprep.subr.bf16.mxu0 %v547
  %773 = vmatpush1.bf16.msra.mxu0 %v546
  %774 = vmatprep.subr.bf16.mxu0 %v549
  %775 = vmatpush1.bf16.msra.mxu0 %v548
  %776 = vmatprep.subr.bf16.mxu0 %v551
  %777 = vmatpush1.bf16.msra.mxu0 %v550
  %778 = vmatprep.subr.bf16.mxu0 %v553
  %779 = vmatpush1.bf16.msra.mxu0 %v552
  %780 = vmatprep.subr.bf16.mxu0 %v555
  %781 = vmatpush1.bf16.msra.mxu0 %v554
  %782 = vmatprep.subr.bf16.mxu0 %v557
  %783 = vmatpush1.bf16.msra.mxu0 %v556
  %784 = vmatprep.subr.bf16.mxu0 %v559
  %785 = vmatpush1.bf16.msra.mxu0 %v558
  %786 = vmatprep.subr.bf16.mxu0 %v561
  %787 = vmatpush1.bf16.msra.mxu0 %v560
  %788 = vmatprep.subr.bf16.mxu0 %v563
  %789 = vmatpush1.bf16.msra.mxu0 %v562
  %790 = vmatprep.subr.bf16.mxu0 %v565
  %791 = vmatpush1.bf16.msra.mxu0 %v564
  %792 = vmatprep.mubr.bf16.mxu0 %v162
  %793 = vmatmul.mubr.bf16.gmra.mrb[0].mxu0 %v161
  %v794 = vpop.f32.mrb[0].mxu0
  %v795 = vadd.f32 %v752, %v794
  %v796 = vpop.f32.mrb[0].mxu0
  %v797 = vadd.f32 %v754, %v796
  %v798 = vpop.f32.mrb[0].mxu0
  %v799 = vadd.f32 %v756, %v798
  %v800 = vpop.f32.mrb[0].mxu0
  %v801 = vadd.f32 %v758, %v800
  %802 = vdwg.mxu0
  %803 = vmatprep.subr.bf16.mxu0 %v567
  %804 = vmatpush1.bf16.msra.mxu0 %v566
  %805 = vmatprep.subr.bf16.mxu0 %v569
  %806 = vmatpush1.bf16.msra.mxu0 %v568
  %807 = vmatprep.subr.bf16.mxu0 0
  %808 = vmatpush1.bf16.msra.mxu0 0
  %809 = vmatprep.subr.bf16.mxu0 0
  %810 = vmatpush1.bf16.msra.mxu0 0
  %811 = vmatprep.subr.bf16.mxu0 0
  %812 = vmatpush1.bf16.msra.mxu0 0
  %813 = vmatprep.subr.bf16.mxu0 0
  %814 = vmatpush1.bf16.msra.mxu0 0
  %815 = vmatprep.subr.bf16.mxu0 0
  %816 = vmatpush1.bf16.msra.mxu0 0
  %817 = vmatprep.subr.bf16.mxu0 0
  %818 = vmatpush1.bf16.msra.mxu0 0
  %819 = vmatprep.subr.bf16.mxu0 0
  %820 = vmatpush1.bf16.msra.mxu0 0
  %821 = vmatprep.subr.bf16.mxu0 0
  %822 = vmatpush1.bf16.msra.mxu0 0
  %823 = vmatprep.subr.bf16.mxu0 0
  %824 = vmatpush1.bf16.msra.mxu0 0
  %825 = vmatprep.subr.bf16.mxu0 0
  %826 = vmatpush1.bf16.msra.mxu0 0
  %827 = vmatprep.subr.bf16.mxu0 0
  %828 = vmatpush1.bf16.msra.mxu0 0
  %829 = vmatprep.subr.bf16.mxu0 0
  %830 = vmatpush1.bf16.msra.mxu0 0
  %831 = vmatprep.subr.bf16.mxu0 0
  %832 = vmatpush1.bf16.msra.mxu0 0
  %833 = vmatprep.subr.bf16.mxu0 0
  %834 = vmatpush1.bf16.msra.mxu0 0
  %835 = vmatprep.mubr.bf16.mxu0 0
  %836 = vmatmul.mubr.bf16.gmra.mrb[0].mxu0 %v672
  %v837 = vpop.f32.mrb[0].mxu0
  %v838 = vadd.f32 %v795, %v837
  %v839 = vpop.f32.mrb[0].mxu0
  %v840 = vadd.f32 %v797, %v839
  %v841 = vpop.f32.mrb[0].mxu0
  %v842 = vadd.f32 %v799, %v841
  %v843 = vpop.f32.mrb[0].mxu0
  %v844 = vadd.f32 %v801, %v843
  %845 = vdwg.mxu0
  %v846 = vmax.f32 %v838, 0.0
  %v847 = vmax.f32 %v840, 0.0
  %v848 = vmax.f32 %v842, 0.0
  %v849 = vmax.f32 %v844, 0.0
  %v850 = vpack.c.bf16 %v848, %v846
  %v851 = vpack.c.bf16 %v849, %v847
  %v854 = vunpack.c.l.b16 %v850
  %v855 = vunpack.c.l.b16 %v851
  %v856 = vunpack.c.h.b16 %v850
  %v857 = vunpack.c.h.b16 %v851
  %v858 = vpack.c.b16 %v855, %v854
  %v859 = vpack.c.b16 %v857, %v856
  %862 = vst [vmem:[%s3] sm:$0xff] %v858
  %863 = vst [vmem:[%s3 + $0x8] sm:$0xff] %v859
  // Predicated region
  $region14: #{autoencoder_cnn_forward.10} parent=0 // pred_check
    _
  $region15: #{autoencoder_cnn_forward.10} parent=0 // pred_check_branch
    %865 = sbr.rel (0) target = $region17
  $region16: #{autoencoder_cnn_forward.10} parent=0 // pred_region
    _
  $region17: #{autoencoder_cnn_forward.10} parent=0 // pred_fallthru
    _
  // Predicated region
  $region18: #{autoencoder_cnn_forward.10} parent=0 // pred_check
    _
  $region19: #{autoencoder_cnn_forward.10} parent=0 // pred_check_branch
    %867 = sbr.rel (0) target = $region21
  $region20: #{autoencoder_cnn_forward.10} parent=0 // pred_region
    _
  $region21: #{autoencoder_cnn_forward.10} parent=0 // pred_fallthru
    _

// kernel: autoencoder_cnn_forward.11
$region0: #{autoencoder_cnn_forward.11}
  #allocation0 [shape = 'u32[]', space=smem, size = 0x4, offset = 0x4, fixed_abs, tag = 'smem constant byte address 0x4 - core index']
  #allocation1 [shape = 'u32[144,128]{1,0:T(1,128)}', space=vmem, size = 0x12000, scoped, tag = 'internal scratch']
  #allocation2 [shape = 'f32[1,1]{1,0:T(1,128)S(1)}', space=vmem, size = 0x200, scoped, tag = 'scoped memory for autoencoder_cnn_forward.11']
  %s0 = inlined_call_operand.vmem [shape: bf16[1,784], index: 0, kind: input, shape index: {}]
  %s1 = inlined_call_operand.vmem [shape: bf16[784,2048], index: 1, kind: input, shape index: {}]
  %s2 = inlined_call_operand.<no memory space> [shape: f32[1,1], index: 2, kind: input, shape index: {}]
  %s3 = inlined_call_operand.vmem [shape: f32[1,2048], index: 3, kind: output, shape index: {}]
  %s4 = sld [smem:[#allocation0]]
  $region68: #{autoencoder_cnn_forward.11} parent=0
    _
  %s6 = ssub.s32 1, %s4
  %s7 = scalar_select 0, %s6, %s4
  %v8 = vstv %s2
  %9 = vst [vmem:[#allocation2] sm:$0x1] %v8
  $region1: #{autoencoder_cnn_forward.11} parent=0
    #allocation3 [shape = 'u8[1605632]{0}', space=vmem, size = 0x188000, scoped, tag = 'input window, operand 1']
    loop: start=0, step=1, limit=6
    $region2: #{autoencoder_cnn_forward.11} parent=1 // loop_pre_header
      _
    $region3: #{autoencoder_cnn_forward.11} parent=1 // loop_header
      %s11 = sphi 0, %s15
      %p12 = scmp.ge.s32.totalorder %s11, 6
      %s19 = sphi 0, %s19
      %s21 = sphi 0, %s19
      %s22 = sphi 0, %s21
      %s36 = sphi 0, %s22
      %s42 = sphi 0, %s44
      %s45 = sphi 0, %s42
      %s46 = sphi 0, %s45
      %s62 = sphi 0, %s46
      %s66 = sphi 0, %s66
      %s68 = sphi 0, %s66
      %s69 = sphi 0, %s68
      %s83 = sphi 0, %s69
      %s89 = sphi 0, %s91
      %s92 = sphi 0, %s89
      %s93 = sphi 0, %s92
      %s109 = sphi 0, %s93
    $region4: #{autoencoder_cnn_forward.11} parent=1 // loop_header_branch
      %14 = sbr.rel (%p12) target = $region8
    $region5: #{autoencoder_cnn_forward.11} parent=1 // loop_body
      %s16 = ssub.s32 %s11, 1
      %s17 = ssub.s32 %s11, 2
      %s18 = sadd.s32 %s11, 1
      %s20 = sadd.s32 %s19, 1
      %p23 = scmp.eq.s32.totalorder %s11, 3
      %p24 = scmp.ne.s32.totalorder %s19, %s21
      %p25 = scmp.eq.s32.totalorder %s11, 0
      %p26 = por %p24, %p25
      %p27 = scmp.ne.s32.totalorder %s19, %s21
      %p28 = scmp.eq.s32.totalorder %s16, 3
      %p29 = por %p27, %p28
      %p30 = scmp.ne.s32.totalorder %s21, %s22
      %p31 = scmp.eq.s32.totalorder %s16, 0
      %p32 = por %p30, %p31
      %p33 = scmp.ne.s32.totalorder %s21, %s22
      %p34 = scmp.eq.s32.totalorder %s17, 3
      %p35 = por %p33, %p34
      %p37 = scmp.ne.s32.totalorder %s22, %s36
      %p38 = scmp.eq.s32.totalorder %s17, 0
      %p39 = por %p37, %p38
      %s40 = ssub.s32 %s11, %s18
      %p41 = scmp.eq.s32.totalorder %s40, 0
      %s43 = sadd.s32 %s42, 1
      %s44 = scalar_select %p41, %s42, %s43
      %p47 = pneg %p41
      %p48 = scmp.eq.s32.totalorder %s11, 3
      %p49 = por %p47, %p48
      %p50 = scmp.ne.s32.totalorder %s42, %s45
      %p51 = scmp.eq.s32.totalorder %s11, 0
      %p52 = por %p50, %p51
      %p53 = scmp.ne.s32.totalorder %s42, %s45
      %p54 = scmp.eq.s32.totalorder %s16, 3
      %p55 = por %p53, %p54
      %p56 = scmp.ne.s32.totalorder %s45, %s46
      %p57 = scmp.eq.s32.totalorder %s16, 0
      %p58 = por %p56, %p57
      %p59 = scmp.ne.s32.totalorder %s45, %s46
      %p60 = scmp.eq.s32.totalorder %s17, 3
      %p61 = por %p59, %p60
      %p63 = scmp.ne.s32.totalorder %s46, %s62
      %p64 = scmp.eq.s32.totalorder %s17, 0
      %p65 = por %p63, %p64
      %s67 = sadd.s32 %s66, 1
      %p70 = scmp.eq.s32.totalorder %s11, 3
      %p71 = scmp.ne.s32.totalorder %s66, %s68
      %p72 = scmp.eq.s32.totalorder %s11, 0
      %p73 = por %p71, %p72
      %p74 = scmp.ne.s32.totalorder %s66, %s68
      %p75 = scmp.eq.s32.totalorder %s16, 3
      %p76 = por %p74, %p75
      %p77 = scmp.ne.s32.totalorder %s68, %s69
      %p78 = scmp.eq.s32.totalorder %s16, 0
      %p79 = por %p77, %p78
      %p80 = scmp.ne.s32.totalorder %s68, %s69
      %p81 = scmp.eq.s32.totalorder %s17, 3
      %p82 = por %p80, %p81
      %p84 = scmp.ne.s32.totalorder %s69, %s83
      %p85 = scmp.eq.s32.totalorder %s17, 0
      %p86 = por %p84, %p85
      %s87 = ssub.s32 %s11, %s18
      %p88 = scmp.eq.s32.totalorder %s87, 0
      %s90 = sadd.s32 %s89, 1
      %s91 = scalar_select %p88, %s89, %s90
      %p94 = pneg %p88
      %p95 = scmp.eq.s32.totalorder %s11, 3
      %p96 = por %p94, %p95
      %p97 = scmp.ne.s32.totalorder %s89, %s92
      %p98 = scmp.eq.s32.totalorder %s11, 0
      %p99 = por %p97, %p98
      %p100 = scmp.ne.s32.totalorder %s89, %s92
      %p101 = scmp.eq.s32.totalorder %s16, 3
      %p102 = por %p100, %p101
      %p103 = scmp.ne.s32.totalorder %s92, %s93
      %p104 = scmp.eq.s32.totalorder %s16, 0
      %p105 = por %p103, %p104
      %p106 = scmp.ne.s32.totalorder %s92, %s93
      %p107 = scmp.eq.s32.totalorder %s17, 3
      %p108 = por %p106, %p107
      %p110 = scmp.ne.s32.totalorder %s93, %s109
      %p111 = scmp.eq.s32.totalorder %s17, 0
      %p112 = por %p110, %p111
      %p113 = scmp.le.s32.totalorder 1, %s11
      %p114 = scmp.lt.s32.totalorder %s11, 5
      %p115 = pnand %p113, %p114
      %p116 = pneg %p115
      // Predicated region
      $region9: #{autoencoder_cnn_forward.11} parent=5 // pred_check
        _
      $region10: #{autoencoder_cnn_forward.11} parent=5 // pred_check_branch
        %118 = sbr.rel (%p115) target = $region12
      $region11: #{autoencoder_cnn_forward.11} parent=5 // pred_region
        %s119 = ssub.s32 %s11, 1
        // Predicated region
        $region13: #{autoencoder_cnn_forward.11} parent=11 // pred_check
          %p120 = pneg %p32
        $region14: #{autoencoder_cnn_forward.11} parent=11 // pred_check_branch
          %122 = sbr.rel (%p120) target = $region16
        $region15: #{autoencoder_cnn_forward.11} parent=11 // pred_region
          _
        $region16: #{autoencoder_cnn_forward.11} parent=11 // pred_fallthru
          _
        // Predicated region
        $region17: #{autoencoder_cnn_forward.11} parent=11 // pred_check
          %p123 = pneg %p79
        $region18: #{autoencoder_cnn_forward.11} parent=11 // pred_check_branch
          %125 = sbr.rel (%p123) target = $region20
        $region19: #{autoencoder_cnn_forward.11} parent=11 // pred_region
          _
        $region20: #{autoencoder_cnn_forward.11} parent=11 // pred_fallthru
          _
      $region12: #{autoencoder_cnn_forward.11} parent=5 // pred_fallthru
        _
      %p126 = scmp.lt.s32.totalorder %s11, 4
      // Predicated region
      $region21: #{autoencoder_cnn_forward.11} parent=5 // pred_check
        %p127 = pneg %p126
      $region22: #{autoencoder_cnn_forward.11} parent=5 // pred_check_branch
        %129 = sbr.rel (%p127) target = $region24
      $region23: #{autoencoder_cnn_forward.11} parent=5 // pred_region
        // Predicated region
        $region25: #{autoencoder_cnn_forward.11} parent=23 // pred_check
          %p130 = pneg %p52
        $region26: #{autoencoder_cnn_forward.11} parent=23 // pred_check_branch
          %132 = sbr.rel (%p130) target = $region28
        $region27: #{autoencoder_cnn_forward.11} parent=23 // pred_region
          %s133 = sand.u32 %s42, 1
          %s134 = sand.u32 %s42, 1
          %s135 = smul.addr %s134, 1568
          %s136 = scalar_lea.vmem [#allocation3], %s135
          %s137 = smul.u32 4, %s11
          %s138 = smul.addr %s137, 4
          %s139 = scalar_lea.vmem %s1, %s138
          // Predicated region
          $region29: #{autoencoder_cnn_forward.11} parent=27 // pred_check
            _
          $region30: #{autoencoder_cnn_forward.11} parent=27 // pred_check_branch
            %141 = sbr.rel (0) target = $region32
          $region31: #{autoencoder_cnn_forward.11} parent=27 // pred_region
            // Predicated region
            $region33: #{autoencoder_cnn_forward.11} parent=31 // pred_check
              _
            $region34: #{autoencoder_cnn_forward.11} parent=31 // pred_check_branch
              %143 = sbr.rel (0) target = $region36
            $region35: #{autoencoder_cnn_forward.11} parent=31 // pred_region
              loop: start=0, step=1, limit=1
              $region37: #{autoencoder_cnn_forward.11} parent=35 // loop_pre_header
                _
              $region38: #{autoencoder_cnn_forward.11} parent=35 // loop_header
                %s145 = sphi 0, %s149
                %p146 = scmp.ge.s32.totalorder %s145, 1
                %s150 = sphi %s139, %s139
                %s151 = sphi %s136, %s136
              $region39: #{autoencoder_cnn_forward.11} parent=35 // loop_header_branch
                %148 = sbr.rel (%p146) target = $region43
              $region40: #{autoencoder_cnn_forward.11} parent=35 // loop_body
                %v152 = vld [vmem:[%s150] sm:$0xff]
                %153 = vst [vmem:[%s151] sm:$0xff] %v152
                %v154 = vld [vmem:[%s150 + $0x8] sm:$0xff]
                %155 = vst [vmem:[%s151 + $0x8] sm:$0xff] %v154
                %v156 = vld [vmem:[%s150 + $0x40] sm:$0xff]
                %157 = vst [vmem:[%s151 + $0x10] sm:$0xff] %v156
                %v158 = vld [vmem:[%s150 + $0x48] sm:$0xff]
                %159 = vst [vmem:[%s151 + $0x18] sm:$0xff] %v158
                %v160 = vld [vmem:[%s150 + $0x80] sm:$0xff]
                %161 = vst [vmem:[%s151 + $0x20] sm:$0xff] %v160
                %v162 = vld [vmem:[%s150 + $0x88] sm:$0xff]
                %163 = vst [vmem:[%s151 + $0x28] sm:$0xff] %v162
                %v164 = vld [vmem:[%s150 + $0xc0] sm:$0xff]
                %165 = vst [vmem:[%s151 + $0x30] sm:$0xff] %v164
                %v166 = vld [vmem:[%s150 + $0xc8] sm:$0xff]
                %167 = vst [vmem:[%s151 + $0x38] sm:$0xff] %v166
                %v168 = vld [vmem:[%s150 + $0x100] sm:$0xff]
                %169 = vst [vmem:[%s151 + $0x40] sm:$0xff] %v168
                %v170 = vld [vmem:[%s150 + $0x108] sm:$0xff]
                %171 = vst [vmem:[%s151 + $0x48] sm:$0xff] %v170
                %v172 = vld [vmem:[%s150 + $0x140] sm:$0xff]
                %173 = vst [vmem:[%s151 + $0x50] sm:$0xff] %v172
                %v174 = vld [vmem:[%s150 + $0x148] sm:$0xff]
                %175 = vst [vmem:[%s151 + $0x58] sm:$0xff] %v174
                %v176 = vld [vmem:[%s150 + $0x180] sm:$0xff]
                %177 = vst [vmem:[%s151 + $0x60] sm:$0xff] %v176
                %v178 = vld [vmem:[%s150 + $0x188] sm:$0xff]
                %179 = vst [vmem:[%s151 + $0x68] sm:$0xff] %v178
                %v180 = vld [vmem:[%s150 + $0x1c0] sm:$0xff]
                %181 = vst [vmem:[%s151 + $0x70] sm:$0xff] %v180
                %v182 = vld [vmem:[%s150 + $0x1c8] sm:$0xff]
                %183 = vst [vmem:[%s151 + $0x78] sm:$0xff] %v182
                %v184 = vld [vmem:[%s150 + $0x200] sm:$0xff]
                %185 = vst [vmem:[%s151 + $0x80] sm:$0xff] %v184
                %v186 = vld [vmem:[%s150 + $0x208] sm:$0xff]
                %187 = vst [vmem:[%s151 + $0x88] sm:$0xff] %v186
                %v188 = vld [vmem:[%s150 + $0x240] sm:$0xff]
                %189 = vst [vmem:[%s151 + $0x90] sm:$0xff] %v188
                %v190 = vld [vmem:[%s150 + $0x248] sm:$0xff]
                %191 = vst [vmem:[%s151 + $0x98] sm:$0xff] %v190
                %v192 = vld [vmem:[%s150 + $0x280] sm:$0xff]
                %193 = vst [vmem:[%s151 + $0xa0] sm:$0xff] %v192
                %v194 = vld [vmem:[%s150 + $0x288] sm:$0xff]
                %195 = vst [vmem:[%s151 + $0xa8] sm:$0xff] %v194
                %v196 = vld [vmem:[%s150 + $0x2c0] sm:$0xff]
                %197 = vst [vmem:[%s151 + $0xb0] sm:$0xff] %v196
                %v198 = vld [vmem:[%s150 + $0x2c8] sm:$0xff]
                %199 = vst [vmem:[%s151 + $0xb8] sm:$0xff] %v198
                %v200 = vld [vmem:[%s150 + $0x300] sm:$0xff]
                %201 = vst [vmem:[%s151 + $0xc0] sm:$0xff] %v200
                %v202 = vld [vmem:[%s150 + $0x308] sm:$0xff]
                %203 = vst [vmem:[%s151 + $0xc8] sm:$0xff] %v202
                %v204 = vld [vmem:[%s150 + $0x340] sm:$0xff]
                %205 = vst [vmem:[%s151 + $0xd0] sm:$0xff] %v204
                %v206 = vld [vmem:[%s150 + $0x348] sm:$0xff]
                %207 = vst [vmem:[%s151 + $0xd8] sm:$0xff] %v206
                %v208 = vld [vmem:[%s150 + $0x380] sm:$0xff]
                %209 = vst [vmem:[%s151 + $0xe0] sm:$0xff] %v208
                %v210 = vld [vmem:[%s150 + $0x388] sm:$0xff]
                %211 = vst [vmem:[%s151 + $0xe8] sm:$0xff] %v210
                %v212 = vld [vmem:[%s150 + $0x3c0] sm:$0xff]
                %213 = vst [vmem:[%s151 + $0xf0] sm:$0xff] %v212
                %v214 = vld [vmem:[%s150 + $0x3c8] sm:$0xff]
                %215 = vst [vmem:[%s151 + $0xf8] sm:$0xff] %v214
                %v216 = vld [vmem:[%s150 + $0x400] sm:$0xff]
                %217 = vst [vmem:[%s151 + $0x100] sm:$0xff] %v216
                %v218 = vld [vmem:[%s150 + $0x408] sm:$0xff]
                %219 = vst [vmem:[%s151 + $0x108] sm:$0xff] %v218
                %v220 = vld [vmem:[%s150 + $0x440] sm:$0xff]
                %221 = vst [vmem:[%s151 + $0x110] sm:$0xff] %v220
                %v222 = vld [vmem:[%s150 + $0x448] sm:$0xff]
                %223 = vst [vmem:[%s151 + $0x118] sm:$0xff] %v222
                %v224 = vld [vmem:[%s150 + $0x480] sm:$0xff]
                %225 = vst [vmem:[%s151 + $0x120] sm:$0xff] %v224
                %v226 = vld [vmem:[%s150 + $0x488] sm:$0xff]
                %227 = vst [vmem:[%s151 + $0x128] sm:$0xff] %v226
                %v228 = vld [vmem:[%s150 + $0x4c0] sm:$0xff]
                %229 = vst [vmem:[%s151 + $0x130] sm:$0xff] %v228
                %v230 = vld [vmem:[%s150 + $0x4c8] sm:$0xff]
                %231 = vst [vmem:[%s151 + $0x138] sm:$0xff] %v230
                %v232 = vld [vmem:[%s150 + $0x500] sm:$0xff]
                %233 = vst [vmem:[%s151 + $0x140] sm:$0xff] %v232
                %v234 = vld [vmem:[%s150 + $0x508] sm:$0xff]
                %235 = vst [vmem:[%s151 + $0x148] sm:$0xff] %v234
                %v236 = vld [vmem:[%s150 + $0x540] sm:$0xff]
                %237 = vst [vmem:[%s151 + $0x150] sm:$0xff] %v236
                %v238 = vld [vmem:[%s150 + $0x548] sm:$0xff]
                %239 = vst [vmem:[%s151 + $0x158] sm:$0xff] %v238
                %v240 = vld [vmem:[%s150 + $0x580] sm:$0xff]
                %241 = vst [vmem:[%s151 + $0x160] sm:$0xff] %v240
                %v242 = vld [vmem:[%s150 + $0x588] sm:$0xff]
                %243 = vst [vmem:[%s151 + $0x168] sm:$0xff] %v242
                %v244 = vld [vmem:[%s150 + $0x5c0] sm:$0xff]
                %245 = vst [vmem:[%s151 + $0x170] sm:$0xff] %v244
                %v246 = vld [vmem:[%s150 + $0x5c8] sm:$0xff]
                %247 = vst [vmem:[%s151 + $0x178] sm:$0xff] %v246
                %v248 = vld [vmem:[%s150 + $0x600] sm:$0xff]
                %249 = vst [vmem:[%s151 + $0x180] sm:$0xff] %v248
                %v250 = vld [vmem:[%s150 + $0x608] sm:$0xff]
                %251 = vst [vmem:[%s151 + $0x188] sm:$0xff] %v250
                %v252 = vld [vmem:[%s150 + $0x640] sm:$0xff]
                %253 = vst [vmem:[%s151 + $0x190] sm:$0xff] %v252
                %v254 = vld [vmem:[%s150 + $0x648] sm:$0xff]
                %255 = vst [vmem:[%s151 + $0x198] sm:$0xff] %v254
                %v256 = vld [vmem:[%s150 + $0x680] sm:$0xff]
                %257 = vst [vmem:[%s151 + $0x1a0] sm:$0xff] %v256
                %v258 = vld [vmem:[%s150 + $0x688] sm:$0xff]
                %259 = vst [vmem:[%s151 + $0x1a8] sm:$0xff] %v258
                %v260 = vld [vmem:[%s150 + $0x6c0] sm:$0xff]
                %261 = vst [vmem:[%s151 + $0x1b0] sm:$0xff] %v260
                %v262 = vld [vmem:[%s150 + $0x6c8] sm:$0xff]
                %263 = vst [vmem:[%s151 + $0x1b8] sm:$0xff] %v262
                %v264 = vld [vmem:[%s150 + $0x700] sm:$0xff]
                %265 = vst [vmem:[%s151 + $0x1c0] sm:$0xff] %v264
                %v266 = vld [vmem:[%s150 + $0x708] sm:$0xff]
                %267 = vst [vmem:[%s151 + $0x1c8] sm:$0xff] %v266
                %v268 = vld [vmem:[%s150 + $0x740] sm:$0xff]
                %269 = vst [vmem:[%s151 + $0x1d0] sm:$0xff] %v268
                %v270 = vld [vmem:[%s150 + $0x748] sm:$0xff]
                %271 = vst [vmem:[%s151 + $0x1d8] sm:$0xff] %v270
                %v272 = vld [vmem:[%s150 + $0x780] sm:$0xff]
                %273 = vst [vmem:[%s151 + $0x1e0] sm:$0xff] %v272
                %v274 = vld [vmem:[%s150 + $0x788] sm:$0xff]
                %275 = vst [vmem:[%s151 + $0x1e8] sm:$0xff] %v274
                %v276 = vld [vmem:[%s150 + $0x7c0] sm:$0xff]
                %277 = vst [vmem:[%s151 + $0x1f0] sm:$0xff] %v276
                %v278 = vld [vmem:[%s150 + $0x7c8] sm:$0xff]
                %279 = vst [vmem:[%s151 + $0x1f8] sm:$0xff] %v278
                %v280 = vld [vmem:[%s150 + $0x800] sm:$0xff]
                %281 = vst [vmem:[%s151 + $0x200] sm:$0xff] %v280
                %v282 = vld [vmem:[%s150 + $0x808] sm:$0xff]
                %283 = vst [vmem:[%s151 + $0x208] sm:$0xff] %v282
                %v284 = vld [vmem:[%s150 + $0x840] sm:$0xff]
                %285 = vst [vmem:[%s151 + $0x210] sm:$0xff] %v284
                %v286 = vld [vmem:[%s150 + $0x848] sm:$0xff]
                %287 = vst [vmem:[%s151 + $0x218] sm:$0xff] %v286
                %v288 = vld [vmem:[%s150 + $0x880] sm:$0xff]
                %289 = vst [vmem:[%s151 + $0x220] sm:$0xff] %v288
                %v290 = vld [vmem:[%s150 + $0x888] sm:$0xff]
                %291 = vst [vmem:[%s151 + $0x228] sm:$0xff] %v290
                %v292 = vld [vmem:[%s150 + $0x8c0] sm:$0xff]
                %293 = vst [vmem:[%s151 + $0x230] sm:$0xff] %v292
                %v294 = vld [vmem:[%s150 + $0x8c8] sm:$0xff]
                %295 = vst [vmem:[%s151 + $0x238] sm:$0xff] %v294
                %v296 = vld [vmem:[%s150 + $0x900] sm:$0xff]
                %297 = vst [vmem:[%s151 + $0x240] sm:$0xff] %v296
                %v298 = vld [vmem:[%s150 + $0x908] sm:$0xff]
                %299 = vst [vmem:[%s151 + $0x248] sm:$0xff] %v298
                %v300 = vld [vmem:[%s150 + $0x940] sm:$0xff]
                %301 = vst [vmem:[%s151 + $0x250] sm:$0xff] %v300
                %v302 = vld [vmem:[%s150 + $0x948] sm:$0xff]
                %303 = vst [vmem:[%s151 + $0x258] sm:$0xff] %v302
                %v304 = vld [vmem:[%s150 + $0x980] sm:$0xff]
                %305 = vst [vmem:[%s151 + $0x260] sm:$0xff] %v304
                %v306 = vld [vmem:[%s150 + $0x988] sm:$0xff]
                %307 = vst [vmem:[%s151 + $0x268] sm:$0xff] %v306
                %v308 = vld [vmem:[%s150 + $0x9c0] sm:$0xff]
                %309 = vst [vmem:[%s151 + $0x270] sm:$0xff] %v308
                %v310 = vld [vmem:[%s150 + $0x9c8] sm:$0xff]
                %311 = vst [vmem:[%s151 + $0x278] sm:$0xff] %v310
                %v312 = vld [vmem:[%s150 + $0xa00] sm:$0xff]
                %313 = vst [vmem:[%s151 + $0x280] sm:$0xff] %v312
                %v314 = vld [vmem:[%s150 + $0xa08] sm:$0xff]
                %315 = vst [vmem:[%s151 + $0x288] sm:$0xff] %v314
                %v316 = vld [vmem:[%s150 + $0xa40] sm:$0xff]
                %317 = vst [vmem:[%s151 + $0x290] sm:$0xff] %v316
                %v318 = vld [vmem:[%s150 + $0xa48] sm:$0xff]
                %319 = vst [vmem:[%s151 + $0x298] sm:$0xff] %v318
                %v320 = vld [vmem:[%s150 + $0xa80] sm:$0xff]
                %321 = vst [vmem:[%s151 + $0x2a0] sm:$0xff] %v320
                %v322 = vld [vmem:[%s150 + $0xa88] sm:$0xff]
                %323 = vst [vmem:[%s151 + $0x2a8] sm:$0xff] %v322
                %v324 = vld [vmem:[%s150 + $0xac0] sm:$0xff]
                %325 = vst [vmem:[%s151 + $0x2b0] sm:$0xff] %v324
                %v326 = vld [vmem:[%s150 + $0xac8] sm:$0xff]
                %327 = vst [vmem:[%s151 + $0x2b8] sm:$0xff] %v326
                %v328 = vld [vmem:[%s150 + $0xb00] sm:$0xff]
                %329 = vst [vmem:[%s151 + $0x2c0] sm:$0xff] %v328
                %v330 = vld [vmem:[%s150 + $0xb08] sm:$0xff]
                %331 = vst [vmem:[%s151 + $0x2c8] sm:$0xff] %v330
                %v332 = vld [vmem:[%s150 + $0xb40] sm:$0xff]
                %333 = vst [vmem:[%s151 + $0x2d0] sm:$0xff] %v332
                %v334 = vld [vmem:[%s150 + $0xb48] sm:$0xff]
                %335 = vst [vmem:[%s151 + $0x2d8] sm:$0xff] %v334
                %v336 = vld [vmem:[%s150 + $0xb80] sm:$0xff]
                %337 = vst [vmem:[%s151 + $0x2e0] sm:$0xff] %v336
                %v338 = vld [vmem:[%s150 + $0xb88] sm:$0xff]
                %339 = vst [vmem:[%s151 + $0x2e8] sm:$0xff] %v338
                %v340 = vld [vmem:[%s150 + $0xbc0] sm:$0xff]
                %341 = vst [vmem:[%s151 + $0x2f0] sm:$0xff] %v340
                %v342 = vld [vmem:[%s150 + $0xbc8] sm:$0xff]
                %343 = vst [vmem:[%s151 + $0x2f8] sm:$0xff] %v342
                %v344 = vld [vmem:[%s150 + $0xc00] sm:$0xff]
                %345 = vst [vmem:[%s151 + $0x300] sm:$0xff] %v344
                %v346 = vld [vmem:[%s150 + $0xc08] sm:$0xff]
                %347 = vst [vmem:[%s151 + $0x308] sm:$0xff] %v346
                %v348 = vld [vmem:[%s150 + $0xc40] sm:$0xff]
                %349 = vst [vmem:[%s151 + $0x310] sm:$0xff] %v348
                %v350 = vld [vmem:[%s150 + $0xc48] sm:$0xff]
                %351 = vst [vmem:[%s151 + $0x318] sm:$0xff] %v350
                %v352 = vld [vmem:[%s150 + $0xc80] sm:$0xff]
                %353 = vst [vmem:[%s151 + $0x320] sm:$0xff] %v352
                %v354 = vld [vmem:[%s150 + $0xc88] sm:$0xff]
                %355 = vst [vmem:[%s151 + $0x328] sm:$0xff] %v354
                %v356 = vld [vmem:[%s150 + $0xcc0] sm:$0xff]
                %357 = vst [vmem:[%s151 + $0x330] sm:$0xff] %v356
                %v358 = vld [vmem:[%s150 + $0xcc8] sm:$0xff]
                %359 = vst [vmem:[%s151 + $0x338] sm:$0xff] %v358
                %v360 = vld [vmem:[%s150 + $0xd00] sm:$0xff]
                %361 = vst [vmem:[%s151 + $0x340] sm:$0xff] %v360
                %v362 = vld [vmem:[%s150 + $0xd08] sm:$0xff]
                %363 = vst [vmem:[%s151 + $0x348] sm:$0xff] %v362
                %v364 = vld [vmem:[%s150 + $0xd40] sm:$0xff]
                %365 = vst [vmem:[%s151 + $0x350] sm:$0xff] %v364
                %v366 = vld [vmem:[%s150 + $0xd48] sm:$0xff]
                %367 = vst [vmem:[%s151 + $0x358] sm:$0xff] %v366
                %v368 = vld [vmem:[%s150 + $0xd80] sm:$0xff]
                %369 = vst [vmem:[%s151 + $0x360] sm:$0xff] %v368
                %v370 = vld [vmem:[%s150 + $0xd88] sm:$0xff]
                %371 = vst [vmem:[%s151 + $0x368] sm:$0xff] %v370
                %v372 = vld [vmem:[%s150 + $0xdc0] sm:$0xff]
                %373 = vst [vmem:[%s151 + $0x370] sm:$0xff] %v372
                %v374 = vld [vmem:[%s150 + $0xdc8] sm:$0xff]
                %375 = vst [vmem:[%s151 + $0x378] sm:$0xff] %v374
                %v376 = vld [vmem:[%s150 + $0xe00] sm:$0xff]
                %377 = vst [vmem:[%s151 + $0x380] sm:$0xff] %v376
                %v378 = vld [vmem:[%s150 + $0xe08] sm:$0xff]
                %379 = vst [vmem:[%s151 + $0x388] sm:$0xff] %v378
                %v380 = vld [vmem:[%s150 + $0xe40] sm:$0xff]
                %381 = vst [vmem:[%s151 + $0x390] sm:$0xff] %v380
                %v382 = vld [vmem:[%s150 + $0xe48] sm:$0xff]
                %383 = vst [vmem:[%s151 + $0x398] sm:$0xff] %v382
                %v384 = vld [vmem:[%s150 + $0xe80] sm:$0xff]
                %385 = vst [vmem:[%s151 + $0x3a0] sm:$0xff] %v384
                %v386 = vld [vmem:[%s150 + $0xe88] sm:$0xff]
                %387 = vst [vmem:[%s151 + $0x3a8] sm:$0xff] %v386
                %v388 = vld [vmem:[%s150 + $0xec0] sm:$0xff]
                %389 = vst [vmem:[%s151 + $0x3b0] sm:$0xff] %v388
                %v390 = vld [vmem:[%s150 + $0xec8] sm:$0xff]
                %391 = vst [vmem:[%s151 + $0x3b8] sm:$0xff] %v390
                %v392 = vld [vmem:[%s150 + $0xf00] sm:$0xff]
                %393 = vst [vmem:[%s151 + $0x3c0] sm:$0xff] %v392
                %v394 = vld [vmem:[%s150 + $0xf08] sm:$0xff]
                %395 = vst [vmem:[%s151 + $0x3c8] sm:$0xff] %v394
                %v396 = vld [vmem:[%s150 + $0xf40] sm:$0xff]
                %397 = vst [vmem:[%s151 + $0x3d0] sm:$0xff] %v396
                %v398 = vld [vmem:[%s150 + $0xf48] sm:$0xff]
                %399 = vst [vmem:[%s151 + $0x3d8] sm:$0xff] %v398
                %v400 = vld [vmem:[%s150 + $0xf80] sm:$0xff]
                %401 = vst [vmem:[%s151 + $0x3e0] sm:$0xff] %v400
                %v402 = vld [vmem:[%s150 + $0xf88] sm:$0xff]
                %403 = vst [vmem:[%s151 + $0x3e8] sm:$0xff] %v402
                %v404 = vld [vmem:[%s150 + $0xfc0] sm:$0xff]
                %405 = vst [vmem:[%s151 + $0x3f0] sm:$0xff] %v404
                %v406 = vld [vmem:[%s150 + $0xfc8] sm:$0xff]
                %407 = vst [vmem:[%s151 + $0x3f8] sm:$0xff] %v406
                %v408 = vld [vmem:[%s150 + $0x1000] sm:$0xff]
                %409 = vst [vmem:[%s151 + $0x400] sm:$0xff] %v408
                %v410 = vld [vmem:[%s150 + $0x1008] sm:$0xff]
                %411 = vst [vmem:[%s151 + $0x408] sm:$0xff] %v410
                %v412 = vld [vmem:[%s150 + $0x1040] sm:$0xff]
                %413 = vst [vmem:[%s151 + $0x410] sm:$0xff] %v412
                %v414 = vld [vmem:[%s150 + $0x1048] sm:$0xff]
                %415 = vst [vmem:[%s151 + $0x418] sm:$0xff] %v414
                %v416 = vld [vmem:[%s150 + $0x1080] sm:$0xff]
                %417 = vst [vmem:[%s151 + $0x420] sm:$0xff] %v416
                %v418 = vld [vmem:[%s150 + $0x1088] sm:$0xff]
                %419 = vst [vmem:[%s151 + $0x428] sm:$0xff] %v418
                %v420 = vld [vmem:[%s150 + $0x10c0] sm:$0xff]
                %421 = vst [vmem:[%s151 + $0x430] sm:$0xff] %v420
                %v422 = vld [vmem:[%s150 + $0x10c8] sm:$0xff]
                %423 = vst [vmem:[%s151 + $0x438] sm:$0xff] %v422
                %v424 = vld [vmem:[%s150 + $0x1100] sm:$0xff]
                %425 = vst [vmem:[%s151 + $0x440] sm:$0xff] %v424
                %v426 = vld [vmem:[%s150 + $0x1108] sm:$0xff]
                %427 = vst [vmem:[%s151 + $0x448] sm:$0xff] %v426
                %v428 = vld [vmem:[%s150 + $0x1140] sm:$0xff]
                %429 = vst [vmem:[%s151 + $0x450] sm:$0xff] %v428
                %v430 = vld [vmem:[%s150 + $0x1148] sm:$0xff]
                %431 = vst [vmem:[%s151 + $0x458] sm:$0xff] %v430
                %v432 = vld [vmem:[%s150 + $0x1180] sm:$0xff]
                %433 = vst [vmem:[%s151 + $0x460] sm:$0xff] %v432
                %v434 = vld [vmem:[%s150 + $0x1188] sm:$0xff]
                %435 = vst [vmem:[%s151 + $0x468] sm:$0xff] %v434
                %v436 = vld [vmem:[%s150 + $0x11c0] sm:$0xff]
                %437 = vst [vmem:[%s151 + $0x470] sm:$0xff] %v436
                %v438 = vld [vmem:[%s150 + $0x11c8] sm:$0xff]
                %439 = vst [vmem:[%s151 + $0x478] sm:$0xff] %v438
                %v440 = vld [vmem:[%s150 + $0x1200] sm:$0xff]
                %441 = vst [vmem:[%s151 + $0x480] sm:$0xff] %v440
                %v442 = vld [vmem:[%s150 + $0x1208] sm:$0xff]
                %443 = vst [vmem:[%s151 + $0x488] sm:$0xff] %v442
                %v444 = vld [vmem:[%s150 + $0x1240] sm:$0xff]
                %445 = vst [vmem:[%s151 + $0x490] sm:$0xff] %v444
                %v446 = vld [vmem:[%s150 + $0x1248] sm:$0xff]
                %447 = vst [vmem:[%s151 + $0x498] sm:$0xff] %v446
                %v448 = vld [vmem:[%s150 + $0x1280] sm:$0xff]
                %449 = vst [vmem:[%s151 + $0x4a0] sm:$0xff] %v448
                %v450 = vld [vmem:[%s150 + $0x1288] sm:$0xff]
                %451 = vst [vmem:[%s151 + $0x4a8] sm:$0xff] %v450
                %v452 = vld [vmem:[%s150 + $0x12c0] sm:$0xff]
                %453 = vst [vmem:[%s151 + $0x4b0] sm:$0xff] %v452
                %v454 = vld [vmem:[%s150 + $0x12c8] sm:$0xff]
                %455 = vst [vmem:[%s151 + $0x4b8] sm:$0xff] %v454
                %v456 = vld [vmem:[%s150 + $0x1300] sm:$0xff]
                %457 = vst [vmem:[%s151 + $0x4c0] sm:$0xff] %v456
                %v458 = vld [vmem:[%s150 + $0x1308] sm:$0xff]
                %459 = vst [vmem:[%s151 + $0x4c8] sm:$0xff] %v458
                %v460 = vld [vmem:[%s150 + $0x1340] sm:$0xff]
                %461 = vst [vmem:[%s151 + $0x4d0] sm:$0xff] %v460
                %v462 = vld [vmem:[%s150 + $0x1348] sm:$0xff]
                %463 = vst [vmem:[%s151 + $0x4d8] sm:$0xff] %v462
                %v464 = vld [vmem:[%s150 + $0x1380] sm:$0xff]
                %465 = vst [vmem:[%s151 + $0x4e0] sm:$0xff] %v464
                %v466 = vld [vmem:[%s150 + $0x1388] sm:$0xff]
                %467 = vst [vmem:[%s151 + $0x4e8] sm:$0xff] %v466
                %v468 = vld [vmem:[%s150 + $0x13c0] sm:$0xff]
                %469 = vst [vmem:[%s151 + $0x4f0] sm:$0xff] %v468
                %v470 = vld [vmem:[%s150 + $0x13c8] sm:$0xff]
                %471 = vst [vmem:[%s151 + $0x4f8] sm:$0xff] %v470
                %v472 = vld [vmem:[%s150 + $0x1400] sm:$0xff]
                %473 = vst [vmem:[%s151 + $0x500] sm:$0xff] %v472
                %v474 = vld [vmem:[%s150 + $0x1408] sm:$0xff]
                %475 = vst [vmem:[%s151 + $0x508] sm:$0xff] %v474
                %v476 = vld [vmem:[%s150 + $0x1440] sm:$0xff]
                %477 = vst [vmem:[%s151 + $0x510] sm:$0xff] %v476
                %v478 = vld [vmem:[%s150 + $0x1448] sm:$0xff]
                %479 = vst [vmem:[%s151 + $0x518] sm:$0xff] %v478
                %v480 = vld [vmem:[%s150 + $0x1480] sm:$0xff]
                %481 = vst [vmem:[%s151 + $0x520] sm:$0xff] %v480
                %v482 = vld [vmem:[%s150 + $0x1488] sm:$0xff]
                %483 = vst [vmem:[%s151 + $0x528] sm:$0xff] %v482
                %v484 = vld [vmem:[%s150 + $0x14c0] sm:$0xff]
                %485 = vst [vmem:[%s151 + $0x530] sm:$0xff] %v484
                %v486 = vld [vmem:[%s150 + $0x14c8] sm:$0xff]
                %487 = vst [vmem:[%s151 + $0x538] sm:$0xff] %v486
                %v488 = vld [vmem:[%s150 + $0x1500] sm:$0xff]
                %489 = vst [vmem:[%s151 + $0x540] sm:$0xff] %v488
                %v490 = vld [vmem:[%s150 + $0x1508] sm:$0xff]
                %491 = vst [vmem:[%s151 + $0x548] sm:$0xff] %v490
                %v492 = vld [vmem:[%s150 + $0x1540] sm:$0xff]
                %493 = vst [vmem:[%s151 + $0x550] sm:$0xff] %v492
                %v494 = vld [vmem:[%s150 + $0x1548] sm:$0xff]
                %495 = vst [vmem:[%s151 + $0x558] sm:$0xff] %v494
                %v496 = vld [vmem:[%s150 + $0x1580] sm:$0xff]
                %497 = vst [vmem:[%s151 + $0x560] sm:$0xff] %v496
                %v498 = vld [vmem:[%s150 + $0x1588] sm:$0xff]
                %499 = vst [vmem:[%s151 + $0x568] sm:$0xff] %v498
                %v500 = vld [vmem:[%s150 + $0x15c0] sm:$0xff]
                %501 = vst [vmem:[%s151 + $0x570] sm:$0xff] %v500
                %v502 = vld [vmem:[%s150 + $0x15c8] sm:$0xff]
                %503 = vst [vmem:[%s151 + $0x578] sm:$0xff] %v502
                %v504 = vld [vmem:[%s150 + $0x1600] sm:$0xff]
                %505 = vst [vmem:[%s151 + $0x580] sm:$0xff] %v504
                %v506 = vld [vmem:[%s150 + $0x1608] sm:$0xff]
                %507 = vst [vmem:[%s151 + $0x588] sm:$0xff] %v506
                %v508 = vld [vmem:[%s150 + $0x1640] sm:$0xff]
                %509 = vst [vmem:[%s151 + $0x590] sm:$0xff] %v508
                %v510 = vld [vmem:[%s150 + $0x1648] sm:$0xff]
                %511 = vst [vmem:[%s151 + $0x598] sm:$0xff] %v510
                %v512 = vld [vmem:[%s150 + $0x1680] sm:$0xff]
                %513 = vst [vmem:[%s151 + $0x5a0] sm:$0xff] %v512
                %v514 = vld [vmem:[%s150 + $0x1688] sm:$0xff]
                %515 = vst [vmem:[%s151 + $0x5a8] sm:$0xff] %v514
                %v516 = vld [vmem:[%s150 + $0x16c0] sm:$0xff]
                %517 = vst [vmem:[%s151 + $0x5b0] sm:$0xff] %v516
                %v518 = vld [vmem:[%s150 + $0x16c8] sm:$0xff]
                %519 = vst [vmem:[%s151 + $0x5b8] sm:$0xff] %v518
                %v520 = vld [vmem:[%s150 + $0x1700] sm:$0xff]
                %521 = vst [vmem:[%s151 + $0x5c0] sm:$0xff] %v520
                %v522 = vld [vmem:[%s150 + $0x1708] sm:$0xff]
                %523 = vst [vmem:[%s151 + $0x5c8] sm:$0xff] %v522
                %v524 = vld [vmem:[%s150 + $0x1740] sm:$0xff]
                %525 = vst [vmem:[%s151 + $0x5d0] sm:$0xff] %v524
                %v526 = vld [vmem:[%s150 + $0x1748] sm:$0xff]
                %527 = vst [vmem:[%s151 + $0x5d8] sm:$0xff] %v526
                %v528 = vld [vmem:[%s150 + $0x1780] sm:$0xff]
                %529 = vst [vmem:[%s151 + $0x5e0] sm:$0xff] %v528
                %v530 = vld [vmem:[%s150 + $0x1788] sm:$0xff]
                %531 = vst [vmem:[%s151 + $0x5e8] sm:$0xff] %v530
                %v532 = vld [vmem:[%s150 + $0x17c0] sm:$0xff]
                %533 = vst [vmem:[%s151 + $0x5f0] sm:$0xff] %v532
                %v534 = vld [vmem:[%s150 + $0x17c8] sm:$0xff]
                %535 = vst [vmem:[%s151 + $0x5f8] sm:$0xff] %v534
                %v536 = vld [vmem:[%s150 + $0x1800] sm:$0xff]
                %537 = vst [vmem:[%s151 + $0x600] sm:$0xff] %v536
                %v538 = vld [vmem:[%s150 + $0x1808] sm:$0xff]
                %539 = vst [vmem:[%s151 + $0x608] sm:$0xff] %v538
                %v540 = vld [vmem:[%s150 + $0x1840] sm:$0xff]
                %541 = vst [vmem:[%s151 + $0x610] sm:$0xff] %v540
                %v542 = vld [vmem:[%s150 + $0x1848] sm:$0xff]
                %543 = vst [vmem:[%s151 + $0x618] sm:$0xff] %v542
              $region41: #{autoencoder_cnn_forward.11} parent=35 // loop_footer
                %s149 = sadd.s32 1, %s145
              $region42: #{autoencoder_cnn_forward.11} parent=35 // loop_footer_branch
                %144 = sbr.rel target = $region38
              $region43: #{autoencoder_cnn_forward.11} parent=35 // loop_exit
                _
            $region36: #{autoencoder_cnn_forward.11} parent=31 // pred_fallthru
              _
            // Predicated region
            $region44: #{autoencoder_cnn_forward.11} parent=31 // pred_check
              _
            $region45: #{autoencoder_cnn_forward.11} parent=31 // pred_check_branch
              %545 = sbr.rel target = $region47
            $region46: #{autoencoder_cnn_forward.11} parent=31 // pred_region
              _
            $region47: #{autoencoder_cnn_forward.11} parent=31 // pred_fallthru
              _
          $region32: #{autoencoder_cnn_forward.11} parent=27 // pred_fallthru
            _
          %546 = vnop
        $region28: #{autoencoder_cnn_forward.11} parent=23 // pred_fallthru
          _
      $region24: #{autoencoder_cnn_forward.11} parent=5 // pred_fallthru
        _
      %p547 = scmp.le.s32.totalorder 1, %s11
      %p548 = scmp.lt.s32.totalorder %s11, 5
      %p549 = pnand %p547, %p548
      %p550 = pneg %p549
      // Predicated region
      $region48: #{autoencoder_cnn_forward.11} parent=5 // pred_check
        _
      $region49: #{autoencoder_cnn_forward.11} parent=5 // pred_check_branch
        %552 = sbr.rel (%p549) target = $region51
      $region50: #{autoencoder_cnn_forward.11} parent=5 // pred_region
        %s553 = ssub.s32 %s11, 1
        %s554 = sand.u32 %s45, 1
        %s555 = sand.u32 %s45, 1
        %s556 = smul.addr %s555, 1568
        %s557 = scalar_lea.vmem [#allocation3], %s556
        // Predicated region
        $region52: #{autoencoder_cnn_forward.11} parent=50 // pred_check
          %p558 = pneg %p58
        $region53: #{autoencoder_cnn_forward.11} parent=50 // pred_check_branch
          %560 = sbr.rel (%p558) target = $region55
        $region54: #{autoencoder_cnn_forward.11} parent=50 // pred_region
          _
        $region55: #{autoencoder_cnn_forward.11} parent=50 // pred_fallthru
          _
        %p561 = pneg %p32
        %p562 = pneg %p29
        %s563 = sand.u32 %s45, 1
        %s564 = sand.u32 %s45, 1
        %s565 = smul.addr %s564, 1568
        %s566 = scalar_lea.vmem [#allocation3], %s565
        %p567 = pneg %p58
        %p568 = pneg %p55
        %p569 = pneg %p79
        %p570 = pneg %p76
        %p571 = pneg %p105
        %p572 = pneg %p102
        %s573 = smul.u32 4, %s16
        %p574 = scmp.lt.s32.totalorder %s573, 15
        %s575 = scalar_select %p574, %s573, 15
        %s576 = scalar_lea.vmem %s3, %s575
        %s577 = smul.u32 4, %s16
        %s578 = smul.u32 4, %s16
        %p579 = scmp.lt.s32.totalorder %s578, 15
        %s580 = scalar_select %p579, %s578, 15
        %s581 = scalar_lea.vmem %s3, %s580
        %s582 = smul.u32 4, %s16
        %v584 = vld [vmem:[%s0] sm:$0x7f]
        %v585 = vld [vmem:[%s557] sm:$0xff]
        %v586 = vld [vmem:[%s557 + $0x8] sm:$0xff]
        %v587 = vld [vmem:[%s557 + $0x10] sm:$0xff]
        %v588 = vld [vmem:[%s557 + $0x18] sm:$0xff]
        %v589 = vld [vmem:[%s557 + $0x20] sm:$0xff]
        %v590 = vld [vmem:[%s557 + $0x28] sm:$0xff]
        %v591 = vld [vmem:[%s557 + $0x30] sm:$0xff]
        %v592 = vld [vmem:[%s557 + $0x38] sm:$0xff]
        %v593 = vld [vmem:[%s557 + $0x40] sm:$0xff]
        %v594 = vld [vmem:[%s557 + $0x48] sm:$0xff]
        %v595 = vld [vmem:[%s557 + $0x50] sm:$0xff]
        %v596 = vld [vmem:[%s557 + $0x58] sm:$0xff]
        %v597 = vld [vmem:[%s557 + $0x60] sm:$0xff]
        %v598 = vld [vmem:[%s557 + $0x68] sm:$0xff]
        %v599 = vld [vmem:[%s557 + $0x70] sm:$0xff]
        %v600 = vld [vmem:[%s557 + $0x78] sm:$0xff]
        %v601 = vld [vmem:[%s557 + $0x80] sm:$0xff]
        %v602 = vld [vmem:[%s557 + $0x88] sm:$0xff]
        %v603 = vld [vmem:[%s557 + $0x90] sm:$0xff]
        %v604 = vld [vmem:[%s557 + $0x98] sm:$0xff]
        %v605 = vld [vmem:[%s557 + $0xa0] sm:$0xff]
        %v606 = vld [vmem:[%s557 + $0xa8] sm:$0xff]
        %v607 = vld [vmem:[%s557 + $0xb0] sm:$0xff]
        %v608 = vld [vmem:[%s557 + $0xb8] sm:$0xff]
        %v609 = vld [vmem:[%s557 + $0xc0] sm:$0xff]
        %v610 = vld [vmem:[%s557 + $0xc8] sm:$0xff]
        %v611 = vld [vmem:[%s557 + $0xd0] sm:$0xff]
        %v612 = vld [vmem:[%s557 + $0xd8] sm:$0xff]
        %v613 = vld [vmem:[%s557 + $0xe0] sm:$0xff]
        %v614 = vld [vmem:[%s557 + $0xe8] sm:$0xff]
        %v615 = vld [vmem:[%s557 + $0xf0] sm:$0xff]
        %v616 = vld [vmem:[%s557 + $0xf8] sm:$0xff]
        %v617 = vld [vmem:[%s557 + $0x100] sm:$0xff]
        %v618 = vld [vmem:[%s557 + $0x108] sm:$0xff]
        %v619 = vld [vmem:[%s557 + $0x110] sm:$0xff]
        %v620 = vld [vmem:[%s557 + $0x118] sm:$0xff]
        %v621 = vld [vmem:[%s557 + $0x120] sm:$0xff]
        %v622 = vld [vmem:[%s557 + $0x128] sm:$0xff]
        %v623 = vld [vmem:[%s557 + $0x130] sm:$0xff]
        %v624 = vld [vmem:[%s557 + $0x138] sm:$0xff]
        %v625 = vld [vmem:[%s557 + $0x140] sm:$0xff]
        %v626 = vld [vmem:[%s557 + $0x148] sm:$0xff]
        %v627 = vld [vmem:[%s557 + $0x150] sm:$0xff]
        %v628 = vld [vmem:[%s557 + $0x158] sm:$0xff]
        %v629 = vld [vmem:[%s557 + $0x160] sm:$0xff]
        %v630 = vld [vmem:[%s557 + $0x168] sm:$0xff]
        %v631 = vld [vmem:[%s557 + $0x170] sm:$0xff]
        %v632 = vld [vmem:[%s557 + $0x178] sm:$0xff]
        %v633 = vld [vmem:[%s557 + $0x180] sm:$0xff]
        %v634 = vld [vmem:[%s557 + $0x188] sm:$0xff]
        %v635 = vld [vmem:[%s557 + $0x190] sm:$0xff]
        %v636 = vld [vmem:[%s557 + $0x198] sm:$0xff]
        %v637 = vld [vmem:[%s557 + $0x1a0] sm:$0xff]
        %v638 = vld [vmem:[%s557 + $0x1a8] sm:$0xff]
        %v639 = vld [vmem:[%s557 + $0x1b0] sm:$0xff]
        %v640 = vld [vmem:[%s557 + $0x1b8] sm:$0xff]
        %v641 = vld [vmem:[%s557 + $0x1c0] sm:$0xff]
        %v642 = vld [vmem:[%s557 + $0x1c8] sm:$0xff]
        %v643 = vld [vmem:[%s557 + $0x1d0] sm:$0xff]
        %v644 = vld [vmem:[%s557 + $0x1d8] sm:$0xff]
        %v645 = vld [vmem:[%s557 + $0x1e0] sm:$0xff]
        %v646 = vld [vmem:[%s557 + $0x1e8] sm:$0xff]
        %v647 = vld [vmem:[%s557 + $0x1f0] sm:$0xff]
        %v648 = vld [vmem:[%s557 + $0x1f8] sm:$0xff]
        %v649 = vld [vmem:[%s557 + $0x200] sm:$0xff]
        %v650 = vld [vmem:[%s557 + $0x208] sm:$0xff]
        %v651 = vld [vmem:[%s557 + $0x210] sm:$0xff]
        %v652 = vld [vmem:[%s557 + $0x218] sm:$0xff]
        %v653 = vld [vmem:[%s557 + $0x220] sm:$0xff]
        %v654 = vld [vmem:[%s557 + $0x228] sm:$0xff]
        %v655 = vld [vmem:[%s557 + $0x230] sm:$0xff]
        %v656 = vld [vmem:[%s557 + $0x238] sm:$0xff]
        %v657 = vld [vmem:[%s557 + $0x240] sm:$0xff]
        %v658 = vld [vmem:[%s557 + $0x248] sm:$0xff]
        %v659 = vld [vmem:[%s557 + $0x250] sm:$0xff]
        %v660 = vld [vmem:[%s557 + $0x258] sm:$0xff]
        %v661 = vld [vmem:[%s557 + $0x260] sm:$0xff]
        %v662 = vld [vmem:[%s557 + $0x268] sm:$0xff]
        %v663 = vld [vmem:[%s557 + $0x270] sm:$0xff]
        %v664 = vld [vmem:[%s557 + $0x278] sm:$0xff]
        %v665 = vld [vmem:[%s557 + $0x280] sm:$0xff]
        %v666 = vld [vmem:[%s557 + $0x288] sm:$0xff]
        %v667 = vld [vmem:[%s557 + $0x290] sm:$0xff]
        %v668 = vld [vmem:[%s557 + $0x298] sm:$0xff]
        %v669 = vld [vmem:[%s557 + $0x2a0] sm:$0xff]
        %v670 = vld [vmem:[%s557 + $0x2a8] sm:$0xff]
        %v671 = vld [vmem:[%s557 + $0x2b0] sm:$0xff]
        %v672 = vld [vmem:[%s557 + $0x2b8] sm:$0xff]
        %v673 = vld [vmem:[%s557 + $0x2c0] sm:$0xff]
        %v674 = vld [vmem:[%s557 + $0x2c8] sm:$0xff]
        %v675 = vld [vmem:[%s557 + $0x2d0] sm:$0xff]
        %v676 = vld [vmem:[%s557 + $0x2d8] sm:$0xff]
        %v677 = vld [vmem:[%s557 + $0x2e0] sm:$0xff]
        %v678 = vld [vmem:[%s557 + $0x2e8] sm:$0xff]
        %v679 = vld [vmem:[%s557 + $0x2f0] sm:$0xff]
        %v680 = vld [vmem:[%s557 + $0x2f8] sm:$0xff]
        %v681 = vld [vmem:[%s557 + $0x300] sm:$0xff]
        %v682 = vld [vmem:[%s557 + $0x308] sm:$0xff]
        %v683 = vld [vmem:[%s557 + $0x310] sm:$0xff]
        %v684 = vld [vmem:[%s557 + $0x318] sm:$0xff]
        %v685 = vld [vmem:[%s557 + $0x320] sm:$0xff]
        %v686 = vld [vmem:[%s557 + $0x328] sm:$0xff]
        %v687 = vld [vmem:[%s557 + $0x330] sm:$0xff]
        %v688 = vld [vmem:[%s557 + $0x338] sm:$0xff]
        %v689 = vld [vmem:[%s557 + $0x340] sm:$0xff]
        %v690 = vld [vmem:[%s557 + $0x348] sm:$0xff]
        %v691 = vld [vmem:[%s557 + $0x350] sm:$0xff]
        %v692 = vld [vmem:[%s557 + $0x358] sm:$0xff]
        %v693 = vld [vmem:[%s557 + $0x360] sm:$0xff]
        %v694 = vld [vmem:[%s557 + $0x368] sm:$0xff]
        %v695 = vld [vmem:[%s557 + $0x370] sm:$0xff]
        %v696 = vld [vmem:[%s557 + $0x378] sm:$0xff]
        %v697 = vld [vmem:[%s557 + $0x380] sm:$0xff]
        %v698 = vld [vmem:[%s557 + $0x388] sm:$0xff]
        %v699 = vld [vmem:[%s557 + $0x390] sm:$0xff]
        %v700 = vld [vmem:[%s557 + $0x398] sm:$0xff]
        %v701 = vld [vmem:[%s557 + $0x3a0] sm:$0xff]
        %v702 = vld [vmem:[%s557 + $0x3a8] sm:$0xff]
        %v703 = vld [vmem:[%s557 + $0x3b0] sm:$0xff]
        %v704 = vld [vmem:[%s557 + $0x3b8] sm:$0xff]
        %v705 = vld [vmem:[%s557 + $0x3c0] sm:$0xff]
        %v706 = vld [vmem:[%s557 + $0x3c8] sm:$0xff]
        %v707 = vld [vmem:[%s557 + $0x3d0] sm:$0xff]
        %v708 = vld [vmem:[%s557 + $0x3d8] sm:$0xff]
        %v709 = vld [vmem:[%s557 + $0x3e0] sm:$0xff]
        %v710 = vld [vmem:[%s557 + $0x3e8] sm:$0xff]
        %v711 = vld [vmem:[%s557 + $0x3f0] sm:$0xff]
        %v712 = vld [vmem:[%s557 + $0x3f8] sm:$0xff]
        %v713 = vld [vmem:[%s557 + $0x400] sm:$0xff]
        %v714 = vld [vmem:[%s557 + $0x408] sm:$0xff]
        %v715 = vld [vmem:[%s557 + $0x410] sm:$0xff]
        %v716 = vld [vmem:[%s557 + $0x418] sm:$0xff]
        %v717 = vld [vmem:[%s557 + $0x420] sm:$0xff]
        %v718 = vld [vmem:[%s557 + $0x428] sm:$0xff]
        %v719 = vld [vmem:[%s557 + $0x430] sm:$0xff]
        %v720 = vld [vmem:[%s557 + $0x438] sm:$0xff]
        %v721 = vld [vmem:[%s557 + $0x440] sm:$0xff]
        %v722 = vld [vmem:[%s557 + $0x448] sm:$0xff]
        %v723 = vld [vmem:[%s557 + $0x450] sm:$0xff]
        %v724 = vld [vmem:[%s557 + $0x458] sm:$0xff]
        %v725 = vld [vmem:[%s557 + $0x460] sm:$0xff]
        %v726 = vld [vmem:[%s557 + $0x468] sm:$0xff]
        %v727 = vld [vmem:[%s557 + $0x470] sm:$0xff]
        %v728 = vld [vmem:[%s557 + $0x478] sm:$0xff]
        %v729 = vld [vmem:[%s557 + $0x480] sm:$0xff]
        %v730 = vld [vmem:[%s557 + $0x488] sm:$0xff]
        %v731 = vld [vmem:[%s557 + $0x490] sm:$0xff]
        %v732 = vld [vmem:[%s557 + $0x498] sm:$0xff]
        %v733 = vld [vmem:[%s557 + $0x4a0] sm:$0xff]
        %v734 = vld [vmem:[%s557 + $0x4a8] sm:$0xff]
        %v735 = vld [vmem:[%s557 + $0x4b0] sm:$0xff]
        %v736 = vld [vmem:[%s557 + $0x4b8] sm:$0xff]
        %v737 = vld [vmem:[%s557 + $0x4c0] sm:$0xff]
        %v738 = vld [vmem:[%s557 + $0x4c8] sm:$0xff]
        %v739 = vld [vmem:[%s557 + $0x4d0] sm:$0xff]
        %v740 = vld [vmem:[%s557 + $0x4d8] sm:$0xff]
        %v741 = vld [vmem:[%s557 + $0x4e0] sm:$0xff]
        %v742 = vld [vmem:[%s557 + $0x4e8] sm:$0xff]
        %v743 = vld [vmem:[%s557 + $0x4f0] sm:$0xff]
        %v744 = vld [vmem:[%s557 + $0x4f8] sm:$0xff]
        %v745 = vld [vmem:[%s557 + $0x500] sm:$0xff]
        %v746 = vld [vmem:[%s557 + $0x508] sm:$0xff]
        %v747 = vld [vmem:[%s557 + $0x510] sm:$0xff]
        %v748 = vld [vmem:[%s557 + $0x518] sm:$0xff]
        %v749 = vld [vmem:[%s557 + $0x520] sm:$0xff]
        %v750 = vld [vmem:[%s557 + $0x528] sm:$0xff]
        %v751 = vld [vmem:[%s557 + $0x530] sm:$0xff]
        %v752 = vld [vmem:[%s557 + $0x538] sm:$0xff]
        %v753 = vld [vmem:[%s557 + $0x540] sm:$0xff]
        %v754 = vld [vmem:[%s557 + $0x548] sm:$0xff]
        %v755 = vld [vmem:[%s557 + $0x550] sm:$0xff]
        %v756 = vld [vmem:[%s557 + $0x558] sm:$0xff]
        %v757 = vld [vmem:[%s557 + $0x560] sm:$0xff]
        %v758 = vld [vmem:[%s557 + $0x568] sm:$0xff]
        %v759 = vld [vmem:[%s557 + $0x570] sm:$0xff]
        %v760 = vld [vmem:[%s557 + $0x578] sm:$0xff]
        %v761 = vld [vmem:[%s557 + $0x580] sm:$0xff]
        %v762 = vld [vmem:[%s557 + $0x588] sm:$0xff]
        %v763 = vld [vmem:[%s557 + $0x590] sm:$0xff]
        %v764 = vld [vmem:[%s557 + $0x598] sm:$0xff]
        %v765 = vld [vmem:[%s557 + $0x5a0] sm:$0xff]
        %v766 = vld [vmem:[%s557 + $0x5a8] sm:$0xff]
        %v767 = vld [vmem:[%s557 + $0x5b0] sm:$0xff]
        %v768 = vld [vmem:[%s557 + $0x5b8] sm:$0xff]
        %v769 = vld [vmem:[%s557 + $0x5c0] sm:$0xff]
        %v770 = vld [vmem:[%s557 + $0x5c8] sm:$0xff]
        %v771 = vld [vmem:[%s557 + $0x5d0] sm:$0xff]
        %v772 = vld [vmem:[%s557 + $0x5d8] sm:$0xff]
        %v773 = vld [vmem:[%s557 + $0x5e0] sm:$0xff]
        %v774 = vld [vmem:[%s557 + $0x5e8] sm:$0xff]
        %v775 = vld [vmem:[%s557 + $0x5f0] sm:$0xff]
        %v776 = vld [vmem:[%s557 + $0x5f8] sm:$0xff]
        %v777 = vld [vmem:[%s557 + $0x600] sm:$0xff]
        %v778 = vld [vmem:[%s557 + $0x608] sm:$0xff]
        %v779 = vld [vmem:[%s557 + $0x610] sm:$0xff]
        %v780 = vld [vmem:[%s557 + $0x618] sm:$0xff]
        %v781 = vld [vmem:[#allocation2] sm:$0x1]
        %783 = vset.pattern.permute.xlu0 0
        %784 = vperm.xlu0 %783, %v781
        %v785 = vpop.permute.xlu0 %784
        %v787 = vlaneseq
        %v788 = vshrl.u32 %v787, 7
        %v789 = vsub.s32 0, %v788
        %v790 = vrot.slane %v785, %v789
        %v792 = vcombine.high %v584, %v584
        %v794 = vunpack.c.l.s4 1966171168
        %v795 = vunpack.c.0.s8 %v794
        %v796 = vlaneseq
        %v797 = vshrl.u32 %v796, 7
        %v798 = vsub.s32 %v795, %v797
        %v799 = vrot.slane %v584, %v798
        %v801 = vunpack.c.l.s4 1966171168
        %v802 = vunpack.c.0.s8 %v801
        %v803 = vlaneseq
        %v804 = vshrl.u32 %v803, 7
        %v805 = vsub.s32 %v802, %v804
        %v806 = vrot.slane %v792, %v805
        %v807 = vcombine.high %v799, %v799
        %v808 = vcombine.high %v806, %v806
        %v810 = vunpack.c.l.s4 1966171168
        %v811 = vunpack.c.0.s8 %v810
        %v812 = vlaneseq
        %v813 = vshrl.u32 %v812, 7
        %v814 = vsub.s32 %v811, %v813
        %v815 = vrot.slane %v799, %v814
        %v817 = vunpack.c.l.s4 1966171168
        %v818 = vunpack.c.0.s8 %v817
        %v819 = vlaneseq
        %v820 = vshrl.u32 %v819, 7
        %v821 = vsub.s32 %v818, %v820
        %v822 = vrot.slane %v806, %v821
        %v824 = vunpack.c.l.s4 1966171168
        %v825 = vunpack.c.0.s8 %v824
        %v826 = vlaneseq
        %v827 = vshrl.u32 %v826, 7
        %v828 = vsub.s32 %v825, %v827
        %v829 = vrot.slane %v807, %v828
        %v831 = vunpack.c.l.s4 1966171168
        %v832 = vunpack.c.0.s8 %v831
        %v833 = vlaneseq
        %v834 = vshrl.u32 %v833, 7
        %v835 = vsub.s32 %v832, %v834
        %v836 = vrot.slane %v808, %v835
        %v837 = vcombine.high %v815, %v815
        %v838 = vcombine.high %v822, %v822
        %v839 = vcombine.high %v829, %v829
        %v1042 = vunpack.c.l.b16 %v585
        %v1043 = vunpack.c.h.b16 %v585
        %v1044 = vunpack.c.l.b16 %v586
        %v1045 = vunpack.c.h.b16 %v586
        %v1046 = vunpack.c.l.b16 %v587
        %v1047 = vunpack.c.h.b16 %v587
        %v1048 = vunpack.c.l.b16 %v588
        %v1049 = vunpack.c.h.b16 %v588
        %v1050 = vunpack.c.l.b16 %v589
        %v1051 = vunpack.c.h.b16 %v589
        %v1052 = vunpack.c.l.b16 %v590
        %v1053 = vunpack.c.h.b16 %v590
        %v1054 = vunpack.c.l.b16 %v591
        %v1055 = vunpack.c.h.b16 %v591
        %v1056 = vunpack.c.l.b16 %v592
        %v1057 = vunpack.c.h.b16 %v592
        %v1058 = vunpack.c.l.b16 %v593
        %v1059 = vunpack.c.h.b16 %v593
        %v1060 = vunpack.c.l.b16 %v594
        %v1061 = vunpack.c.h.b16 %v594
        %v1062 = vunpack.c.l.b16 %v595
        %v1063 = vunpack.c.h.b16 %v595
        %v1064 = vunpack.c.l.b16 %v596
        %v1065 = vunpack.c.h.b16 %v596
        %v1066 = vunpack.c.l.b16 %v597
        %v1067 = vunpack.c.h.b16 %v597
        %v1068 = vunpack.c.l.b16 %v598
        %v1069 = vunpack.c.h.b16 %v598
        %v1070 = vunpack.c.l.b16 %v599
        %v1071 = vunpack.c.h.b16 %v599
        %v1072 = vunpack.c.l.b16 %v600
        %v1073 = vunpack.c.h.b16 %v600
        %v1074 = vunpack.c.l.b16 %v601
        %v1075 = vunpack.c.h.b16 %v601
        %v1076 = vunpack.c.l.b16 %v602
        %v1077 = vunpack.c.h.b16 %v602
        %v1078 = vunpack.c.l.b16 %v603
        %v1079 = vunpack.c.h.b16 %v603
        %v1080 = vunpack.c.l.b16 %v604
        %v1081 = vunpack.c.h.b16 %v604
        %v1082 = vunpack.c.l.b16 %v605
        %v1083 = vunpack.c.h.b16 %v605
        %v1084 = vunpack.c.l.b16 %v606
        %v1085 = vunpack.c.h.b16 %v606
        %v1086 = vunpack.c.l.b16 %v607
        %v1087 = vunpack.c.h.b16 %v607
        %v1088 = vunpack.c.l.b16 %v608
        %v1089 = vunpack.c.h.b16 %v608
        %v1090 = vunpack.c.l.b16 %v609
        %v1091 = vunpack.c.h.b16 %v609
        %v1092 = vunpack.c.l.b16 %v610
        %v1093 = vunpack.c.h.b16 %v610
        %v1094 = vunpack.c.l.b16 %v611
        %v1095 = vunpack.c.h.b16 %v611
        %v1096 = vunpack.c.l.b16 %v612
        %v1097 = vunpack.c.h.b16 %v612
        %v1098 = vunpack.c.l.b16 %v613
        %v1099 = vunpack.c.h.b16 %v613
        %v1100 = vunpack.c.l.b16 %v614
        %v1101 = vunpack.c.h.b16 %v614
        %v1102 = vunpack.c.l.b16 %v615
        %v1103 = vunpack.c.h.b16 %v615
        %v1104 = vunpack.c.l.b16 %v616
        %v1105 = vunpack.c.h.b16 %v616
        %v1106 = vunpack.c.l.b16 %v617
        %v1107 = vunpack.c.h.b16 %v617
        %v1108 = vunpack.c.l.b16 %v618
        %v1109 = vunpack.c.h.b16 %v618
        %v1110 = vunpack.c.l.b16 %v619
        %v1111 = vunpack.c.h.b16 %v619
        %v1112 = vunpack.c.l.b16 %v620
        %v1113 = vunpack.c.h.b16 %v620
        %v1114 = vunpack.c.l.b16 %v621
        %v1115 = vunpack.c.h.b16 %v621
        %v1116 = vunpack.c.l.b16 %v622
        %v1117 = vunpack.c.h.b16 %v622
        %v1118 = vunpack.c.l.b16 %v623
        %v1119 = vunpack.c.h.b16 %v623
        %v1120 = vunpack.c.l.b16 %v624
        %v1121 = vunpack.c.h.b16 %v624
        %v1122 = vunpack.c.l.b16 %v625
        %v1123 = vunpack.c.h.b16 %v625
        %v1124 = vunpack.c.l.b16 %v626
        %v1125 = vunpack.c.h.b16 %v626
        %v1126 = vunpack.c.l.b16 %v627
        %v1127 = vunpack.c.h.b16 %v627
        %v1128 = vunpack.c.l.b16 %v628
        %v1129 = vunpack.c.h.b16 %v628
        %v1130 = vunpack.c.l.b16 %v629
        %v1131 = vunpack.c.h.b16 %v629
        %v1132 = vunpack.c.l.b16 %v630
        %v1133 = vunpack.c.h.b16 %v630
        %v1134 = vunpack.c.l.b16 %v631
        %v1135 = vunpack.c.h.b16 %v631
        %v1136 = vunpack.c.l.b16 %v632
        %v1137 = vunpack.c.h.b16 %v632
        %v1138 = vunpack.c.l.b16 %v633
        %v1139 = vunpack.c.h.b16 %v633
        %v1140 = vunpack.c.l.b16 %v634
        %v1141 = vunpack.c.h.b16 %v634
        %v1142 = vunpack.c.l.b16 %v635
        %v1143 = vunpack.c.h.b16 %v635
        %v1144 = vunpack.c.l.b16 %v636
        %v1145 = vunpack.c.h.b16 %v636
        %v1146 = vunpack.c.l.b16 %v637
        %v1147 = vunpack.c.h.b16 %v637
        %v1148 = vunpack.c.l.b16 %v638
        %v1149 = vunpack.c.h.b16 %v638
        %v1150 = vunpack.c.l.b16 %v639
        %v1151 = vunpack.c.h.b16 %v639
        %v1152 = vunpack.c.l.b16 %v640
        %v1153 = vunpack.c.h.b16 %v640
        %v1154 = vunpack.c.l.b16 %v641
        %v1155 = vunpack.c.h.b16 %v641
        %v1156 = vunpack.c.l.b16 %v642
        %v1157 = vunpack.c.h.b16 %v642
        %v1158 = vunpack.c.l.b16 %v643
        %v1159 = vunpack.c.h.b16 %v643
        %v1160 = vunpack.c.l.b16 %v644
        %v1161 = vunpack.c.h.b16 %v644
        %v1162 = vunpack.c.l.b16 %v645
        %v1163 = vunpack.c.h.b16 %v645
        %v1164 = vunpack.c.l.b16 %v646
        %v1165 = vunpack.c.h.b16 %v646
        %v1166 = vunpack.c.l.b16 %v647
        %v1167 = vunpack.c.h.b16 %v647
        %v1168 = vunpack.c.l.b16 %v648
        %v1169 = vunpack.c.h.b16 %v648
        %v1170 = vunpack.c.l.b16 %v649
        %v1171 = vunpack.c.h.b16 %v649
        %v1172 = vunpack.c.l.b16 %v650
        %v1173 = vunpack.c.h.b16 %v650
        %v1174 = vunpack.c.l.b16 %v651
        %v1175 = vunpack.c.h.b16 %v651
        %v1176 = vunpack.c.l.b16 %v652
        %v1177 = vunpack.c.h.b16 %v652
        %v1178 = vunpack.c.l.b16 %v653
        %v1179 = vunpack.c.h.b16 %v653
        %v1180 = vunpack.c.l.b16 %v654
        %v1181 = vunpack.c.h.b16 %v654
        %v1182 = vunpack.c.l.b16 %v655
        %v1183 = vunpack.c.h.b16 %v655
        %v1184 = vunpack.c.l.b16 %v656
        %v1185 = vunpack.c.h.b16 %v656
        %v1186 = vunpack.c.l.b16 %v657
        %v1187 = vunpack.c.h.b16 %v657
        %v1188 = vunpack.c.l.b16 %v658
        %v1189 = vunpack.c.h.b16 %v658
        %v1190 = vunpack.c.l.b16 %v659
        %v1191 = vunpack.c.h.b16 %v659
        %v1192 = vunpack.c.l.b16 %v660
        %v1193 = vunpack.c.h.b16 %v660
        %v1194 = vunpack.c.l.b16 %v661
        %v1195 = vunpack.c.h.b16 %v661
        %v1196 = vunpack.c.l.b16 %v662
        %v1197 = vunpack.c.h.b16 %v662
        %v1198 = vunpack.c.l.b16 %v663
        %v1199 = vunpack.c.h.b16 %v663
        %v1200 = vunpack.c.l.b16 %v664
        %v1201 = vunpack.c.h.b16 %v664
        %v1202 = vunpack.c.l.b16 %v665
        %v1203 = vunpack.c.h.b16 %v665
        %v1204 = vunpack.c.l.b16 %v666
        %v1205 = vunpack.c.h.b16 %v666
        %v1206 = vunpack.c.l.b16 %v667
        %v1207 = vunpack.c.h.b16 %v667
        %v1208 = vunpack.c.l.b16 %v668
        %v1209 = vunpack.c.h.b16 %v668
        %v1210 = vunpack.c.l.b16 %v669
        %v1211 = vunpack.c.h.b16 %v669
        %v1212 = vunpack.c.l.b16 %v670
        %v1213 = vunpack.c.h.b16 %v670
        %v1214 = vunpack.c.l.b16 %v671
        %v1215 = vunpack.c.h.b16 %v671
        %v1216 = vunpack.c.l.b16 %v672
        %v1217 = vunpack.c.h.b16 %v672
        %v1218 = vunpack.c.l.b16 %v673
        %v1219 = vunpack.c.h.b16 %v673
        %v1220 = vunpack.c.l.b16 %v674
        %v1221 = vunpack.c.h.b16 %v674
        %v1222 = vunpack.c.l.b16 %v675
        %v1223 = vunpack.c.h.b16 %v675
        %v1224 = vunpack.c.l.b16 %v676
        %v1225 = vunpack.c.h.b16 %v676
        %v1226 = vunpack.c.l.b16 %v677
        %v1227 = vunpack.c.h.b16 %v677
        %v1228 = vunpack.c.l.b16 %v678
        %v1229 = vunpack.c.h.b16 %v678
        %v1230 = vunpack.c.l.b16 %v679
        %v1231 = vunpack.c.h.b16 %v679
        %v1232 = vunpack.c.l.b16 %v680
        %v1233 = vunpack.c.h.b16 %v680
        %v1234 = vunpack.c.l.b16 %v681
        %v1235 = vunpack.c.h.b16 %v681
        %v1236 = vunpack.c.l.b16 %v682
        %v1237 = vunpack.c.h.b16 %v682
        %v1238 = vunpack.c.l.b16 %v683
        %v1239 = vunpack.c.h.b16 %v683
        %v1240 = vunpack.c.l.b16 %v684
        %v1241 = vunpack.c.h.b16 %v684
        %v1242 = vunpack.c.l.b16 %v685
        %v1243 = vunpack.c.h.b16 %v685
        %v1244 = vunpack.c.l.b16 %v686
        %v1245 = vunpack.c.h.b16 %v686
        %v1246 = vunpack.c.l.b16 %v687
        %v1247 = vunpack.c.h.b16 %v687
        %v1248 = vunpack.c.l.b16 %v688
        %v1249 = vunpack.c.h.b16 %v688
        %v1250 = vunpack.c.l.b16 %v689
        %v1251 = vunpack.c.h.b16 %v689
        %v1252 = vunpack.c.l.b16 %v690
        %v1253 = vunpack.c.h.b16 %v690
        %v1254 = vunpack.c.l.b16 %v691
        %v1255 = vunpack.c.h.b16 %v691
        %v1256 = vunpack.c.l.b16 %v692
        %v1257 = vunpack.c.h.b16 %v692
        %v1258 = vunpack.c.l.b16 %v693
        %v1259 = vunpack.c.h.b16 %v693
        %v1260 = vunpack.c.l.b16 %v694
        %v1261 = vunpack.c.h.b16 %v694
        %v1262 = vunpack.c.l.b16 %v695
        %v1263 = vunpack.c.h.b16 %v695
        %v1264 = vunpack.c.l.b16 %v696
        %v1265 = vunpack.c.h.b16 %v696
        %v1266 = vunpack.c.l.b16 %v697
        %v1267 = vunpack.c.h.b16 %v697
        %v1268 = vunpack.c.l.b16 %v698
        %v1269 = vunpack.c.h.b16 %v698
        %v1270 = vunpack.c.l.b16 %v699
        %v1271 = vunpack.c.h.b16 %v699
        %v1272 = vunpack.c.l.b16 %v700
        %v1273 = vunpack.c.h.b16 %v700
        %v1274 = vunpack.c.l.b16 %v701
        %v1275 = vunpack.c.h.b16 %v701
        %v1276 = vunpack.c.l.b16 %v702
        %v1277 = vunpack.c.h.b16 %v702
        %v1278 = vunpack.c.l.b16 %v703
        %v1279 = vunpack.c.h.b16 %v703
        %v1280 = vunpack.c.l.b16 %v704
        %v1281 = vunpack.c.h.b16 %v704
        %v1282 = vunpack.c.l.b16 %v705
        %v1283 = vunpack.c.h.b16 %v705
        %v1284 = vunpack.c.l.b16 %v706
        %v1285 = vunpack.c.h.b16 %v706
        %v1286 = vunpack.c.l.b16 %v707
        %v1287 = vunpack.c.h.b16 %v707
        %v1288 = vunpack.c.l.b16 %v708
        %v1289 = vunpack.c.h.b16 %v708
        %v1290 = vunpack.c.l.b16 %v709
        %v1291 = vunpack.c.h.b16 %v709
        %v1292 = vunpack.c.l.b16 %v710
        %v1293 = vunpack.c.h.b16 %v710
        %v1294 = vunpack.c.l.b16 %v711
        %v1295 = vunpack.c.h.b16 %v711
        %v1296 = vunpack.c.l.b16 %v712
        %v1297 = vunpack.c.h.b16 %v712
        %v1298 = vunpack.c.l.b16 %v713
        %v1299 = vunpack.c.h.b16 %v713
        %v1300 = vunpack.c.l.b16 %v714
        %v1301 = vunpack.c.h.b16 %v714
        %v1302 = vunpack.c.l.b16 %v715
        %v1303 = vunpack.c.h.b16 %v715
        %v1304 = vunpack.c.l.b16 %v716
        %v1305 = vunpack.c.h.b16 %v716
        %v1306 = vunpack.c.l.b16 %v717
        %v1307 = vunpack.c.h.b16 %v717
        %v1308 = vunpack.c.l.b16 %v718
        %v1309 = vunpack.c.h.b16 %v718
        %v1310 = vunpack.c.l.b16 %v719
        %v1311 = vunpack.c.h.b16 %v719
        %v1312 = vunpack.c.l.b16 %v720
        %v1313 = vunpack.c.h.b16 %v720
        %v1314 = vunpack.c.l.b16 %v721
        %v1315 = vunpack.c.h.b16 %v721
        %v1316 = vunpack.c.l.b16 %v722
        %v1317 = vunpack.c.h.b16 %v722
        %v1318 = vunpack.c.l.b16 %v723
        %v1319 = vunpack.c.h.b16 %v723
        %v1320 = vunpack.c.l.b16 %v724
        %v1321 = vunpack.c.h.b16 %v724
        %v1322 = vunpack.c.l.b16 %v725
        %v1323 = vunpack.c.h.b16 %v725
        %v1324 = vunpack.c.l.b16 %v726
        %v1325 = vunpack.c.h.b16 %v726
        %v1326 = vunpack.c.l.b16 %v727
        %v1327 = vunpack.c.h.b16 %v727
        %v1328 = vunpack.c.l.b16 %v728
        %v1329 = vunpack.c.h.b16 %v728
        %v1330 = vunpack.c.l.b16 %v729
        %v1331 = vunpack.c.h.b16 %v729
        %v1332 = vunpack.c.l.b16 %v730
        %v1333 = vunpack.c.h.b16 %v730
        %v1334 = vunpack.c.l.b16 %v731
        %v1335 = vunpack.c.h.b16 %v731
        %v1336 = vunpack.c.l.b16 %v732
        %v1337 = vunpack.c.h.b16 %v732
        %v1338 = vunpack.c.l.b16 %v733
        %v1339 = vunpack.c.h.b16 %v733
        %v1340 = vunpack.c.l.b16 %v734
        %v1341 = vunpack.c.h.b16 %v734
        %v1342 = vunpack.c.l.b16 %v735
        %v1343 = vunpack.c.h.b16 %v735
        %v1344 = vunpack.c.l.b16 %v736
        %v1345 = vunpack.c.h.b16 %v736
        %v1346 = vunpack.c.l.b16 %v737
        %v1347 = vunpack.c.h.b16 %v737
        %v1348 = vunpack.c.l.b16 %v738
        %v1349 = vunpack.c.h.b16 %v738
        %v1350 = vunpack.c.l.b16 %v739
        %v1351 = vunpack.c.h.b16 %v739
        %v1352 = vunpack.c.l.b16 %v740
        %v1353 = vunpack.c.h.b16 %v740
        %v1354 = vunpack.c.l.b16 %v741
        %v1355 = vunpack.c.h.b16 %v741
        %v1356 = vunpack.c.l.b16 %v742
        %v1357 = vunpack.c.h.b16 %v742
        %v1358 = vunpack.c.l.b16 %v743
        %v1359 = vunpack.c.h.b16 %v743
        %v1360 = vunpack.c.l.b16 %v744
        %v1361 = vunpack.c.h.b16 %v744
        %v1362 = vunpack.c.l.b16 %v745
        %v1363 = vunpack.c.h.b16 %v745
        %v1364 = vunpack.c.l.b16 %v746
        %v1365 = vunpack.c.h.b16 %v746
        %v1366 = vunpack.c.l.b16 %v747
        %v1367 = vunpack.c.h.b16 %v747
        %v1368 = vunpack.c.l.b16 %v748
        %v1369 = vunpack.c.h.b16 %v748
        %v1370 = vunpack.c.l.b16 %v749
        %v1371 = vunpack.c.h.b16 %v749
        %v1372 = vunpack.c.l.b16 %v750
        %v1373 = vunpack.c.h.b16 %v750
        %v1374 = vunpack.c.l.b16 %v751
        %v1375 = vunpack.c.h.b16 %v751
        %v1376 = vunpack.c.l.b16 %v752
        %v1377 = vunpack.c.h.b16 %v752
        %v1378 = vunpack.c.l.b16 %v753
        %v1379 = vunpack.c.h.b16 %v753
        %v1380 = vunpack.c.l.b16 %v754
        %v1381 = vunpack.c.h.b16 %v754
        %v1382 = vunpack.c.l.b16 %v755
        %v1383 = vunpack.c.h.b16 %v755
        %v1384 = vunpack.c.l.b16 %v756
        %v1385 = vunpack.c.h.b16 %v756
        %v1386 = vunpack.c.l.b16 %v757
        %v1387 = vunpack.c.h.b16 %v757
        %v1388 = vunpack.c.l.b16 %v758
        %v1389 = vunpack.c.h.b16 %v758
        %v1390 = vunpack.c.l.b16 %v759
        %v1391 = vunpack.c.h.b16 %v759
        %v1392 = vunpack.c.l.b16 %v760
        %v1393 = vunpack.c.h.b16 %v760
        %v1394 = vunpack.c.l.b16 %v761
        %v1395 = vunpack.c.h.b16 %v761
        %v1396 = vunpack.c.l.b16 %v762
        %v1397 = vunpack.c.h.b16 %v762
        %v1398 = vunpack.c.l.b16 %v763
        %v1399 = vunpack.c.h.b16 %v763
        %v1400 = vunpack.c.l.b16 %v764
        %v1401 = vunpack.c.h.b16 %v764
        %v1402 = vunpack.c.l.b16 %v765
        %v1403 = vunpack.c.h.b16 %v765
        %v1404 = vunpack.c.l.b16 %v766
        %v1405 = vunpack.c.h.b16 %v766
        %v1406 = vunpack.c.l.b16 %v767
        %v1407 = vunpack.c.h.b16 %v767
        %v1408 = vunpack.c.l.b16 %v768
        %v1409 = vunpack.c.h.b16 %v768
        %v1410 = vunpack.c.l.b16 %v769
        %v1411 = vunpack.c.h.b16 %v769
        %v1412 = vunpack.c.l.b16 %v770
        %v1413 = vunpack.c.h.b16 %v770
        %v1414 = vunpack.c.l.b16 %v771
        %v1415 = vunpack.c.h.b16 %v771
        %v1416 = vunpack.c.l.b16 %v772
        %v1417 = vunpack.c.h.b16 %v772
        %v1418 = vunpack.c.l.b16 %v773
        %v1419 = vunpack.c.h.b16 %v773
        %v1420 = vunpack.c.l.b16 %v774
        %v1421 = vunpack.c.h.b16 %v774
        %v1422 = vunpack.c.l.b16 %v775
        %v1423 = vunpack.c.h.b16 %v775
        %v1424 = vunpack.c.l.b16 %v776
        %v1425 = vunpack.c.h.b16 %v776
        %v1426 = vunpack.c.l.b16 %v777
        %v1427 = vunpack.c.h.b16 %v777
        %v1428 = vunpack.c.l.b16 %v778
        %v1429 = vunpack.c.h.b16 %v778
        %v1430 = vunpack.c.l.b16 %v779
        %v1431 = vunpack.c.h.b16 %v779
        %v1432 = vunpack.c.l.b16 %v780
        %v1433 = vunpack.c.h.b16 %v780
        %v1434 = vpack.c.b16 %v1046, %v1042
        %v1435 = vpack.c.b16 %v1047, %v1043
        %v1436 = vpack.c.b16 %v1048, %v1044
        %v1437 = vpack.c.b16 %v1049, %v1045
        %v1438 = vpack.c.b16 %v1054, %v1050
        %v1439 = vpack.c.b16 %v1055, %v1051
        %v1440 = vpack.c.b16 %v1056, %v1052
        %v1441 = vpack.c.b16 %v1057, %v1053
        %v1442 = vpack.c.b16 %v1062, %v1058
        %v1443 = vpack.c.b16 %v1063, %v1059
        %v1444 = vpack.c.b16 %v1064, %v1060
        %v1445 = vpack.c.b16 %v1065, %v1061
        %v1446 = vpack.c.b16 %v1070, %v1066
        %v1447 = vpack.c.b16 %v1071, %v1067
        %v1448 = vpack.c.b16 %v1072, %v1068
        %v1449 = vpack.c.b16 %v1073, %v1069
        %v1450 = vpack.c.b16 %v1078, %v1074
        %v1451 = vpack.c.b16 %v1079, %v1075
        %v1452 = vpack.c.b16 %v1080, %v1076
        %v1453 = vpack.c.b16 %v1081, %v1077
        %v1454 = vpack.c.b16 %v1086, %v1082
        %v1455 = vpack.c.b16 %v1087, %v1083
        %v1456 = vpack.c.b16 %v1088, %v1084
        %v1457 = vpack.c.b16 %v1089, %v1085
        %v1458 = vpack.c.b16 %v1094, %v1090
        %v1459 = vpack.c.b16 %v1095, %v1091
        %v1460 = vpack.c.b16 %v1096, %v1092
        %v1461 = vpack.c.b16 %v1097, %v1093
        %v1462 = vpack.c.b16 %v1102, %v1098
        %v1463 = vpack.c.b16 %v1103, %v1099
        %v1464 = vpack.c.b16 %v1104, %v1100
        %v1465 = vpack.c.b16 %v1105, %v1101
        %v1466 = vpack.c.b16 %v1110, %v1106
        %v1467 = vpack.c.b16 %v1111, %v1107
        %v1468 = vpack.c.b16 %v1112, %v1108
        %v1469 = vpack.c.b16 %v1113, %v1109
        %v1470 = vpack.c.b16 %v1118, %v1114
        %v1471 = vpack.c.b16 %v1119, %v1115
        %v1472 = vpack.c.b16 %v1120, %v1116
        %v1473 = vpack.c.b16 %v1121, %v1117
        %v1474 = vpack.c.b16 %v1126, %v1122
        %v1475 = vpack.c.b16 %v1127, %v1123
        %v1476 = vpack.c.b16 %v1128, %v1124
        %v1477 = vpack.c.b16 %v1129, %v1125
        %v1478 = vpack.c.b16 %v1134, %v1130
        %v1479 = vpack.c.b16 %v1135, %v1131
        %v1480 = vpack.c.b16 %v1136, %v1132
        %v1481 = vpack.c.b16 %v1137, %v1133
        %v1482 = vpack.c.b16 %v1142, %v1138
        %v1483 = vpack.c.b16 %v1143, %v1139
        %v1484 = vpack.c.b16 %v1144, %v1140
        %v1485 = vpack.c.b16 %v1145, %v1141
        %v1486 = vpack.c.b16 %v1150, %v1146
        %v1487 = vpack.c.b16 %v1151, %v1147
        %v1488 = vpack.c.b16 %v1152, %v1148
        %v1489 = vpack.c.b16 %v1153, %v1149
        %v1490 = vpack.c.b16 %v1158, %v1154
        %v1491 = vpack.c.b16 %v1159, %v1155
        %v1492 = vpack.c.b16 %v1160, %v1156
        %v1493 = vpack.c.b16 %v1161, %v1157
        %v1494 = vpack.c.b16 %v1166, %v1162
        %v1495 = vpack.c.b16 %v1167, %v1163
        %v1496 = vpack.c.b16 %v1168, %v1164
        %v1497 = vpack.c.b16 %v1169, %v1165
        %v1498 = vpack.c.b16 %v1174, %v1170
        %v1499 = vpack.c.b16 %v1175, %v1171
        %v1500 = vpack.c.b16 %v1176, %v1172
        %v1501 = vpack.c.b16 %v1177, %v1173
        %v1502 = vpack.c.b16 %v1182, %v1178
        %v1503 = vpack.c.b16 %v1183, %v1179
        %v1504 = vpack.c.b16 %v1184, %v1180
        %v1505 = vpack.c.b16 %v1185, %v1181
        %v1506 = vpack.c.b16 %v1190, %v1186
        %v1507 = vpack.c.b16 %v1191, %v1187
        %v1508 = vpack.c.b16 %v1192, %v1188
        %v1509 = vpack.c.b16 %v1193, %v1189
        %v1510 = vpack.c.b16 %v1198, %v1194
        %v1511 = vpack.c.b16 %v1199, %v1195
        %v1512 = vpack.c.b16 %v1200, %v1196
        %v1513 = vpack.c.b16 %v1201, %v1197
        %v1514 = vpack.c.b16 %v1206, %v1202
        %v1515 = vpack.c.b16 %v1207, %v1203
        %v1516 = vpack.c.b16 %v1208, %v1204
        %v1517 = vpack.c.b16 %v1209, %v1205
        %v1518 = vpack.c.b16 %v1214, %v1210
        %v1519 = vpack.c.b16 %v1215, %v1211
        %v1520 = vpack.c.b16 %v1216, %v1212
        %v1521 = vpack.c.b16 %v1217, %v1213
        %v1522 = vpack.c.b16 %v1222, %v1218
        %v1523 = vpack.c.b16 %v1223, %v1219
        %v1524 = vpack.c.b16 %v1224, %v1220
        %v1525 = vpack.c.b16 %v1225, %v1221
        %v1526 = vpack.c.b16 %v1230, %v1226
        %v1527 = vpack.c.b16 %v1231, %v1227
        %v1528 = vpack.c.b16 %v1232, %v1228
        %v1529 = vpack.c.b16 %v1233, %v1229
        %v1530 = vpack.c.b16 %v1238, %v1234
        %v1531 = vpack.c.b16 %v1239, %v1235
        %v1532 = vpack.c.b16 %v1240, %v1236
        %v1533 = vpack.c.b16 %v1241, %v1237
        %v1534 = vpack.c.b16 %v1246, %v1242
        %v1535 = vpack.c.b16 %v1247, %v1243
        %v1536 = vpack.c.b16 %v1248, %v1244
        %v1537 = vpack.c.b16 %v1249, %v1245
        %v1538 = vpack.c.b16 %v1254, %v1250
        %v1539 = vpack.c.b16 %v1255, %v1251
        %v1540 = vpack.c.b16 %v1256, %v1252
        %v1541 = vpack.c.b16 %v1257, %v1253
        %v1542 = vpack.c.b16 %v1262, %v1258
        %v1543 = vpack.c.b16 %v1263, %v1259
        %v1544 = vpack.c.b16 %v1264, %v1260
        %v1545 = vpack.c.b16 %v1265, %v1261
        %v1546 = vpack.c.b16 %v1270, %v1266
        %v1547 = vpack.c.b16 %v1271, %v1267
        %v1548 = vpack.c.b16 %v1272, %v1268
        %v1549 = vpack.c.b16 %v1273, %v1269
        %v1550 = vpack.c.b16 %v1278, %v1274
        %v1551 = vpack.c.b16 %v1279, %v1275
        %v1552 = vpack.c.b16 %v1280, %v1276
        %v1553 = vpack.c.b16 %v1281, %v1277
        %v1554 = vpack.c.b16 %v1286, %v1282
        %v1555 = vpack.c.b16 %v1287, %v1283
        %v1556 = vpack.c.b16 %v1288, %v1284
        %v1557 = vpack.c.b16 %v1289, %v1285
        %v1558 = vpack.c.b16 %v1294, %v1290
        %v1559 = vpack.c.b16 %v1295, %v1291
        %v1560 = vpack.c.b16 %v1296, %v1292
        %v1561 = vpack.c.b16 %v1297, %v1293
        %v1562 = vpack.c.b16 %v1302, %v1298
        %v1563 = vpack.c.b16 %v1303, %v1299
        %v1564 = vpack.c.b16 %v1304, %v1300
        %v1565 = vpack.c.b16 %v1305, %v1301
        %v1566 = vpack.c.b16 %v1310, %v1306
        %v1567 = vpack.c.b16 %v1311, %v1307
        %v1568 = vpack.c.b16 %v1312, %v1308
        %v1569 = vpack.c.b16 %v1313, %v1309
        %v1570 = vpack.c.b16 %v1318, %v1314
        %v1571 = vpack.c.b16 %v1319, %v1315
        %v1572 = vpack.c.b16 %v1320, %v1316
        %v1573 = vpack.c.b16 %v1321, %v1317
        %v1574 = vpack.c.b16 %v1326, %v1322
        %v1575 = vpack.c.b16 %v1327, %v1323
        %v1576 = vpack.c.b16 %v1328, %v1324
        %v1577 = vpack.c.b16 %v1329, %v1325
        %v1578 = vpack.c.b16 %v1334, %v1330
        %v1579 = vpack.c.b16 %v1335, %v1331
        %v1580 = vpack.c.b16 %v1336, %v1332
        %v1581 = vpack.c.b16 %v1337, %v1333
        %v1582 = vpack.c.b16 %v1342, %v1338
        %v1583 = vpack.c.b16 %v1343, %v1339
        %v1584 = vpack.c.b16 %v1344, %v1340
        %v1585 = vpack.c.b16 %v1345, %v1341
        %v1586 = vpack.c.b16 %v1350, %v1346
        %v1587 = vpack.c.b16 %v1351, %v1347
        %v1588 = vpack.c.b16 %v1352, %v1348
        %v1589 = vpack.c.b16 %v1353, %v1349
        %v1590 = vpack.c.b16 %v1358, %v1354
        %v1591 = vpack.c.b16 %v1359, %v1355
        %v1592 = vpack.c.b16 %v1360, %v1356
        %v1593 = vpack.c.b16 %v1361, %v1357
        %v1594 = vpack.c.b16 %v1366, %v1362
        %v1595 = vpack.c.b16 %v1367, %v1363
        %v1596 = vpack.c.b16 %v1368, %v1364
        %v1597 = vpack.c.b16 %v1369, %v1365
        %v1598 = vpack.c.b16 %v1374, %v1370
        %v1599 = vpack.c.b16 %v1375, %v1371
        %v1600 = vpack.c.b16 %v1376, %v1372
        %v1601 = vpack.c.b16 %v1377, %v1373
        %v1602 = vpack.c.b16 %v1382, %v1378
        %v1603 = vpack.c.b16 %v1383, %v1379
        %v1604 = vpack.c.b16 %v1384, %v1380
        %v1605 = vpack.c.b16 %v1385, %v1381
        %v1606 = vpack.c.b16 %v1390, %v1386
        %v1607 = vpack.c.b16 %v1391, %v1387
        %v1608 = vpack.c.b16 %v1392, %v1388
        %v1609 = vpack.c.b16 %v1393, %v1389
        %v1610 = vpack.c.b16 %v1398, %v1394
        %v1611 = vpack.c.b16 %v1399, %v1395
        %v1612 = vpack.c.b16 %v1400, %v1396
        %v1613 = vpack.c.b16 %v1401, %v1397
        %v1614 = vpack.c.b16 %v1406, %v1402
        %v1615 = vpack.c.b16 %v1407, %v1403
        %v1616 = vpack.c.b16 %v1408, %v1404
        %v1617 = vpack.c.b16 %v1409, %v1405
        %v1618 = vpack.c.b16 %v1414, %v1410
        %v1619 = vpack.c.b16 %v1415, %v1411
        %v1620 = vpack.c.b16 %v1416, %v1412
        %v1621 = vpack.c.b16 %v1417, %v1413
        %v1622 = vpack.c.b16 %v1422, %v1418
        %v1623 = vpack.c.b16 %v1423, %v1419
        %v1624 = vpack.c.b16 %v1424, %v1420
        %v1625 = vpack.c.b16 %v1425, %v1421
        %v1626 = vpack.c.b16 %v1430, %v1426
        %v1627 = vpack.c.b16 %v1431, %v1427
        %v1628 = vpack.c.b16 %v1432, %v1428
        %v1629 = vpack.c.b16 %v1433, %v1429
        %vm1826 = vcmask 130048
        %v1828 = vsel %vm1826, %v838, 0
        %1830 = vmatprep.subr.bf16.mxu0 %v1435
        %1831 = vmatpush1.bf16.msra.mxu0 %v1434
        %1832 = vmatprep.subr.bf16.mxu0 %v1439
        %1833 = vmatpush1.bf16.msra.mxu0 %v1438
        %1834 = vmatprep.subr.bf16.mxu0 %v1443
        %1835 = vmatpush1.bf16.msra.mxu0 %v1442
        %1836 = vmatprep.subr.bf16.mxu0 %v1447
        %1837 = vmatpush1.bf16.msra.mxu0 %v1446
        %1838 = vmatprep.subr.bf16.mxu0 %v1451
        %1839 = vmatpush1.bf16.msra.mxu0 %v1450
        %1840 = vmatprep.subr.bf16.mxu0 %v1455
        %1841 = vmatpush1.bf16.msra.mxu0 %v1454
        %1842 = vmatprep.subr.bf16.mxu0 %v1459
        %1843 = vmatpush1.bf16.msra.mxu0 %v1458
        %1844 = vmatprep.subr.bf16.mxu0 %v1463
        %1845 = vmatpush1.bf16.msra.mxu0 %v1462
        %1846 = vmatprep.subr.bf16.mxu0 %v1467
        %1847 = vmatpush1.bf16.msra.mxu0 %v1466
        %1848 = vmatprep.subr.bf16.mxu0 %v1471
        %1849 = vmatpush1.bf16.msra.mxu0 %v1470
        %1850 = vmatprep.subr.bf16.mxu0 %v1475
        %1851 = vmatpush1.bf16.msra.mxu0 %v1474
        %1852 = vmatprep.subr.bf16.mxu0 %v1479
        %1853 = vmatpush1.bf16.msra.mxu0 %v1478
        %1854 = vmatprep.subr.bf16.mxu0 %v1483
        %1855 = vmatpush1.bf16.msra.mxu0 %v1482
        %1856 = vmatprep.subr.bf16.mxu0 %v1487
        %1857 = vmatpush1.bf16.msra.mxu0 %v1486
        %1858 = vmatprep.subr.bf16.mxu0 %v1491
        %1859 = vmatpush1.bf16.msra.mxu0 %v1490
        %1860 = vmatprep.subr.bf16.mxu0 %v1495
        %1861 = vmatpush1.bf16.msra.mxu0 %v1494
        %1862 = vmatprep.mubr.bf16.mxu0 %v829
        %1863 = vmatmul.mubr.bf16.gmra.mrb[0].mxu0 %v815
        %v1864 = vpop.f32.mrb[0].mxu0
        %v1865 = vadd.f32 %v790, %v1864
        %v1866 = vpop.f32.mrb[0].mxu0
        %v1867 = vadd.f32 %v790, %v1866
        %v1868 = vpop.f32.mrb[0].mxu0
        %v1869 = vpop.f32.mrb[0].mxu0
        %1870 = vdwg.mxu0
        %1871 = vmatprep.subr.bf16.mxu0 %v1499
        %1872 = vmatpush1.bf16.msra.mxu0 %v1498
        %1873 = vmatprep.subr.bf16.mxu0 %v1503
        %1874 = vmatpush1.bf16.msra.mxu0 %v1502
        %1875 = vmatprep.subr.bf16.mxu0 %v1507
        %1876 = vmatpush1.bf16.msra.mxu0 %v1506
        %1877 = vmatprep.subr.bf16.mxu0 %v1511
        %1878 = vmatpush1.bf16.msra.mxu0 %v1510
        %1879 = vmatprep.subr.bf16.mxu0 %v1515
        %1880 = vmatpush1.bf16.msra.mxu0 %v1514
        %1881 = vmatprep.subr.bf16.mxu0 %v1519
        %1882 = vmatpush1.bf16.msra.mxu0 %v1518
        %1883 = vmatprep.subr.bf16.mxu0 %v1523
        %1884 = vmatpush1.bf16.msra.mxu0 %v1522
        %1885 = vmatprep.subr.bf16.mxu0 %v1527
        %1886 = vmatpush1.bf16.msra.mxu0 %v1526
        %1887 = vmatprep.subr.bf16.mxu0 %v1531
        %1888 = vmatpush1.bf16.msra.mxu0 %v1530
        %1889 = vmatprep.subr.bf16.mxu0 %v1535
        %1890 = vmatpush1.bf16.msra.mxu0 %v1534
        %1891 = vmatprep.subr.bf16.mxu0 %v1539
        %1892 = vmatpush1.bf16.msra.mxu0 %v1538
        %1893 = vmatprep.subr.bf16.mxu0 %v1543
        %1894 = vmatpush1.bf16.msra.mxu0 %v1542
        %1895 = vmatprep.subr.bf16.mxu0 %v1547
        %1896 = vmatpush1.bf16.msra.mxu0 %v1546
        %1897 = vmatprep.subr.bf16.mxu0 %v1551
        %1898 = vmatpush1.bf16.msra.mxu0 %v1550
        %1899 = vmatprep.subr.bf16.mxu0 %v1555
        %1900 = vmatpush1.bf16.msra.mxu0 %v1554
        %1901 = vmatprep.subr.bf16.mxu0 %v1559
        %1902 = vmatpush1.bf16.msra.mxu0 %v1558
        %1903 = vmatprep.mubr.bf16.mxu0 %v839
        %1904 = vmatmul.mubr.bf16.gmra.mrb[0].mxu0 %v837
        %v1905 = vpop.f32.mrb[0].mxu0
        %v1906 = vadd.f32 %v1865, %v1905
        %v1907 = vpop.f32.mrb[0].mxu0
        %v1908 = vadd.f32 %v1867, %v1907
        %v1909 = vpop.f32.mrb[0].mxu0
        %v1910 = vpop.f32.mrb[0].mxu0
        %1911 = vdwg.mxu0
        %1912 = vmatprep.subr.bf16.mxu0 %v1563
        %1913 = vmatpush1.bf16.msra.mxu0 %v1562
        %1914 = vmatprep.subr.bf16.mxu0 %v1567
        %1915 = vmatpush1.bf16.msra.mxu0 %v1566
        %1916 = vmatprep.subr.bf16.mxu0 %v1571
        %1917 = vmatpush1.bf16.msra.mxu0 %v1570
        %1918 = vmatprep.subr.bf16.mxu0 %v1575
        %1919 = vmatpush1.bf16.msra.mxu0 %v1574
        %1920 = vmatprep.subr.bf16.mxu0 %v1579
        %1921 = vmatpush1.bf16.msra.mxu0 %v1578
        %1922 = vmatprep.subr.bf16.mxu0 %v1583
        %1923 = vmatpush1.bf16.msra.mxu0 %v1582
        %1924 = vmatprep.subr.bf16.mxu0 %v1587
        %1925 = vmatpush1.bf16.msra.mxu0 %v1586
        %1926 = vmatprep.subr.bf16.mxu0 %v1591
        %1927 = vmatpush1.bf16.msra.mxu0 %v1590
        %1928 = vmatprep.subr.bf16.mxu0 %v1595
        %1929 = vmatpush1.bf16.msra.mxu0 %v1594
        %1930 = vmatprep.subr.bf16.mxu0 %v1599
        %1931 = vmatpush1.bf16.msra.mxu0 %v1598
        %1932 = vmatprep.subr.bf16.mxu0 %v1603
        %1933 = vmatpush1.bf16.msra.mxu0 %v1602
        %1934 = vmatprep.subr.bf16.mxu0 %v1607
        %1935 = vmatpush1.bf16.msra.mxu0 %v1606
        %1936 = vmatprep.subr.bf16.mxu0 %v1611
        %1937 = vmatpush1.bf16.msra.mxu0 %v1610
        %1938 = vmatprep.subr.bf16.mxu0 %v1615
        %1939 = vmatpush1.bf16.msra.mxu0 %v1614
        %1940 = vmatprep.subr.bf16.mxu0 %v1619
        %1941 = vmatpush1.bf16.msra.mxu0 %v1618
        %1942 = vmatprep.subr.bf16.mxu0 %v1623
        %1943 = vmatpush1.bf16.msra.mxu0 %v1622
        %1944 = vmatprep.mubr.bf16.mxu0 %v836
        %1945 = vmatmul.mubr.bf16.gmra.mrb[0].mxu0 %v822
        %v1946 = vpop.f32.mrb[0].mxu0
        %v1947 = vadd.f32 %v1906, %v1946
        %v1948 = vpop.f32.mrb[0].mxu0
        %v1949 = vadd.f32 %v1908, %v1948
        %v1950 = vpop.f32.mrb[0].mxu0
        %v1951 = vpop.f32.mrb[0].mxu0
        %1952 = vdwg.mxu0
        %1953 = vmatprep.subr.bf16.mxu0 %v1627
        %1954 = vmatpush1.bf16.msra.mxu0 %v1626
        %1955 = vmatprep.subr.bf16.mxu0 0
        %1956 = vmatpush1.bf16.msra.mxu0 0
        %1957 = vmatprep.subr.bf16.mxu0 0
        %1958 = vmatpush1.bf16.msra.mxu0 0
        %1959 = vmatprep.subr.bf16.mxu0 0
        %1960 = vmatpush1.bf16.msra.mxu0 0
        %1961 = vmatprep.subr.bf16.mxu0 0
        %1962 = vmatpush1.bf16.msra.mxu0 0
        %1963 = vmatprep.subr.bf16.mxu0 0
        %1964 = vmatpush1.bf16.msra.mxu0 0
        %1965 = vmatprep.subr.bf16.mxu0 0
        %1966 = vmatpush1.bf16.msra.mxu0 0
        %1967 = vmatprep.subr.bf16.mxu0 0
        %1968 = vmatpush1.bf16.msra.mxu0 0
        %1969 = vmatprep.subr.bf16.mxu0 0
        %1970 = vmatpush1.bf16.msra.mxu0 0
        %1971 = vmatprep.subr.bf16.mxu0 0
        %1972 = vmatpush1.bf16.msra.mxu0 0
        %1973 = vmatprep.subr.bf16.mxu0 0
        %1974 = vmatpush1.bf16.msra.mxu0 0
        %1975 = vmatprep.subr.bf16.mxu0 0
        %1976 = vmatpush1.bf16.msra.mxu0 0
        %1977 = vmatprep.subr.bf16.mxu0 0
        %1978 = vmatpush1.bf16.msra.mxu0 0
        %1979 = vmatprep.subr.bf16.mxu0 0
        %1980 = vmatpush1.bf16.msra.mxu0 0
        %1981 = vmatprep.subr.bf16.mxu0 0
        %1982 = vmatpush1.bf16.msra.mxu0 0
        %1983 = vmatprep.subr.bf16.mxu0 0
        %1984 = vmatpush1.bf16.msra.mxu0 0
        %1985 = vmatprep.mubr.bf16.mxu0 0
        %1986 = vmatmul.mubr.bf16.gmra.mrb[0].mxu0 %v1828
        %v1987 = vpop.f32.mrb[0].mxu0
        %v1988 = vadd.f32 %v1947, %v1987
        %v1989 = vpop.f32.mrb[0].mxu0
        %v1990 = vadd.f32 %v1949, %v1989
        %v1991 = vpop.f32.mrb[0].mxu0
        %v1992 = vpop.f32.mrb[0].mxu0
        %1993 = vdwg.mxu0
        %1994 = vmatprep.subr.bf16.mxu0 %v1437
        %1995 = vmatpush1.bf16.msra.mxu0 %v1436
        %1996 = vmatprep.subr.bf16.mxu0 %v1441
        %1997 = vmatpush1.bf16.msra.mxu0 %v1440
        %1998 = vmatprep.subr.bf16.mxu0 %v1445
        %1999 = vmatpush1.bf16.msra.mxu0 %v1444
        %2000 = vmatprep.subr.bf16.mxu0 %v1449
        %2001 = vmatpush1.bf16.msra.mxu0 %v1448
        %2002 = vmatprep.subr.bf16.mxu0 %v1453
        %2003 = vmatpush1.bf16.msra.mxu0 %v1452
        %2004 = vmatprep.subr.bf16.mxu0 %v1457
        %2005 = vmatpush1.bf16.msra.mxu0 %v1456
        %2006 = vmatprep.subr.bf16.mxu0 %v1461
        %2007 = vmatpush1.bf16.msra.mxu0 %v1460
        %2008 = vmatprep.subr.bf16.mxu0 %v1465
        %2009 = vmatpush1.bf16.msra.mxu0 %v1464
        %2010 = vmatprep.subr.bf16.mxu0 %v1469
        %2011 = vmatpush1.bf16.msra.mxu0 %v1468
        %2012 = vmatprep.subr.bf16.mxu0 %v1473
        %2013 = vmatpush1.bf16.msra.mxu0 %v1472
        %2014 = vmatprep.subr.bf16.mxu0 %v1477
        %2015 = vmatpush1.bf16.msra.mxu0 %v1476
        %2016 = vmatprep.subr.bf16.mxu0 %v1481
        %2017 = vmatpush1.bf16.msra.mxu0 %v1480
        %2018 = vmatprep.subr.bf16.mxu0 %v1485
        %2019 = vmatpush1.bf16.msra.mxu0 %v1484
        %2020 = vmatprep.subr.bf16.mxu0 %v1489
        %2021 = vmatpush1.bf16.msra.mxu0 %v1488
        %2022 = vmatprep.subr.bf16.mxu0 %v1493
        %2023 = vmatpush1.bf16.msra.mxu0 %v1492
        %2024 = vmatprep.subr.bf16.mxu0 %v1497
        %2025 = vmatpush1.bf16.msra.mxu0 %v1496
        %2026 = vmatprep.mubr.bf16.mxu0 %v829
        %2027 = vmatmul.mubr.bf16.gmra.mrb[0].mxu0 %v815
        %v2028 = vpop.f32.mrb[0].mxu0
        %v2029 = vadd.f32 %v790, %v2028
        %v2030 = vpop.f32.mrb[0].mxu0
        %v2031 = vadd.f32 %v790, %v2030
        %v2032 = vpop.f32.mrb[0].mxu0
        %v2033 = vpop.f32.mrb[0].mxu0
        %2034 = vdwg.mxu0
        %2035 = vmatprep.subr.bf16.mxu0 %v1501
        %2036 = vmatpush1.bf16.msra.mxu0 %v1500
        %2037 = vmatprep.subr.bf16.mxu0 %v1505
        %2038 = vmatpush1.bf16.msra.mxu0 %v1504
        %2039 = vmatprep.subr.bf16.mxu0 %v1509
        %2040 = vmatpush1.bf16.msra.mxu0 %v1508
        %2041 = vmatprep.subr.bf16.mxu0 %v1513
        %2042 = vmatpush1.bf16.msra.mxu0 %v1512
        %2043 = vmatprep.subr.bf16.mxu0 %v1517
        %2044 = vmatpush1.bf16.msra.mxu0 %v1516
        %2045 = vmatprep.subr.bf16.mxu0 %v1521
        %2046 = vmatpush1.bf16.msra.mxu0 %v1520
        %2047 = vmatprep.subr.bf16.mxu0 %v1525
        %2048 = vmatpush1.bf16.msra.mxu0 %v1524
        %2049 = vmatprep.subr.bf16.mxu0 %v1529
        %2050 = vmatpush1.bf16.msra.mxu0 %v1528
        %2051 = vmatprep.subr.bf16.mxu0 %v1533
        %2052 = vmatpush1.bf16.msra.mxu0 %v1532
        %2053 = vmatprep.subr.bf16.mxu0 %v1537
        %2054 = vmatpush1.bf16.msra.mxu0 %v1536
        %2055 = vmatprep.subr.bf16.mxu0 %v1541
        %2056 = vmatpush1.bf16.msra.mxu0 %v1540
        %2057 = vmatprep.subr.bf16.mxu0 %v1545
        %2058 = vmatpush1.bf16.msra.mxu0 %v1544
        %2059 = vmatprep.subr.bf16.mxu0 %v1549
        %2060 = vmatpush1.bf16.msra.mxu0 %v1548
        %2061 = vmatprep.subr.bf16.mxu0 %v1553
        %2062 = vmatpush1.bf16.msra.mxu0 %v1552
        %2063 = vmatprep.subr.bf16.mxu0 %v1557
        %2064 = vmatpush1.bf16.msra.mxu0 %v1556
        %2065 = vmatprep.subr.bf16.mxu0 %v1561
        %2066 = vmatpush1.bf16.msra.mxu0 %v1560
        %2067 = vmatprep.mubr.bf16.mxu0 %v839
        %2068 = vmatmul.mubr.bf16.gmra.mrb[0].mxu0 %v837
        %v2069 = vpop.f32.mrb[0].mxu0
        %v2070 = vadd.f32 %v2029, %v2069
        %v2071 = vpop.f32.mrb[0].mxu0
        %v2072 = vadd.f32 %v2031, %v2071
        %v2073 = vpop.f32.mrb[0].mxu0
        %v2074 = vpop.f32.mrb[0].mxu0
        %2075 = vdwg.mxu0
        %2076 = vmatprep.subr.bf16.mxu0 %v1565
        %2077 = vmatpush1.bf16.msra.mxu0 %v1564
        %2078 = vmatprep.subr.bf16.mxu0 %v1569
        %2079 = vmatpush1.bf16.msra.mxu0 %v1568
        %2080 = vmatprep.subr.bf16.mxu0 %v1573
        %2081 = vmatpush1.bf16.msra.mxu0 %v1572
        %2082 = vmatprep.subr.bf16.mxu0 %v1577
        %2083 = vmatpush1.bf16.msra.mxu0 %v1576
        %2084 = vmatprep.subr.bf16.mxu0 %v1581
        %2085 = vmatpush1.bf16.msra.mxu0 %v1580
        %2086 = vmatprep.subr.bf16.mxu0 %v1585
        %2087 = vmatpush1.bf16.msra.mxu0 %v1584
        %2088 = vmatprep.subr.bf16.mxu0 %v1589
        %2089 = vmatpush1.bf16.msra.mxu0 %v1588
        %2090 = vmatprep.subr.bf16.mxu0 %v1593
        %2091 = vmatpush1.bf16.msra.mxu0 %v1592
        %2092 = vmatprep.subr.bf16.mxu0 %v1597
        %2093 = vmatpush1.bf16.msra.mxu0 %v1596
        %2094 = vmatprep.subr.bf16.mxu0 %v1601
        %2095 = vmatpush1.bf16.msra.mxu0 %v1600
        %2096 = vmatprep.subr.bf16.mxu0 %v1605
        %2097 = vmatpush1.bf16.msra.mxu0 %v1604
        %2098 = vmatprep.subr.bf16.mxu0 %v1609
        %2099 = vmatpush1.bf16.msra.mxu0 %v1608
        %2100 = vmatprep.subr.bf16.mxu0 %v1613
        %2101 = vmatpush1.bf16.msra.mxu0 %v1612
        %2102 = vmatprep.subr.bf16.mxu0 %v1617
        %2103 = vmatpush1.bf16.msra.mxu0 %v1616
        %2104 = vmatprep.subr.bf16.mxu0 %v1621
        %2105 = vmatpush1.bf16.msra.mxu0 %v1620
        %2106 = vmatprep.subr.bf16.mxu0 %v1625
        %2107 = vmatpush1.bf16.msra.mxu0 %v1624
        %2108 = vmatprep.mubr.bf16.mxu0 %v836
        %2109 = vmatmul.mubr.bf16.gmra.mrb[0].mxu0 %v822
        %v2110 = vpop.f32.mrb[0].mxu0
        %v2111 = vadd.f32 %v2070, %v2110
        %v2112 = vpop.f32.mrb[0].mxu0
        %v2113 = vadd.f32 %v2072, %v2112
        %v2114 = vpop.f32.mrb[0].mxu0
        %v2115 = vpop.f32.mrb[0].mxu0
        %2116 = vdwg.mxu0
        %2117 = vmatprep.subr.bf16.mxu0 %v1629
        %2118 = vmatpush1.bf16.msra.mxu0 %v1628
        %2119 = vmatprep.subr.bf16.mxu0 0
        %2120 = vmatpush1.bf16.msra.mxu0 0
        %2121 = vmatprep.subr.bf16.mxu0 0
        %2122 = vmatpush1.bf16.msra.mxu0 0
        %2123 = vmatprep.subr.bf16.mxu0 0
        %2124 = vmatpush1.bf16.msra.mxu0 0
        %2125 = vmatprep.subr.bf16.mxu0 0
        %2126 = vmatpush1.bf16.msra.mxu0 0
        %2127 = vmatprep.subr.bf16.mxu0 0
        %2128 = vmatpush1.bf16.msra.mxu0 0
        %2129 = vmatprep.subr.bf16.mxu0 0
        %2130 = vmatpush1.bf16.msra.mxu0 0
        %2131 = vmatprep.subr.bf16.mxu0 0
        %2132 = vmatpush1.bf16.msra.mxu0 0
        %2133 = vmatprep.subr.bf16.mxu0 0
        %2134 = vmatpush1.bf16.msra.mxu0 0
        %2135 = vmatprep.subr.bf16.mxu0 0
        %2136 = vmatpush1.bf16.msra.mxu0 0
        %2137 = vmatprep.subr.bf16.mxu0 0
        %2138 = vmatpush1.bf16.msra.mxu0 0
        %2139 = vmatprep.subr.bf16.mxu0 0
        %2140 = vmatpush1.bf16.msra.mxu0 0
        %2141 = vmatprep.subr.bf16.mxu0 0
        %2142 = vmatpush1.bf16.msra.mxu0 0
        %2143 = vmatprep.subr.bf16.mxu0 0
        %2144 = vmatpush1.bf16.msra.mxu0 0
        %2145 = vmatprep.subr.bf16.mxu0 0
        %2146 = vmatpush1.bf16.msra.mxu0 0
        %2147 = vmatprep.subr.bf16.mxu0 0
        %2148 = vmatpush1.bf16.msra.mxu0 0
        %2149 = vmatprep.mubr.bf16.mxu0 0
        %2150 = vmatmul.mubr.bf16.gmra.mrb[0].mxu0 %v1828
        %v2151 = vpop.f32.mrb[0].mxu0
        %v2152 = vadd.f32 %v2111, %v2151
        %v2153 = vpop.f32.mrb[0].mxu0
        %v2154 = vadd.f32 %v2113, %v2153
        %v2155 = vpop.f32.mrb[0].mxu0
        %v2156 = vpop.f32.mrb[0].mxu0
        %2157 = vdwg.mxu0
        %v2158 = vand.u32 2147483647, %v1988
        %v2159 = vand.u32 2147483647, %v1990
        %v2160 = vand.u32 2147483647, %v2152
        %v2161 = vand.u32 2147483647, %v2154
        %v2162 = vsub.f32 0.0, %v2158
        %v2163 = vsub.f32 0.0, %v2159
        %v2164 = vsub.f32 0.0, %v2160
        %v2165 = vsub.f32 0.0, %v2161
        %v2166 = vmul.f32 %v2162, 1.442695
        %v2167 = vpow.pop %v2166
        %v2168 = vmul.f32 %v2163, 1.442695
        %v2169 = vpow.pop %v2168
        %v2170 = vmul.f32 %v2164, 1.442695
        %v2171 = vpow.pop %v2170
        %v2172 = vmul.f32 %v2165, 1.442695
        %v2173 = vpow.pop %v2172
        %v2174 = vadd.f32 %v2167, 1.0
        %v2175 = vadd.f32 %v2169, 1.0
        %v2176 = vadd.f32 %v2171, 1.0
        %v2177 = vadd.f32 %v2173, 1.0
        %v2178 = vrcp.pop %v2174
        %v2179 = vrcp.pop %v2175
        %v2180 = vrcp.pop %v2176
        %v2181 = vrcp.pop %v2177
        %vm2182 = vcmp.ge.f32.partialorder %v1988, 0.0
        %vm2183 = vcmp.ge.f32.partialorder %v1990, 0.0
        %vm2184 = vcmp.ge.f32.partialorder %v2152, 0.0
        %vm2185 = vcmp.ge.f32.partialorder %v2154, 0.0
        %v2186 = vmul.f32 %v2167, %v2178
        %v2187 = vmul.f32 %v2169, %v2179
        %v2188 = vmul.f32 %v2171, %v2180
        %v2189 = vmul.f32 %v2173, %v2181
        %v2190 = vsel %vm2182, %v2178, %v2186
        %v2191 = vsel %vm2183, %v2179, %v2187
        %v2192 = vsel %vm2184, %v2180, %v2188
        %v2193 = vsel %vm2185, %v2181, %v2189
        %v2198 = vcombine.low %v2190, %v2191
        %v2199 = vcombine.low %v2192, %v2193
        %v2201 = vunpack.c.l.s4 1966171168
        %v2202 = vunpack.c.0.s8 %v2201
        %v2203 = vlaneseq
        %v2204 = vshrl.u32 %v2203, 7
        %v2205 = vsub.s32 %v2202, %v2204
        %v2206 = vrot.slane %v2198, %v2205
        %v2208 = vunpack.c.l.s4 1966171168
        %v2209 = vunpack.c.0.s8 %v2208
        %v2210 = vlaneseq
        %v2211 = vshrl.u32 %v2210, 7
        %v2212 = vsub.s32 %v2209, %v2211
        %v2213 = vrot.slane %v2199, %v2212
        %v2214 = vcombine.low %v2206, %v2213
        %v2216 = vunpack.c.l.s4 1966171168
        %v2217 = vunpack.c.0.s8 %v2216
        %v2218 = vlaneseq
        %v2219 = vshrl.u32 %v2218, 7
        %v2220 = vsub.s32 %v2217, %v2219
        %v2221 = vrot.slane %v2214, %v2220
        %v2223 = vlaneseq
        %vm2224 = vcmp.ge.s32.totalorder %v2223, 0
        %vm2225 = vcmp.lt.s32.totalorder %v2223, 512
        %vm2226 = vmand %vm2224, %vm2225
        %2227 = vst.msk [vmem:[%s581] sm:$0xf] %vm2226, %v2221
        %s2228 = smul.u32 4, %s16
        %p2229 = scmp.lt.s32.totalorder %s2228, 15
        %s2230 = scalar_select %p2229, %s2228, 15
        %s2231 = scalar_lea.vmem %s3, %s2230
        // Predicated region
        $region56: #{autoencoder_cnn_forward.11} parent=50 // pred_check
          %p2232 = pneg %p102
        $region57: #{autoencoder_cnn_forward.11} parent=50 // pred_check_branch
          %2234 = sbr.rel (%p2232) target = $region59
        $region58: #{autoencoder_cnn_forward.11} parent=50 // pred_region
          %s2235 = smul.u32 4, %s16
        $region59: #{autoencoder_cnn_forward.11} parent=50 // pred_fallthru
          _
      $region51: #{autoencoder_cnn_forward.11} parent=5 // pred_fallthru
        _
      %p2236 = scmp.le.s32.totalorder 2, %s11
      // Predicated region
      $region60: #{autoencoder_cnn_forward.11} parent=5 // pred_check
        %p2237 = pneg %p2236
      $region61: #{autoencoder_cnn_forward.11} parent=5 // pred_check_branch
        %2239 = sbr.rel (%p2237) target = $region63
      $region62: #{autoencoder_cnn_forward.11} parent=5 // pred_region
        %s2240 = ssub.s32 %s11, 2
        // Predicated region
        $region64: #{autoencoder_cnn_forward.11} parent=62 // pred_check
          %p2241 = pneg %p108
        $region65: #{autoencoder_cnn_forward.11} parent=62 // pred_check_branch
          %2243 = sbr.rel (%p2241) target = $region67
        $region66: #{autoencoder_cnn_forward.11} parent=62 // pred_region
          %s2244 = smul.u32 4, %s17
          %p2245 = scmp.lt.s32.totalorder %s2244, 15
          %s2246 = scalar_select %p2245, %s2244, 15
          %s2247 = scalar_lea.vmem %s3, %s2246
        $region67: #{autoencoder_cnn_forward.11} parent=62 // pred_fallthru
          _
      $region63: #{autoencoder_cnn_forward.11} parent=5 // pred_fallthru
        _
    $region6: #{autoencoder_cnn_forward.11} parent=1 // loop_footer
      %s15 = sadd.s32 1, %s11
    $region7: #{autoencoder_cnn_forward.11} parent=1 // loop_footer_branch
      %10 = sbr.rel target = $region3
    $region8: #{autoencoder_cnn_forward.11} parent=1 // loop_exit
      _

</llo_original>
